<compile_context>
chip_gen: v6e
topology: v6e:2x2x1
jax: 0.10.0
libtpu: 0.0.40
codegen_flags: <defaults>
</compile_context>

<pallas_src>
import functools

import jax
import jax.numpy as jnp
from jax.experimental import pallas as pl
from jax.experimental.pallas import tpu as pltpu

BN_EPS = 1e-5
LANE = 128
MATMUL_DTYPE = jnp.bfloat16   # MXU-native; accumulation and BN math stay f32.


def _round_up(x, m):
    return (x + m - 1) // m * m


def _vmem_capacity_bytes():
    """Per-generation VMEM capacity (falls back to the v7x-safe 64 MiB)."""
    try:
        cap = getattr(pltpu.get_tpu_info(), "vmem_capacity_bytes", None)
        if cap:
            return int(cap)
    except Exception:
        pass
    return 64 * 1024 * 1024


def _conv_stats_kernel(body_ref, halo_ref, w_ref, y_ref, stats_ref, *,
                       KH, KW, dilation, TH, W_out, H_out, needs_mask):
    """Dilated conv for one (batch, H-tile) block + per-channel partial stats.

    body_ref : (TH, Wp, Cin_p)          bf16  tile body rows
    halo_ref : (halo_alloc, Wp, Cin_p)  bf16  halo rows below the tile
    w_ref    : (KH*KW, Cin_p, Cout_p)   bf16
    y_ref    : (TH*W_out, Cout_p)       bf16  un-normalized conv output (2-D, lane-dense)
    stats_ref: (2, Cout_p)              f32   row 0 = sum, row 1 = sum of squares
    """
    cin_p = body_ref.shape[-1]

    # (TH + halo, Wp, Cin_p) window; concat along the leading (non-tiled) axis is cheap.
    x_full = jnp.concatenate([body_ref[...], halo_ref[...]], axis=0)

    # Per-tap GEMM: M = TH*W_out, K = Cin_p, N = Cout_p (lane-dense).
    # First tap is peeled (acc = dot) so there is no zero-init store / extra RMW pass.
    # kw is the outer loop so the sublane-unaligned W shift happens once per kw.
    acc = None
    for kw in range(KW):
        x_kw = x_full[:, kw * dilation:kw * dilation + W_out, :]     # (THp, W_out, Cin_p)
        for kh in range(KH):
            patch = x_kw[kh * dilation:kh * dilation + TH]           # (TH, W_out, Cin_p)
            patch2d = patch.reshape(TH * W_out, cin_p)
            wtap = w_ref[kh * KW + kw]                               # (Cin_p, Cout_p)
            d = jnp.dot(patch2d, wtap, preferred_element_type=jnp.float32)
            acc = d if acc is None else acc + d

    # Store the intermediate in bf16 (halves pass-1 writeback + pass-2 read traffic).
    y_ref[...] = acc.astype(y_ref.dtype)

    # Mask overhang rows (output rows >= H_out) of the last H tile before the stats
    # reduction so batch mean/var are exact. Static no-op when TH divides H_out.
    if needs_mask:
        h = pl.program_id(1)
        valid_rows = jnp.minimum(H_out - h * TH, TH) * W_out
        ridx = jax.lax.broadcasted_iota(jnp.int32, (TH * W_out, 1), 0)
        acc = jnp.where(ridx < valid_rows, acc, 0.0)

    s = jnp.sum(acc, axis=0, keepdims=True)
    ss = jnp.sum(acc * acc, axis=0, keepdims=True)
    stats_ref[...] = jnp.concatenate([s, ss], axis=0)


def _bn_relu_kernel(y_ref, sb_ref, o_ref):
    """BatchNorm apply (single FMA with precomputed scale/bias) + ReLU.

    y_ref : (R, Cout_p) bf16 conv output rows
    sb_ref: (2, Cout_p) f32, row 0 = scale = gamma*rsqrt(var+eps), row 1 = bias
    o_ref : (R, Cout_p) bf16 (aliased in place over y)
    """
    scale = sb_ref[0:1, :]
    bias = sb_ref[1:2, :]
    y = y_ref[...].astype(jnp.float32)
    o_ref[...] = jnp.maximum(y * scale + bias, 0.0).astype(o_ref.dtype)


def aspp_module_forward(x_nchw, weight_oihw, gamma, beta, *, padding, dilation):
    """Fused _ASPPModule forward. x_nchw: (N, Cin, H, W), weight: (Cout, Cin, KH, KW)."""
    N, Cin, H, W = x_nchw.shape
    Cout, _, KH, KW = weight_oihw.shape
    # TODO(synk): grouped atrous conv (groups > 1) is not implemented (module default is 1).

    H_out = H + 2 * padding - dilation * (KH - 1)
    W_out = W + 2 * padding - dilation * (KW - 1)
    halo = dilation * (KH - 1)
    halo_alloc = max(halo, 1)             # keep a >=1-row halo block even for 1x1 convs
    Wp = W + 2 * padding

    Cin_p = _round_up(Cin, LANE)          # lane-align channels
    Cout_p = _round_up(Cout, LANE)

    # ---- per-generation VMEM budget -> H tile size (multiple of 8) ----
    vmem_cap = _vmem_capacity_bytes()
    vmem_limit = int(min(vmem_cap * 3 // 4, 96 * 1024 * 1024))   # ~48 MiB v7x, 96 MiB v5e/v6e
    budget = vmem_limit * 6 // 10                                # headroom for compiler temps
    w_bytes = KH * KW * Cin_p * Cout_p * 2 * 2                   # bf16 weights, double-buffered
    halo_bytes = halo_alloc * Wp * Cin_p * 2 * 2                 # bf16 halo block, double-buffered
    per_row = (Wp * Cin_p * 2) * 2        # bf16 body rows, double-buffered
    per_row += (W_out * Cout_p * 2) * 2   # bf16 conv-out rows, double-buffered
    per_row += W_out * Cout_p * 4         # f32 accumulator value (compiler-managed VMEM)
    per_row += Wp * Cin_p * 2             # concatenated window temp
    TH = (budget - w_bytes - halo_bytes) // per_row
    TH = max(8, (TH // 8) * 8)
    TH = min(TH, _round_up(H_out, 8))
    nH = int(pl.cdiv(H_out, TH))
    rows_tile = TH * W_out
    # TODO(synk): for very wide layers on v7x (e.g. Cin=2048) additionally tile Cout and
    # single-buffer the constant weight block (pipeline_mode=pl.Buffered(1)).

    # ---- wrapper layout glue (cast to bf16 before any relayout; no full-tile gather) ----
    Hp = nH * TH + halo_alloc
    x_bf = jnp.transpose(x_nchw.astype(MATMUL_DTYPE), (0, 2, 3, 1))      # NHWC bf16
    x_pad = jnp.pad(x_bf, ((0, 0), (padding, Hp - H - padding),
                           (padding, padding), (0, Cin_p - Cin)))
    # Only the halo rows (halo/TH of the activation) are gathered; the tile body is read
    # in place from x_pad through a plain blocked DMA.
    halo_idx = (jnp.arange(nH)[:, None] + 1) * TH + jnp.arange(halo_alloc)[None, :]
    x_halo = x_pad[:, halo_idx]                       # (N, nH, halo_alloc, Wp, Cin_p)

    w_hwio = jnp.transpose(weight_oihw.astype(MATMUL_DTYPE), (2, 3, 1, 0))
    w_flat = jnp.pad(w_hwio, ((0, 0), (0, 0), (0, Cin_p - Cin),
                              (0, Cout_p - Cout))).reshape(KH * KW, Cin_p, Cout_p)

    # ---- pass 1: tiled dilated conv (bf16 out) + per-tile partial batch stats (f32) ----
    conv_kernel = functools.partial(
        _conv_stats_kernel, KH=KH, KW=KW, dilation=dilation, TH=TH,
        W_out=W_out, H_out=H_out, needs_mask=(nH * TH != H_out))
    conv_out, stats = pl.pallas_call(
        conv_kernel,
        grid=(N, nH),
        in_specs=[
            pl.BlockSpec((None, TH, Wp, Cin_p), lambda n, h: (n, h, 0, 0)),
            pl.BlockSpec((None, None, halo_alloc, Wp, Cin_p),
                         lambda n, h: (n, h, 0, 0, 0)),
            pl.BlockSpec((KH * KW, Cin_p, Cout_p), lambda n, h: (0, 0, 0)),
        ],
        out_specs=(
            pl.BlockSpec((None, rows_tile, Cout_p), lambda n, h: (n, h, 0)),
            pl.BlockSpec((None, None, 2, Cout_p), lambda n, h: (n, h, 0, 0)),
        ),
        out_shape=(
            jax.ShapeDtypeStruct((N, nH * rows_tile, Cout_p), MATMUL_DTYPE),
            jax.ShapeDtypeStruct((N, nH, 2, Cout_p), jnp.float32),
        ),
        compiler_params=pltpu.CompilerParams(
            dimension_semantics=("parallel", "parallel"),
            vmem_limit_bytes=vmem_limit),
    )(x_pad, x_halo, w_flat)
    # TODO(synk): when N*nH < 2 (single-image inference) add a parallel Cout_p/128 grid
    # axis so both v7x TensorCores stay busy.

    # ---- global batch statistics -> per-channel scale / bias (tiny, plain JAX) ----
    # Padded channels and masked overhang rows contribute exact zeros to both sums.
    count = float(N * H_out * W_out)
    tot = jnp.sum(stats, axis=(0, 1))                 # (2, Cout_p)
    mean = tot[0] / count
    var = jnp.maximum(tot[1] / count - mean * mean, 0.0)
    gamma_p = jnp.pad(gamma.astype(jnp.float32), (0, Cout_p - Cout))
    beta_p = jnp.pad(beta.astype(jnp.float32), (0, Cout_p - Cout))
    scale = gamma_p * jax.lax.rsqrt(var + BN_EPS)
    bias = beta_p - mean * scale
    sb = jnp.stack([scale, bias], axis=0)             # (2, Cout_p)

    # ---- pass 2: BN (one FMA) + ReLU over large lane-dense row blocks, in place ----
    total_rows = N * nH * rows_tile
    conv_flat = conv_out.reshape(total_rows, Cout_p)  # free reshape (contiguous)
    target_rows = 4096
    if rows_tile >= target_rows:
        R = rows_tile
        while R > target_rows and R % 2 == 0 and (R // 2) % 8 == 0:
            R //= 2
    else:
        k = min(N * nH, max(1, target_rows // rows_tile))
        while (N * nH) % k:
            k -= 1
        R = rows_tile * k
    grid2 = total_rows // R

    out_flat = pl.pallas_call(
        _bn_relu_kernel,
        grid=(grid2,),
        in_specs=[pl.BlockSpec((R, Cout_p), lambda i: (i, 0)),
                  pl.BlockSpec((2, Cout_p), lambda i: (0, 0))],
        out_specs=pl.BlockSpec((R, Cout_p), lambda i: (i, 0)),
        out_shape=jax.ShapeDtypeStruct((total_rows, Cout_p), MATMUL_DTYPE),
        input_output_aliases={0: 0},                  # overwrite conv_out in place
        compiler_params=pltpu.CompilerParams(
            dimension_semantics=("parallel",),
            vmem_limit_bytes=vmem_limit),
    )(conv_flat, sb)

    # ---- back to NCHW f32, drop row / channel padding ----
    # TODO(synk): if the downstream consumer accepts NHWC/bf16, return out_flat reshaped
    # directly and skip this final transpose (a full extra HBM read+write).
    out = out_flat.reshape(N, nH * TH, W_out, Cout_p)[:, :H_out, :, :Cout]
    return jnp.transpose(out, (0, 3, 1, 2)).astype(jnp.float32)


def _reference_forward(x_nchw, weight_oihw, gamma, beta, *, padding, dilation):
    """Pure-JAX f32 reference (conv_general_dilated + train-mode BN + ReLU)."""
    conv = jax.lax.conv_general_dilated(
        x_nchw.astype(jnp.float32), weight_oihw.astype(jnp.float32),
        window_strides=(1, 1),
        padding=((padding, padding), (padding, padding)),
        rhs_dilation=(dilation, dilation),
        dimension_numbers=("NCHW", "OIHW", "NCHW"))
    mean = jnp.mean(conv, axis=(0, 2, 3), keepdims=True)
    var = jnp.mean((conv - mean) ** 2, axis=(0, 2, 3), keepdims=True)
    xn = (conv - mean) * jax.lax.rsqrt(var + BN_EPS)
    y = xn * gamma.reshape(1, -1, 1, 1) + beta.reshape(1, -1, 1, 1)
    return jnp.maximum(y, 0.0)


if __name__ == "__main__":
    # _ASPPModule(inplanes=4, planes=8, kernel_size=3, padding=2, dilation=2)
    inplanes, planes = 4, 8
    kernel_size, padding, dilation = 3, 2, 2
    N, H, W = 2, 16, 16

    key = jax.random.PRNGKey(0)
    kx, kw = jax.random.split(key)

    x = jax.random.normal(kx, (N, inplanes, H, W), dtype=jnp.float32)

    # Conv weight: kaiming_normal_ -> N(0, sqrt(2 / fan_in)), fan_in = Cin*KH*KW.
    fan_in = inplanes * kernel_size * kernel_size
    weight = jax.random.normal(
        kw, (planes, inplanes, kernel_size, kernel_size),
        dtype=jnp.float32) * jnp.sqrt(2.0 / fan_in)

    # BN params per _init_weight: weight=1, bias=0.
    gamma = jnp.ones((planes,), jnp.float32)
    beta = jnp.zeros((planes,), jnp.float32)

    fwd = jax.jit(functools.partial(aspp_module_forward,
                                    padding=padding, dilation=dilation))
    out = jax.block_until_ready(fwd(x, weight, gamma, beta))

    ref = jax.block_until_ready(
        _reference_forward(x, weight, gamma, beta,
                           padding=padding, dilation=dilation))

    assert out.shape == (N, planes, H, W), out.shape
    # bf16 MXU operands, bf16-stored conv intermediate and bf16 BN/ReLU output
    # (f32 accumulation / statistics) vs pure-f32 reference -> 5e-2 tolerance.
    assert jnp.allclose(out, ref, rtol=5e-2, atol=5e-2), "mismatch vs reference"

    print("KERNEL_OK")
</pallas_src>

<mosaic_0001>
module attributes {stable_mosaic.version = 11 : i64} {
  func.func @_conv_stats_kernel(%arg0: i32, %arg1: i32, %arg2: memref<1x16x20x128xbf16, #tpu.memory_space<vmem>>, %arg3: memref<1x1x4x20x128xbf16, #tpu.memory_space<vmem>>, %arg4: memref<9x128x128xbf16, #tpu.memory_space<vmem>>, %arg5: memref<1x256x128xbf16, #tpu.memory_space<vmem>>, %arg6: memref<1x1x2x128xf32, #tpu.memory_space<vmem>>) attributes {dimension_semantics = [#tpu.dimension_semantics<parallel>, #tpu.dimension_semantics<parallel>], iteration_bounds = array<i64: 2, 1>, scalar_prefetch = 0 : i64, scratch_operands = 0 : i64, tpu.core_type = #tpu.core_type<tc>, window_params = [{transform_indices = @transform_0, window_bounds = array<i64: 1, 16, 20, 128>}, {transform_indices = @transform_1, window_bounds = array<i64: 1, 1, 4, 20, 128>}, {pipeline_mode = #tpu.pipeline_mode<synchronous>, transform_indices = @transform_2, window_bounds = array<i64: 9, 128, 128>}, {transform_indices = @transform_3, window_bounds = array<i64: 1, 256, 128>}, {transform_indices = @transform_4, window_bounds = array<i64: 1, 1, 2, 128>}]} {
    %c0 = arith.constant 0 : index
    %c0_0 = arith.constant 0 : index
    %c0_1 = arith.constant 0 : index
    %c0_2 = arith.constant 0 : index
    %0 = vector.load %arg2[%c0, %c0_0, %c0_1, %c0_2] : memref<1x16x20x128xbf16, #tpu.memory_space<vmem>>, vector<1x16x20x128xbf16>
    %1 = vector.shape_cast %0 : vector<1x16x20x128xbf16> to vector<16x20x128xbf16>
    %c0_3 = arith.constant 0 : index
    %c0_4 = arith.constant 0 : index
    %c0_5 = arith.constant 0 : index
    %c0_6 = arith.constant 0 : index
    %c0_7 = arith.constant 0 : index
    %2 = vector.load %arg3[%c0_3, %c0_4, %c0_5, %c0_6, %c0_7] : memref<1x1x4x20x128xbf16, #tpu.memory_space<vmem>>, vector<1x1x4x20x128xbf16>
    %3 = vector.shape_cast %2 : vector<1x1x4x20x128xbf16> to vector<4x20x128xbf16>
    %4 = tpu.concatenate %1, %3 in 0 : vector<16x20x128xbf16>, vector<4x20x128xbf16> -> vector<20x20x128xbf16>
    %5 = vector.extract_strided_slice %4 {offsets = [0, 0, 0], sizes = [20, 16, 128], strides = [1, 1, 1]} : vector<20x20x128xbf16> to vector<20x16x128xbf16>
    %6 = vector.extract_strided_slice %5 {offsets = [0, 0, 0], sizes = [16, 16, 128], strides = [1, 1, 1]} : vector<20x16x128xbf16> to vector<16x16x128xbf16>
    %7 = vector.shape_cast %6 : vector<16x16x128xbf16> to vector<256x128xbf16>
    %c0_8 = arith.constant 0 : index
    %c0_9 = arith.constant 0 : index
    %c0_10 = arith.constant 0 : index
    %8 = vector.load %arg4[%c0_8, %c0_9, %c0_10] : memref<9x128x128xbf16, #tpu.memory_space<vmem>>, vector<1x128x128xbf16>
    %9 = vector.shape_cast %8 : vector<1x128x128xbf16> to vector<128x128xbf16>
    %cst = arith.constant dense<0.000000e+00> : vector<256x128xf32>
    %10 = tpu.matmul %7, %9, %cst {dimension_numbers = #tpu.dot_dimension_numbers<[1], [0], [0], [1], [0, 0, 1, 1], [], []>} : vector<256x128xbf16>, vector<128x128xbf16>, vector<256x128xf32> -> vector<256x128xf32>
    %11 = vector.extract_strided_slice %5 {offsets = [2, 0, 0], sizes = [16, 16, 128], strides = [1, 1, 1]} : vector<20x16x128xbf16> to vector<16x16x128xbf16>
    %12 = vector.shape_cast %11 : vector<16x16x128xbf16> to vector<256x128xbf16>
    %c3 = arith.constant 3 : index
    %c0_11 = arith.constant 0 : index
    %c0_12 = arith.constant 0 : index
    %13 = vector.load %arg4[%c3, %c0_11, %c0_12] : memref<9x128x128xbf16, #tpu.memory_space<vmem>>, vector<1x128x128xbf16>
    %14 = vector.shape_cast %13 : vector<1x128x128xbf16> to vector<128x128xbf16>
    %cst_13 = arith.constant dense<0.000000e+00> : vector<256x128xf32>
    %15 = tpu.matmul %12, %14, %cst_13 {dimension_numbers = #tpu.dot_dimension_numbers<[1], [0], [0], [1], [0, 0, 1, 1], [], []>} : vector<256x128xbf16>, vector<128x128xbf16>, vector<256x128xf32> -> vector<256x128xf32>
    %16 = arith.addf %10, %15 : vector<256x128xf32>
    %17 = vector.extract_strided_slice %5 {offsets = [4, 0, 0], sizes = [16, 16, 128], strides = [1, 1, 1]} : vector<20x16x128xbf16> to vector<16x16x128xbf16>
    %18 = vector.shape_cast %17 : vector<16x16x128xbf16> to vector<256x128xbf16>
    %c6 = arith.constant 6 : index
    %c0_14 = arith.constant 0 : index
    %c0_15 = arith.constant 0 : index
    %19 = vector.load %arg4[%c6, %c0_14, %c0_15] : memref<9x128x128xbf16, #tpu.memory_space<vmem>>, vector<1x128x128xbf16>
    %20 = vector.shape_cast %19 : vector<1x128x128xbf16> to vector<128x128xbf16>
    %cst_16 = arith.constant dense<0.000000e+00> : vector<256x128xf32>
    %21 = tpu.matmul %18, %20, %cst_16 {dimension_numbers = #tpu.dot_dimension_numbers<[1], [0], [0], [1], [0, 0, 1, 1], [], []>} : vector<256x128xbf16>, vector<128x128xbf16>, vector<256x128xf32> -> vector<256x128xf32>
    %22 = arith.addf %16, %21 : vector<256x128xf32>
    %23 = vector.extract_strided_slice %4 {offsets = [0, 2, 0], sizes = [20, 16, 128], strides = [1, 1, 1]} : vector<20x20x128xbf16> to vector<20x16x128xbf16>
    %24 = vector.extract_strided_slice %23 {offsets = [0, 0, 0], sizes = [16, 16, 128], strides = [1, 1, 1]} : vector<20x16x128xbf16> to vector<16x16x128xbf16>
    %25 = vector.shape_cast %24 : vector<16x16x128xbf16> to vector<256x128xbf16>
    %c1 = arith.constant 1 : index
    %c0_17 = arith.constant 0 : index
    %c0_18 = arith.constant 0 : index
    %26 = vector.load %arg4[%c1, %c0_17, %c0_18] : memref<9x128x128xbf16, #tpu.memory_space<vmem>>, vector<1x128x128xbf16>
    %27 = vector.shape_cast %26 : vector<1x128x128xbf16> to vector<128x128xbf16>
    %cst_19 = arith.constant dense<0.000000e+00> : vector<256x128xf32>
    %28 = tpu.matmul %25, %27, %cst_19 {dimension_numbers = #tpu.dot_dimension_numbers<[1], [0], [0], [1], [0, 0, 1, 1], [], []>} : vector<256x128xbf16>, vector<128x128xbf16>, vector<256x128xf32> -> vector<256x128xf32>
    %29 = arith.addf %22, %28 : vector<256x128xf32>
    %30 = vector.extract_strided_slice %23 {offsets = [2, 0, 0], sizes = [16, 16, 128], strides = [1, 1, 1]} : vector<20x16x128xbf16> to vector<16x16x128xbf16>
    %31 = vector.shape_cast %30 : vector<16x16x128xbf16> to vector<256x128xbf16>
    %c4 = arith.constant 4 : index
    %c0_20 = arith.constant 0 : index
    %c0_21 = arith.constant 0 : index
    %32 = vector.load %arg4[%c4, %c0_20, %c0_21] : memref<9x128x128xbf16, #tpu.memory_space<vmem>>, vector<1x128x128xbf16>
    %33 = vector.shape_cast %32 : vector<1x128x128xbf16> to vector<128x128xbf16>
    %cst_22 = arith.constant dense<0.000000e+00> : vector<256x128xf32>
    %34 = tpu.matmul %31, %33, %cst_22 {dimension_numbers = #tpu.dot_dimension_numbers<[1], [0], [0], [1], [0, 0, 1, 1], [], []>} : vector<256x128xbf16>, vector<128x128xbf16>, vector<256x128xf32> -> vector<256x128xf32>
    %35 = arith.addf %29, %34 : vector<256x128xf32>
    %36 = vector.extract_strided_slice %23 {offsets = [4, 0, 0], sizes = [16, 16, 128], strides = [1, 1, 1]} : vector<20x16x128xbf16> to vector<16x16x128xbf16>
    %37 = vector.shape_cast %36 : vector<16x16x128xbf16> to vector<256x128xbf16>
    %c7 = arith.constant 7 : index
    %c0_23 = arith.constant 0 : index
    %c0_24 = arith.constant 0 : index
    %38 = vector.load %arg4[%c7, %c0_23, %c0_24] : memref<9x128x128xbf16, #tpu.memory_space<vmem>>, vector<1x128x128xbf16>
    %39 = vector.shape_cast %38 : vector<1x128x128xbf16> to vector<128x128xbf16>
    %cst_25 = arith.constant dense<0.000000e+00> : vector<256x128xf32>
    %40 = tpu.matmul %37, %39, %cst_25 {dimension_numbers = #tpu.dot_dimension_numbers<[1], [0], [0], [1], [0, 0, 1, 1], [], []>} : vector<256x128xbf16>, vector<128x128xbf16>, vector<256x128xf32> -> vector<256x128xf32>
    %41 = arith.addf %35, %40 : vector<256x128xf32>
    %42 = vector.extract_strided_slice %4 {offsets = [0, 4, 0], sizes = [20, 16, 128], strides = [1, 1, 1]} : vector<20x20x128xbf16> to vector<20x16x128xbf16>
    %43 = vector.extract_strided_slice %42 {offsets = [0, 0, 0], sizes = [16, 16, 128], strides = [1, 1, 1]} : vector<20x16x128xbf16> to vector<16x16x128xbf16>
    %44 = vector.shape_cast %43 : vector<16x16x128xbf16> to vector<256x128xbf16>
    %c2 = arith.constant 2 : index
    %c0_26 = arith.constant 0 : index
    %c0_27 = arith.constant 0 : index
    %45 = vector.load %arg4[%c2, %c0_26, %c0_27] : memref<9x128x128xbf16, #tpu.memory_space<vmem>>, vector<1x128x128xbf16>
    %46 = vector.shape_cast %45 : vector<1x128x128xbf16> to vector<128x128xbf16>
    %cst_28 = arith.constant dense<0.000000e+00> : vector<256x128xf32>
    %47 = tpu.matmul %44, %46, %cst_28 {dimension_numbers = #tpu.dot_dimension_numbers<[1], [0], [0], [1], [0, 0, 1, 1], [], []>} : vector<256x128xbf16>, vector<128x128xbf16>, vector<256x128xf32> -> vector<256x128xf32>
    %48 = arith.addf %41, %47 : vector<256x128xf32>
    %49 = vector.extract_strided_slice %42 {offsets = [2, 0, 0], sizes = [16, 16, 128], strides = [1, 1, 1]} : vector<20x16x128xbf16> to vector<16x16x128xbf16>
    %50 = vector.shape_cast %49 : vector<16x16x128xbf16> to vector<256x128xbf16>
    %c5 = arith.constant 5 : index
    %c0_29 = arith.constant 0 : index
    %c0_30 = arith.constant 0 : index
    %51 = vector.load %arg4[%c5, %c0_29, %c0_30] : memref<9x128x128xbf16, #tpu.memory_space<vmem>>, vector<1x128x128xbf16>
    %52 = vector.shape_cast %51 : vector<1x128x128xbf16> to vector<128x128xbf16>
    %cst_31 = arith.constant dense<0.000000e+00> : vector<256x128xf32>
    %53 = tpu.matmul %50, %52, %cst_31 {dimension_numbers = #tpu.dot_dimension_numbers<[1], [0], [0], [1], [0, 0, 1, 1], [], []>} : vector<256x128xbf16>, vector<128x128xbf16>, vector<256x128xf32> -> vector<256x128xf32>
    %54 = arith.addf %48, %53 : vector<256x128xf32>
    %55 = vector.extract_strided_slice %42 {offsets = [4, 0, 0], sizes = [16, 16, 128], strides = [1, 1, 1]} : vector<20x16x128xbf16> to vector<16x16x128xbf16>
    %56 = vector.shape_cast %55 : vector<16x16x128xbf16> to vector<256x128xbf16>
    %c8 = arith.constant 8 : index
    %c0_32 = arith.constant 0 : index
    %c0_33 = arith.constant 0 : index
    %57 = vector.load %arg4[%c8, %c0_32, %c0_33] : memref<9x128x128xbf16, #tpu.memory_space<vmem>>, vector<1x128x128xbf16>
    %58 = vector.shape_cast %57 : vector<1x128x128xbf16> to vector<128x128xbf16>
    %cst_34 = arith.constant dense<0.000000e+00> : vector<256x128xf32>
    %59 = tpu.matmul %56, %58, %cst_34 {dimension_numbers = #tpu.dot_dimension_numbers<[1], [0], [0], [1], [0, 0, 1, 1], [], []>} : vector<256x128xbf16>, vector<128x128xbf16>, vector<256x128xf32> -> vector<256x128xf32>
    %60 = arith.addf %54, %59 : vector<256x128xf32>
    %61 = arith.truncf %60 : vector<256x128xf32> to vector<256x128xbf16>
    %c0_35 = arith.constant 0 : index
    %c0_36 = arith.constant 0 : index
    %c0_37 = arith.constant 0 : index
    %62 = vector.load %arg5[%c0_35, %c0_36, %c0_37] : memref<1x256x128xbf16, #tpu.memory_space<vmem>>, vector<1x256x128xbf16>
    %63 = vector.shape_cast %62 : vector<1x256x128xbf16> to vector<256x128xbf16>
    %64 = vector.shape_cast %61 : vector<256x128xbf16> to vector<1x256x128xbf16>
    tpu.vector_store %arg5[%c0_35, %c0_36, %c0_37], %64 {strides = array<i32>} : memref<1x256x128xbf16, #tpu.memory_space<vmem>>, vector<1x256x128xbf16>,
    %cst_38 = arith.constant dense<0.000000e+00> : vector<128xf32>
    %65 = vector.multi_reduction <add>, %60, %cst_38 [0] : vector<256x128xf32> to vector<128xf32>
    %66 = vector.shape_cast %65 : vector<128xf32> to vector<1x128xf32>
    %67 = arith.mulf %60, %60 : vector<256x128xf32>
    %cst_39 = arith.constant dense<0.000000e+00> : vector<128xf32>
    %68 = vector.multi_reduction <add>, %67, %cst_39 [0] : vector<256x128xf32> to vector<128xf32>
    %69 = vector.shape_cast %68 : vector<128xf32> to vector<1x128xf32>
    %70 = tpu.concatenate %66, %69 in 0 : vector<1x128xf32>, vector<1x128xf32> -> vector<2x128xf32>
    %c0_40 = arith.constant 0 : index
    %c0_41 = arith.constant 0 : index
    %c0_42 = arith.constant 0 : index
    %c0_43 = arith.constant 0 : index
    %71 = vector.load %arg6[%c0_40, %c0_41, %c0_42, %c0_43] : memref<1x1x2x128xf32, #tpu.memory_space<vmem>>, vector<1x1x2x128xf32>
    %72 = vector.shape_cast %71 : vector<1x1x2x128xf32> to vector<2x128xf32>
    %73 = vector.shape_cast %70 : vector<2x128xf32> to vector<1x1x2x128xf32>
    tpu.vector_store %arg6[%c0_40, %c0_41, %c0_42, %c0_43], %73 {strides = array<i32>} : memref<1x1x2x128xf32, #tpu.memory_space<vmem>>, vector<1x1x2x128xf32>,
    return
  }
  func.func @transform_0(%arg0: i32, %arg1: i32) -> (i32, i32, i32, i32) {
    %c0_i32 = arith.constant 0 : i32
    %c0_i32_0 = arith.constant 0 : i32
    %c0_i32_1 = arith.constant 0 : i32
    return %arg0, %arg1, %c0_i32, %c0_i32_0 : i32, i32, i32, i32
  }
  func.func @transform_1(%arg0: i32, %arg1: i32) -> (i32, i32, i32, i32, i32) {
    %c0_i32 = arith.constant 0 : i32
    %c0_i32_0 = arith.constant 0 : i32
    %c0_i32_1 = arith.constant 0 : i32
    %c0_i32_2 = arith.constant 0 : i32
    return %arg0, %arg1, %c0_i32, %c0_i32_0, %c0_i32_1 : i32, i32, i32, i32, i32
  }
  func.func @transform_2(%arg0: i32, %arg1: i32) -> (i32, i32, i32) {
    %c0_i32 = arith.constant 0 : i32
    %c0_i32_0 = arith.constant 0 : i32
    %c0_i32_1 = arith.constant 0 : i32
    %c0_i32_2 = arith.constant 0 : i32
    return %c0_i32, %c0_i32_0, %c0_i32_1 : i32, i32, i32
  }
  func.func @transform_3(%arg0: i32, %arg1: i32) -> (i32, i32, i32) {
    %c0_i32 = arith.constant 0 : i32
    %c0_i32_0 = arith.constant 0 : i32
    return %arg0, %arg1, %c0_i32 : i32, i32, i32
  }
  func.func @transform_4(%arg0: i32, %arg1: i32) -> (i32, i32, i32, i32) {
    %c0_i32 = arith.constant 0 : i32
    %c0_i32_0 = arith.constant 0 : i32
    %c0_i32_1 = arith.constant 0 : i32
    return %arg0, %arg1, %c0_i32, %c0_i32_0 : i32, i32, i32, i32
  }
}

module attributes {stable_mosaic.version = 11 : i64} {
  func.func @_bn_relu_kernel(%arg0: i32, %arg1: memref<512x128xbf16, #tpu.memory_space<vmem>>, %arg2: memref<2x128xf32, #tpu.memory_space<vmem>>, %arg3: memref<512x128xbf16, #tpu.memory_space<vmem>>) attributes {dimension_semantics = [#tpu.dimension_semantics<parallel>], iteration_bounds = array<i64: 1>, scalar_prefetch = 0 : i64, scratch_operands = 0 : i64, tpu.core_type = #tpu.core_type<tc>, window_params = [{transform_indices = @transform_0, window_bounds = array<i64: 512, 128>}, {pipeline_mode = #tpu.pipeline_mode<synchronous>, transform_indices = @transform_1, window_bounds = array<i64: 2, 128>}, {transform_indices = @transform_2, window_bounds = array<i64: 512, 128>}]} {
    %c0 = arith.constant 0 : index
    %c0_0 = arith.constant 0 : index
    %0 = vector.load %arg2[%c0, %c0_0] : memref<2x128xf32, #tpu.memory_space<vmem>>, vector<1x128xf32>
    %c1 = arith.constant 1 : index
    %c0_1 = arith.constant 0 : index
    %1 = vector.load %arg2[%c1, %c0_1] : memref<2x128xf32, #tpu.memory_space<vmem>>, vector<1x128xf32>
    %c0_2 = arith.constant 0 : index
    %c0_3 = arith.constant 0 : index
    %2 = vector.load %arg1[%c0_2, %c0_3] : memref<512x128xbf16, #tpu.memory_space<vmem>>, vector<512x128xbf16>
    %3 = arith.extf %2 : vector<512x128xbf16> to vector<512x128xf32>
    %4 = vector.broadcast %0 : vector<1x128xf32> to vector<512x128xf32>
    %5 = arith.mulf %3, %4 : vector<512x128xf32>
    %6 = vector.broadcast %1 : vector<1x128xf32> to vector<512x128xf32>
    %7 = arith.addf %5, %6 : vector<512x128xf32>
    %cst = arith.constant 0.000000e+00 : f32
    %8 = vector.broadcast %cst : f32 to vector<512x128xf32>
    %9 = arith.maximumf %7, %8 : vector<512x128xf32>
    %10 = arith.truncf %9 : vector<512x128xf32> to vector<512x128xbf16>
    %c0_4 = arith.constant 0 : index
    %c0_5 = arith.constant 0 : index
    %11 = vector.load %arg3[%c0_4, %c0_5] : memref<512x128xbf16, #tpu.memory_space<vmem>>, vector<512x128xbf16>
    tpu.vector_store %arg3[%c0_4, %c0_5], %10 {strides = array<i32>} : memref<512x128xbf16, #tpu.memory_space<vmem>>, vector<512x128xbf16>,
    return
  }
  func.func @transform_0(%arg0: i32) -> (i32, i32) {
    %c0_i32 = arith.constant 0 : i32
    %c0_i32_0 = arith.constant 0 : i32
    return %arg0, %c0_i32 : i32, i32
  }
  func.func @transform_1(%arg0: i32) -> (i32, i32) {
    %c0_i32 = arith.constant 0 : i32
    %c0_i32_0 = arith.constant 0 : i32
    %c0_i32_1 = arith.constant 0 : i32
    return %c0_i32, %c0_i32_0 : i32, i32
  }
  func.func @transform_2(%arg0: i32) -> (i32, i32) {
    %c0_i32 = arith.constant 0 : i32
    %c0_i32_0 = arith.constant 0 : i32
    return %arg0, %c0_i32 : i32, i32
  }
}

</mosaic_0001>

<llo_original>
// kernel: aspp_module_forward.3
$region0: #{aspp_module_forward.3}
  #allocation0 [shape = 'u32[]', space=smem, size = 0x4, offset = 0x4, fixed_abs, tag = 'smem constant byte address 0x4 - core index']
  #allocation1 [shape = 'u32[144,128]{1,0:T(1,128)}', space=vmem, size = 0x12000, scoped, tag = 'internal scratch']
  %s0 = inlined_call_operand.vmem [shape: bf16[512,128], index: 0, kind: input, shape index: {}, may-alias: {0,2}]
  %s1 = inlined_call_operand.vmem [shape: f32[2,128], index: 1, kind: input, shape index: {}]
  %s2 = inlined_call_operand.vmem [shape: bf16[512,128], index: 2, kind: output, shape index: {}, may-alias: {0,2}]
  %s3 = sld [smem:[#allocation0]]
  $region18: #{aspp_module_forward.3} parent=0
    _
  %s5 = ssub.s32 1, %s3
  %s6 = scalar_select 0, %s5, %s3
  // Predicated region
  $region2: #{aspp_module_forward.3} parent=0 // pred_check
    _
  $region3: #{aspp_module_forward.3} parent=0 // pred_check_branch
    %8 = sbr.rel (0) target = $region5
  $region4: #{aspp_module_forward.3} parent=0 // pred_region
    _
  $region5: #{aspp_module_forward.3} parent=0 // pred_fallthru
    _
  // Predicated region
  $region6: #{aspp_module_forward.3} parent=0 // pred_check
    _
  $region7: #{aspp_module_forward.3} parent=0 // pred_check_branch
    %10 = sbr.rel (0) target = $region9
  $region8: #{aspp_module_forward.3} parent=0 // pred_region
    _
  $region9: #{aspp_module_forward.3} parent=0 // pred_fallthru
    _
  %v11 = vld [vmem:[%s1] sm:$0x1]
  %v12 = vld [vmem:[%s1 + $0x1] sm:$0x1]
  %v13 = vld [vmem:[%s0] sm:$0xf]
  %v14 = vld [vmem:[%s0 + $0x4] sm:$0xf]
  %v15 = vld [vmem:[%s0 + $0x8] sm:$0xf]
  %v16 = vld [vmem:[%s0 + $0xc] sm:$0xf]
  %v17 = vld [vmem:[%s0 + $0x10] sm:$0xf]
  %v18 = vld [vmem:[%s0 + $0x14] sm:$0xf]
  %v19 = vld [vmem:[%s0 + $0x18] sm:$0xf]
  %v20 = vld [vmem:[%s0 + $0x1c] sm:$0xf]
  %v21 = vld [vmem:[%s0 + $0x20] sm:$0xf]
  %v22 = vld [vmem:[%s0 + $0x24] sm:$0xf]
  %v23 = vld [vmem:[%s0 + $0x28] sm:$0xf]
  %v24 = vld [vmem:[%s0 + $0x2c] sm:$0xf]
  %v25 = vld [vmem:[%s0 + $0x30] sm:$0xf]
  %v26 = vld [vmem:[%s0 + $0x34] sm:$0xf]
  %v27 = vld [vmem:[%s0 + $0x38] sm:$0xf]
  %v28 = vld [vmem:[%s0 + $0x3c] sm:$0xf]
  %v29 = vld [vmem:[%s0 + $0x40] sm:$0xf]
  %v30 = vld [vmem:[%s0 + $0x44] sm:$0xf]
  %v31 = vld [vmem:[%s0 + $0x48] sm:$0xf]
  %v32 = vld [vmem:[%s0 + $0x4c] sm:$0xf]
  %v33 = vld [vmem:[%s0 + $0x50] sm:$0xf]
  %v34 = vld [vmem:[%s0 + $0x54] sm:$0xf]
  %v35 = vld [vmem:[%s0 + $0x58] sm:$0xf]
  %v36 = vld [vmem:[%s0 + $0x5c] sm:$0xf]
  %v37 = vld [vmem:[%s0 + $0x60] sm:$0xf]
  %v38 = vld [vmem:[%s0 + $0x64] sm:$0xf]
  %v39 = vld [vmem:[%s0 + $0x68] sm:$0xf]
  %v40 = vld [vmem:[%s0 + $0x6c] sm:$0xf]
  %v41 = vld [vmem:[%s0 + $0x70] sm:$0xf]
  %v42 = vld [vmem:[%s0 + $0x74] sm:$0xf]
  %v43 = vld [vmem:[%s0 + $0x78] sm:$0xf]
  %v44 = vld [vmem:[%s0 + $0x7c] sm:$0xf]
  %v45 = vld [vmem:[%s0 + $0x80] sm:$0xf]
  %v46 = vld [vmem:[%s0 + $0x84] sm:$0xf]
  %v47 = vld [vmem:[%s0 + $0x88] sm:$0xf]
  %v48 = vld [vmem:[%s0 + $0x8c] sm:$0xf]
  %v49 = vld [vmem:[%s0 + $0x90] sm:$0xf]
  %v50 = vld [vmem:[%s0 + $0x94] sm:$0xf]
  %v51 = vld [vmem:[%s0 + $0x98] sm:$0xf]
  %v52 = vld [vmem:[%s0 + $0x9c] sm:$0xf]
  %v53 = vld [vmem:[%s0 + $0xa0] sm:$0xf]
  %v54 = vld [vmem:[%s0 + $0xa4] sm:$0xf]
  %v55 = vld [vmem:[%s0 + $0xa8] sm:$0xf]
  %v56 = vld [vmem:[%s0 + $0xac] sm:$0xf]
  %v57 = vld [vmem:[%s0 + $0xb0] sm:$0xf]
  %v58 = vld [vmem:[%s0 + $0xb4] sm:$0xf]
  %v59 = vld [vmem:[%s0 + $0xb8] sm:$0xf]
  %v60 = vld [vmem:[%s0 + $0xbc] sm:$0xf]
  %v61 = vld [vmem:[%s0 + $0xc0] sm:$0xf]
  %v62 = vld [vmem:[%s0 + $0xc4] sm:$0xf]
  %v63 = vld [vmem:[%s0 + $0xc8] sm:$0xf]
  %v64 = vld [vmem:[%s0 + $0xcc] sm:$0xf]
  %v65 = vld [vmem:[%s0 + $0xd0] sm:$0xf]
  %v66 = vld [vmem:[%s0 + $0xd4] sm:$0xf]
  %v67 = vld [vmem:[%s0 + $0xd8] sm:$0xf]
  %v68 = vld [vmem:[%s0 + $0xdc] sm:$0xf]
  %v69 = vld [vmem:[%s0 + $0xe0] sm:$0xf]
  %v70 = vld [vmem:[%s0 + $0xe4] sm:$0xf]
  %v71 = vld [vmem:[%s0 + $0xe8] sm:$0xf]
  %v72 = vld [vmem:[%s0 + $0xec] sm:$0xf]
  %v73 = vld [vmem:[%s0 + $0xf0] sm:$0xf]
  %v74 = vld [vmem:[%s0 + $0xf4] sm:$0xf]
  %v75 = vld [vmem:[%s0 + $0xf8] sm:$0xf]
  %v76 = vld [vmem:[%s0 + $0xfc] sm:$0xf]
  %v77 = vunpack.c.l.bf16 %v13
  %v78 = vunpack.c.l.bf16 %v14
  %v79 = vunpack.c.l.bf16 %v15
  %v80 = vunpack.c.l.bf16 %v16
  %v81 = vunpack.c.l.bf16 %v17
  %v82 = vunpack.c.l.bf16 %v18
  %v83 = vunpack.c.l.bf16 %v19
  %v84 = vunpack.c.l.bf16 %v20
  %v85 = vunpack.c.l.bf16 %v21
  %v86 = vunpack.c.l.bf16 %v22
  %v87 = vunpack.c.l.bf16 %v23
  %v88 = vunpack.c.l.bf16 %v24
  %v89 = vunpack.c.l.bf16 %v25
  %v90 = vunpack.c.l.bf16 %v26
  %v91 = vunpack.c.l.bf16 %v27
  %v92 = vunpack.c.l.bf16 %v28
  %v93 = vunpack.c.l.bf16 %v29
  %v94 = vunpack.c.l.bf16 %v30
  %v95 = vunpack.c.l.bf16 %v31
  %v96 = vunpack.c.l.bf16 %v32
  %v97 = vunpack.c.l.bf16 %v33
  %v98 = vunpack.c.l.bf16 %v34
  %v99 = vunpack.c.l.bf16 %v35
  %v100 = vunpack.c.l.bf16 %v36
  %v101 = vunpack.c.l.bf16 %v37
  %v102 = vunpack.c.l.bf16 %v38
  %v103 = vunpack.c.l.bf16 %v39
  %v104 = vunpack.c.l.bf16 %v40
  %v105 = vunpack.c.l.bf16 %v41
  %v106 = vunpack.c.l.bf16 %v42
  %v107 = vunpack.c.l.bf16 %v43
  %v108 = vunpack.c.l.bf16 %v44
  %v109 = vunpack.c.l.bf16 %v45
  %v110 = vunpack.c.l.bf16 %v46
  %v111 = vunpack.c.l.bf16 %v47
  %v112 = vunpack.c.l.bf16 %v48
  %v113 = vunpack.c.l.bf16 %v49
  %v114 = vunpack.c.l.bf16 %v50
  %v115 = vunpack.c.l.bf16 %v51
  %v116 = vunpack.c.l.bf16 %v52
  %v117 = vunpack.c.l.bf16 %v53
  %v118 = vunpack.c.l.bf16 %v54
  %v119 = vunpack.c.l.bf16 %v55
  %v120 = vunpack.c.l.bf16 %v56
  %v121 = vunpack.c.l.bf16 %v57
  %v122 = vunpack.c.l.bf16 %v58
  %v123 = vunpack.c.l.bf16 %v59
  %v124 = vunpack.c.l.bf16 %v60
  %v125 = vunpack.c.l.bf16 %v61
  %v126 = vunpack.c.l.bf16 %v62
  %v127 = vunpack.c.l.bf16 %v63
  %v128 = vunpack.c.l.bf16 %v64
  %v129 = vunpack.c.l.bf16 %v65
  %v130 = vunpack.c.l.bf16 %v66
  %v131 = vunpack.c.l.bf16 %v67
  %v132 = vunpack.c.l.bf16 %v68
  %v133 = vunpack.c.l.bf16 %v69
  %v134 = vunpack.c.l.bf16 %v70
  %v135 = vunpack.c.l.bf16 %v71
  %v136 = vunpack.c.l.bf16 %v72
  %v137 = vunpack.c.l.bf16 %v73
  %v138 = vunpack.c.l.bf16 %v74
  %v139 = vunpack.c.l.bf16 %v75
  %v140 = vunpack.c.l.bf16 %v76
  %v141 = vlaneseq
  %v142 = vshrl.u32 %v141, 7
  %v143 = vsub.s32 0, %v142
  %v144 = vrot.slane %v11, %v143
  %v145 = vmul.f32 %v77, %v144
  %v146 = vmul.f32 %v78, %v144
  %v147 = vmul.f32 %v79, %v144
  %v148 = vmul.f32 %v80, %v144
  %v149 = vmul.f32 %v81, %v144
  %v150 = vmul.f32 %v82, %v144
  %v151 = vmul.f32 %v83, %v144
  %v152 = vmul.f32 %v84, %v144
  %v153 = vmul.f32 %v85, %v144
  %v154 = vmul.f32 %v86, %v144
  %v155 = vmul.f32 %v87, %v144
  %v156 = vmul.f32 %v88, %v144
  %v157 = vmul.f32 %v89, %v144
  %v158 = vmul.f32 %v90, %v144
  %v159 = vmul.f32 %v91, %v144
  %v160 = vmul.f32 %v92, %v144
  %v161 = vmul.f32 %v93, %v144
  %v162 = vmul.f32 %v94, %v144
  %v163 = vmul.f32 %v95, %v144
  %v164 = vmul.f32 %v96, %v144
  %v165 = vmul.f32 %v97, %v144
  %v166 = vmul.f32 %v98, %v144
  %v167 = vmul.f32 %v99, %v144
  %v168 = vmul.f32 %v100, %v144
  %v169 = vmul.f32 %v101, %v144
  %v170 = vmul.f32 %v102, %v144
  %v171 = vmul.f32 %v103, %v144
  %v172 = vmul.f32 %v104, %v144
  %v173 = vmul.f32 %v105, %v144
  %v174 = vmul.f32 %v106, %v144
  %v175 = vmul.f32 %v107, %v144
  %v176 = vmul.f32 %v108, %v144
  %v177 = vmul.f32 %v109, %v144
  %v178 = vmul.f32 %v110, %v144
  %v179 = vmul.f32 %v111, %v144
  %v180 = vmul.f32 %v112, %v144
  %v181 = vmul.f32 %v113, %v144
  %v182 = vmul.f32 %v114, %v144
  %v183 = vmul.f32 %v115, %v144
  %v184 = vmul.f32 %v116, %v144
  %v185 = vmul.f32 %v117, %v144
  %v186 = vmul.f32 %v118, %v144
  %v187 = vmul.f32 %v119, %v144
  %v188 = vmul.f32 %v120, %v144
  %v189 = vmul.f32 %v121, %v144
  %v190 = vmul.f32 %v122, %v144
  %v191 = vmul.f32 %v123, %v144
  %v192 = vmul.f32 %v124, %v144
  %v193 = vmul.f32 %v125, %v144
  %v194 = vmul.f32 %v126, %v144
  %v195 = vmul.f32 %v127, %v144
  %v196 = vmul.f32 %v128, %v144
  %v197 = vmul.f32 %v129, %v144
  %v198 = vmul.f32 %v130, %v144
  %v199 = vmul.f32 %v131, %v144
  %v200 = vmul.f32 %v132, %v144
  %v201 = vmul.f32 %v133, %v144
  %v202 = vmul.f32 %v134, %v144
  %v203 = vmul.f32 %v135, %v144
  %v204 = vmul.f32 %v136, %v144
  %v205 = vmul.f32 %v137, %v144
  %v206 = vmul.f32 %v138, %v144
  %v207 = vmul.f32 %v139, %v144
  %v208 = vmul.f32 %v140, %v144
  %v209 = vlaneseq
  %v210 = vshrl.u32 %v209, 7
  %v211 = vsub.s32 0, %v210
  %v212 = vrot.slane %v12, %v211
  %v213 = vadd.f32 %v145, %v212
  %v214 = vadd.f32 %v146, %v212
  %v215 = vadd.f32 %v147, %v212
  %v216 = vadd.f32 %v148, %v212
  %v217 = vadd.f32 %v149, %v212
  %v218 = vadd.f32 %v150, %v212
  %v219 = vadd.f32 %v151, %v212
  %v220 = vadd.f32 %v152, %v212
  %v221 = vadd.f32 %v153, %v212
  %v222 = vadd.f32 %v154, %v212
  %v223 = vadd.f32 %v155, %v212
  %v224 = vadd.f32 %v156, %v212
  %v225 = vadd.f32 %v157, %v212
  %v226 = vadd.f32 %v158, %v212
  %v227 = vadd.f32 %v159, %v212
  %v228 = vadd.f32 %v160, %v212
  %v229 = vadd.f32 %v161, %v212
  %v230 = vadd.f32 %v162, %v212
  %v231 = vadd.f32 %v163, %v212
  %v232 = vadd.f32 %v164, %v212
  %v233 = vadd.f32 %v165, %v212
  %v234 = vadd.f32 %v166, %v212
  %v235 = vadd.f32 %v167, %v212
  %v236 = vadd.f32 %v168, %v212
  %v237 = vadd.f32 %v169, %v212
  %v238 = vadd.f32 %v170, %v212
  %v239 = vadd.f32 %v171, %v212
  %v240 = vadd.f32 %v172, %v212
  %v241 = vadd.f32 %v173, %v212
  %v242 = vadd.f32 %v174, %v212
  %v243 = vadd.f32 %v175, %v212
  %v244 = vadd.f32 %v176, %v212
  %v245 = vadd.f32 %v177, %v212
  %v246 = vadd.f32 %v178, %v212
  %v247 = vadd.f32 %v179, %v212
  %v248 = vadd.f32 %v180, %v212
  %v249 = vadd.f32 %v181, %v212
  %v250 = vadd.f32 %v182, %v212
  %v251 = vadd.f32 %v183, %v212
  %v252 = vadd.f32 %v184, %v212
  %v253 = vadd.f32 %v185, %v212
  %v254 = vadd.f32 %v186, %v212
  %v255 = vadd.f32 %v187, %v212
  %v256 = vadd.f32 %v188, %v212
  %v257 = vadd.f32 %v189, %v212
  %v258 = vadd.f32 %v190, %v212
  %v259 = vadd.f32 %v191, %v212
  %v260 = vadd.f32 %v192, %v212
  %v261 = vadd.f32 %v193, %v212
  %v262 = vadd.f32 %v194, %v212
  %v263 = vadd.f32 %v195, %v212
  %v264 = vadd.f32 %v196, %v212
  %v265 = vadd.f32 %v197, %v212
  %v266 = vadd.f32 %v198, %v212
  %v267 = vadd.f32 %v199, %v212
  %v268 = vadd.f32 %v200, %v212
  %v269 = vadd.f32 %v201, %v212
  %v270 = vadd.f32 %v202, %v212
  %v271 = vadd.f32 %v203, %v212
  %v272 = vadd.f32 %v204, %v212
  %v273 = vadd.f32 %v205, %v212
  %v274 = vadd.f32 %v206, %v212
  %v275 = vadd.f32 %v207, %v212
  %v276 = vadd.f32 %v208, %v212
  %v277 = vmax.f32 %v213, 0.0
  %v278 = vmax.f32 %v214, 0.0
  %v279 = vmax.f32 %v215, 0.0
  %v280 = vmax.f32 %v216, 0.0
  %v281 = vmax.f32 %v217, 0.0
  %v282 = vmax.f32 %v218, 0.0
  %v283 = vmax.f32 %v219, 0.0
  %v284 = vmax.f32 %v220, 0.0
  %v285 = vmax.f32 %v221, 0.0
  %v286 = vmax.f32 %v222, 0.0
  %v287 = vmax.f32 %v223, 0.0
  %v288 = vmax.f32 %v224, 0.0
  %v289 = vmax.f32 %v225, 0.0
  %v290 = vmax.f32 %v226, 0.0
  %v291 = vmax.f32 %v227, 0.0
  %v292 = vmax.f32 %v228, 0.0
  %v293 = vmax.f32 %v229, 0.0
  %v294 = vmax.f32 %v230, 0.0
  %v295 = vmax.f32 %v231, 0.0
  %v296 = vmax.f32 %v232, 0.0
  %v297 = vmax.f32 %v233, 0.0
  %v298 = vmax.f32 %v234, 0.0
  %v299 = vmax.f32 %v235, 0.0
  %v300 = vmax.f32 %v236, 0.0
  %v301 = vmax.f32 %v237, 0.0
  %v302 = vmax.f32 %v238, 0.0
  %v303 = vmax.f32 %v239, 0.0
  %v304 = vmax.f32 %v240, 0.0
  %v305 = vmax.f32 %v241, 0.0
  %v306 = vmax.f32 %v242, 0.0
  %v307 = vmax.f32 %v243, 0.0
  %v308 = vmax.f32 %v244, 0.0
  %v309 = vmax.f32 %v245, 0.0
  %v310 = vmax.f32 %v246, 0.0
  %v311 = vmax.f32 %v247, 0.0
  %v312 = vmax.f32 %v248, 0.0
  %v313 = vmax.f32 %v249, 0.0
  %v314 = vmax.f32 %v250, 0.0
  %v315 = vmax.f32 %v251, 0.0
  %v316 = vmax.f32 %v252, 0.0
  %v317 = vmax.f32 %v253, 0.0
  %v318 = vmax.f32 %v254, 0.0
  %v319 = vmax.f32 %v255, 0.0
  %v320 = vmax.f32 %v256, 0.0
  %v321 = vmax.f32 %v257, 0.0
  %v322 = vmax.f32 %v258, 0.0
  %v323 = vmax.f32 %v259, 0.0
  %v324 = vmax.f32 %v260, 0.0
  %v325 = vmax.f32 %v261, 0.0
  %v326 = vmax.f32 %v262, 0.0
  %v327 = vmax.f32 %v263, 0.0
  %v328 = vmax.f32 %v264, 0.0
  %v329 = vmax.f32 %v265, 0.0
  %v330 = vmax.f32 %v266, 0.0
  %v331 = vmax.f32 %v267, 0.0
  %v332 = vmax.f32 %v268, 0.0
  %v333 = vmax.f32 %v269, 0.0
  %v334 = vmax.f32 %v270, 0.0
  %v335 = vmax.f32 %v271, 0.0
  %v336 = vmax.f32 %v272, 0.0
  %v337 = vmax.f32 %v273, 0.0
  %v338 = vmax.f32 %v274, 0.0
  %v339 = vmax.f32 %v275, 0.0
  %v340 = vmax.f32 %v276, 0.0
  %v341 = vpack.c.bf16 %v278, %v277
  %v342 = vpack.c.bf16 %v280, %v279
  %v343 = vpack.c.bf16 %v282, %v281
  %v344 = vpack.c.bf16 %v284, %v283
  %v345 = vpack.c.bf16 %v286, %v285
  %v346 = vpack.c.bf16 %v288, %v287
  %v347 = vpack.c.bf16 %v290, %v289
  %v348 = vpack.c.bf16 %v292, %v291
  %v349 = vpack.c.bf16 %v294, %v293
  %v350 = vpack.c.bf16 %v296, %v295
  %v351 = vpack.c.bf16 %v298, %v297
  %v352 = vpack.c.bf16 %v300, %v299
  %v353 = vpack.c.bf16 %v302, %v301
  %v354 = vpack.c.bf16 %v304, %v303
  %v355 = vpack.c.bf16 %v306, %v305
  %v356 = vpack.c.bf16 %v308, %v307
  %v357 = vpack.c.bf16 %v310, %v309
  %v358 = vpack.c.bf16 %v312, %v311
  %v359 = vpack.c.bf16 %v314, %v313
  %v360 = vpack.c.bf16 %v316, %v315
  %v361 = vpack.c.bf16 %v318, %v317
  %v362 = vpack.c.bf16 %v320, %v319
  %v363 = vpack.c.bf16 %v322, %v321
  %v364 = vpack.c.bf16 %v324, %v323
  %v365 = vpack.c.bf16 %v326, %v325
  %v366 = vpack.c.bf16 %v328, %v327
  %v367 = vpack.c.bf16 %v330, %v329
  %v368 = vpack.c.bf16 %v332, %v331
  %v369 = vpack.c.bf16 %v334, %v333
  %v370 = vpack.c.bf16 %v336, %v335
  %v371 = vpack.c.bf16 %v338, %v337
  %v372 = vpack.c.bf16 %v340, %v339
  %v405 = vunpack.c.l.b16 %v341
  %v406 = vunpack.c.h.b16 %v341
  %v407 = vunpack.c.l.b16 %v342
  %v408 = vunpack.c.h.b16 %v342
  %v409 = vunpack.c.l.b16 %v343
  %v410 = vunpack.c.h.b16 %v343
  %v411 = vunpack.c.l.b16 %v344
  %v412 = vunpack.c.h.b16 %v344
  %v413 = vunpack.c.l.b16 %v345
  %v414 = vunpack.c.h.b16 %v345
  %v415 = vunpack.c.l.b16 %v346
  %v416 = vunpack.c.h.b16 %v346
  %v417 = vunpack.c.l.b16 %v347
  %v418 = vunpack.c.h.b16 %v347
  %v419 = vunpack.c.l.b16 %v348
  %v420 = vunpack.c.h.b16 %v348
  %v421 = vunpack.c.l.b16 %v349
  %v422 = vunpack.c.h.b16 %v349
  %v423 = vunpack.c.l.b16 %v350
  %v424 = vunpack.c.h.b16 %v350
  %v425 = vunpack.c.l.b16 %v351
  %v426 = vunpack.c.h.b16 %v351
  %v427 = vunpack.c.l.b16 %v352
  %v428 = vunpack.c.h.b16 %v352
  %v429 = vunpack.c.l.b16 %v353
  %v430 = vunpack.c.h.b16 %v353
  %v431 = vunpack.c.l.b16 %v354
  %v432 = vunpack.c.h.b16 %v354
  %v433 = vunpack.c.l.b16 %v355
  %v434 = vunpack.c.h.b16 %v355
  %v435 = vunpack.c.l.b16 %v356
  %v436 = vunpack.c.h.b16 %v356
  %v437 = vunpack.c.l.b16 %v357
  %v438 = vunpack.c.h.b16 %v357
  %v439 = vunpack.c.l.b16 %v358
  %v440 = vunpack.c.h.b16 %v358
  %v441 = vunpack.c.l.b16 %v359
  %v442 = vunpack.c.h.b16 %v359
  %v443 = vunpack.c.l.b16 %v360
  %v444 = vunpack.c.h.b16 %v360
  %v445 = vunpack.c.l.b16 %v361
  %v446 = vunpack.c.h.b16 %v361
  %v447 = vunpack.c.l.b16 %v362
  %v448 = vunpack.c.h.b16 %v362
  %v449 = vunpack.c.l.b16 %v363
  %v450 = vunpack.c.h.b16 %v363
  %v451 = vunpack.c.l.b16 %v364
  %v452 = vunpack.c.h.b16 %v364
  %v453 = vunpack.c.l.b16 %v365
  %v454 = vunpack.c.h.b16 %v365
  %v455 = vunpack.c.l.b16 %v366
  %v456 = vunpack.c.h.b16 %v366
  %v457 = vunpack.c.l.b16 %v367
  %v458 = vunpack.c.h.b16 %v367
  %v459 = vunpack.c.l.b16 %v368
  %v460 = vunpack.c.h.b16 %v368
  %v461 = vunpack.c.l.b16 %v369
  %v462 = vunpack.c.h.b16 %v369
  %v463 = vunpack.c.l.b16 %v370
  %v464 = vunpack.c.h.b16 %v370
  %v465 = vunpack.c.l.b16 %v371
  %v466 = vunpack.c.h.b16 %v371
  %v467 = vunpack.c.l.b16 %v372
  %v468 = vunpack.c.h.b16 %v372
  %v469 = vpack.c.b16 %v405, %v405
  %v470 = vpack.c.b16 %v406, %v406
  %v471 = vpack.c.b16 %v407, %v407
  %v472 = vpack.c.b16 %v408, %v408
  %v473 = vpack.c.b16 %v409, %v409
  %v474 = vpack.c.b16 %v410, %v410
  %v475 = vpack.c.b16 %v411, %v411
  %v476 = vpack.c.b16 %v412, %v412
  %v477 = vpack.c.b16 %v413, %v413
  %v478 = vpack.c.b16 %v414, %v414
  %v479 = vpack.c.b16 %v415, %v415
  %v480 = vpack.c.b16 %v416, %v416
  %v481 = vpack.c.b16 %v417, %v417
  %v482 = vpack.c.b16 %v418, %v418
  %v483 = vpack.c.b16 %v419, %v419
  %v484 = vpack.c.b16 %v420, %v420
  %v485 = vpack.c.b16 %v421, %v421
  %v486 = vpack.c.b16 %v422, %v422
  %v487 = vpack.c.b16 %v423, %v423
  %v488 = vpack.c.b16 %v424, %v424
  %v489 = vpack.c.b16 %v425, %v425
  %v490 = vpack.c.b16 %v426, %v426
  %v491 = vpack.c.b16 %v427, %v427
  %v492 = vpack.c.b16 %v428, %v428
  %v493 = vpack.c.b16 %v429, %v429
  %v494 = vpack.c.b16 %v430, %v430
  %v495 = vpack.c.b16 %v431, %v431
  %v496 = vpack.c.b16 %v432, %v432
  %v497 = vpack.c.b16 %v433, %v433
  %v498 = vpack.c.b16 %v434, %v434
  %v499 = vpack.c.b16 %v435, %v435
  %v500 = vpack.c.b16 %v436, %v436
  %v501 = vpack.c.b16 %v437, %v437
  %v502 = vpack.c.b16 %v438, %v438
  %v503 = vpack.c.b16 %v439, %v439
  %v504 = vpack.c.b16 %v440, %v440
  %v505 = vpack.c.b16 %v441, %v441
  %v506 = vpack.c.b16 %v442, %v442
  %v507 = vpack.c.b16 %v443, %v443
  %v508 = vpack.c.b16 %v444, %v444
  %v509 = vpack.c.b16 %v445, %v445
  %v510 = vpack.c.b16 %v446, %v446
  %v511 = vpack.c.b16 %v447, %v447
  %v512 = vpack.c.b16 %v448, %v448
  %v513 = vpack.c.b16 %v449, %v449
  %v514 = vpack.c.b16 %v450, %v450
  %v515 = vpack.c.b16 %v451, %v451
  %v516 = vpack.c.b16 %v452, %v452
  %v517 = vpack.c.b16 %v453, %v453
  %v518 = vpack.c.b16 %v454, %v454
  %v519 = vpack.c.b16 %v455, %v455
  %v520 = vpack.c.b16 %v456, %v456
  %v521 = vpack.c.b16 %v457, %v457
  %v522 = vpack.c.b16 %v458, %v458
  %v523 = vpack.c.b16 %v459, %v459
  %v524 = vpack.c.b16 %v460, %v460
  %v525 = vpack.c.b16 %v461, %v461
  %v526 = vpack.c.b16 %v462, %v462
  %v527 = vpack.c.b16 %v463, %v463
  %v528 = vpack.c.b16 %v464, %v464
  %v529 = vpack.c.b16 %v465, %v465
  %v530 = vpack.c.b16 %v466, %v466
  %v531 = vpack.c.b16 %v467, %v467
  %v532 = vpack.c.b16 %v468, %v468
  %597 = vst [vmem:[%s2] sm:$0xf] %v469
  %598 = vst [vmem:[%s2 + $0x4] sm:$0xf] %v470
  %599 = vst [vmem:[%s2 + $0x8] sm:$0xf] %v471
  %600 = vst [vmem:[%s2 + $0xc] sm:$0xf] %v472
  %601 = vst [vmem:[%s2 + $0x10] sm:$0xf] %v473
  %602 = vst [vmem:[%s2 + $0x14] sm:$0xf] %v474
  %603 = vst [vmem:[%s2 + $0x18] sm:$0xf] %v475
  %604 = vst [vmem:[%s2 + $0x1c] sm:$0xf] %v476
  %605 = vst [vmem:[%s2 + $0x20] sm:$0xf] %v477
  %606 = vst [vmem:[%s2 + $0x24] sm:$0xf] %v478
  %607 = vst [vmem:[%s2 + $0x28] sm:$0xf] %v479
  %608 = vst [vmem:[%s2 + $0x2c] sm:$0xf] %v480
  %609 = vst [vmem:[%s2 + $0x30] sm:$0xf] %v481
  %610 = vst [vmem:[%s2 + $0x34] sm:$0xf] %v482
  %611 = vst [vmem:[%s2 + $0x38] sm:$0xf] %v483
  %612 = vst [vmem:[%s2 + $0x3c] sm:$0xf] %v484
  %613 = vst [vmem:[%s2 + $0x40] sm:$0xf] %v485
  %614 = vst [vmem:[%s2 + $0x44] sm:$0xf] %v486
  %615 = vst [vmem:[%s2 + $0x48] sm:$0xf] %v487
  %616 = vst [vmem:[%s2 + $0x4c] sm:$0xf] %v488
  %617 = vst [vmem:[%s2 + $0x50] sm:$0xf] %v489
  %618 = vst [vmem:[%s2 + $0x54] sm:$0xf] %v490
  %619 = vst [vmem:[%s2 + $0x58] sm:$0xf] %v491
  %620 = vst [vmem:[%s2 + $0x5c] sm:$0xf] %v492
  %621 = vst [vmem:[%s2 + $0x60] sm:$0xf] %v493
  %622 = vst [vmem:[%s2 + $0x64] sm:$0xf] %v494
  %623 = vst [vmem:[%s2 + $0x68] sm:$0xf] %v495
  %624 = vst [vmem:[%s2 + $0x6c] sm:$0xf] %v496
  %625 = vst [vmem:[%s2 + $0x70] sm:$0xf] %v497
  %626 = vst [vmem:[%s2 + $0x74] sm:$0xf] %v498
  %627 = vst [vmem:[%s2 + $0x78] sm:$0xf] %v499
  %628 = vst [vmem:[%s2 + $0x7c] sm:$0xf] %v500
  %629 = vst [vmem:[%s2 + $0x80] sm:$0xf] %v501
  %630 = vst [vmem:[%s2 + $0x84] sm:$0xf] %v502
  %631 = vst [vmem:[%s2 + $0x88] sm:$0xf] %v503
  %632 = vst [vmem:[%s2 + $0x8c] sm:$0xf] %v504
  %633 = vst [vmem:[%s2 + $0x90] sm:$0xf] %v505
  %634 = vst [vmem:[%s2 + $0x94] sm:$0xf] %v506
  %635 = vst [vmem:[%s2 + $0x98] sm:$0xf] %v507
  %636 = vst [vmem:[%s2 + $0x9c] sm:$0xf] %v508
  %637 = vst [vmem:[%s2 + $0xa0] sm:$0xf] %v509
  %638 = vst [vmem:[%s2 + $0xa4] sm:$0xf] %v510
  %639 = vst [vmem:[%s2 + $0xa8] sm:$0xf] %v511
  %640 = vst [vmem:[%s2 + $0xac] sm:$0xf] %v512
  %641 = vst [vmem:[%s2 + $0xb0] sm:$0xf] %v513
  %642 = vst [vmem:[%s2 + $0xb4] sm:$0xf] %v514
  %643 = vst [vmem:[%s2 + $0xb8] sm:$0xf] %v515
  %644 = vst [vmem:[%s2 + $0xbc] sm:$0xf] %v516
  %645 = vst [vmem:[%s2 + $0xc0] sm:$0xf] %v517
  %646 = vst [vmem:[%s2 + $0xc4] sm:$0xf] %v518
  %647 = vst [vmem:[%s2 + $0xc8] sm:$0xf] %v519
  %648 = vst [vmem:[%s2 + $0xcc] sm:$0xf] %v520
  %649 = vst [vmem:[%s2 + $0xd0] sm:$0xf] %v521
  %650 = vst [vmem:[%s2 + $0xd4] sm:$0xf] %v522
  %651 = vst [vmem:[%s2 + $0xd8] sm:$0xf] %v523
  %652 = vst [vmem:[%s2 + $0xdc] sm:$0xf] %v524
  %653 = vst [vmem:[%s2 + $0xe0] sm:$0xf] %v525
  %654 = vst [vmem:[%s2 + $0xe4] sm:$0xf] %v526
  %655 = vst [vmem:[%s2 + $0xe8] sm:$0xf] %v527
  %656 = vst [vmem:[%s2 + $0xec] sm:$0xf] %v528
  %657 = vst [vmem:[%s2 + $0xf0] sm:$0xf] %v529
  %658 = vst [vmem:[%s2 + $0xf4] sm:$0xf] %v530
  %659 = vst [vmem:[%s2 + $0xf8] sm:$0xf] %v531
  %660 = vst [vmem:[%s2 + $0xfc] sm:$0xf] %v532
  // Predicated region
  $region10: #{aspp_module_forward.3} parent=0 // pred_check
    _
  $region11: #{aspp_module_forward.3} parent=0 // pred_check_branch
    %662 = sbr.rel (0) target = $region13
  $region12: #{aspp_module_forward.3} parent=0 // pred_region
    _
  $region13: #{aspp_module_forward.3} parent=0 // pred_fallthru
    _
  // Predicated region
  $region14: #{aspp_module_forward.3} parent=0 // pred_check
    _
  $region15: #{aspp_module_forward.3} parent=0 // pred_check_branch
    %664 = sbr.rel (0) target = $region17
  $region16: #{aspp_module_forward.3} parent=0 // pred_region
    _
  $region17: #{aspp_module_forward.3} parent=0 // pred_fallthru
    _

// kernel: aspp_module_forward.2
$region0: #{aspp_module_forward.2}
  #allocation0 [shape = 'u32[]', space=smem, size = 0x4, offset = 0x4, fixed_abs, tag = 'smem constant byte address 0x4 - core index']
  #allocation1 [shape = 'u32[144,128]{1,0:T(1,128)}', space=vmem, size = 0x12000, scoped, tag = 'internal scratch']
  %s0 = inlined_call_operand.vmem [shape: bf16[2,20,20,128], index: 0, kind: input, shape index: {}]
  %s1 = inlined_call_operand.vmem [shape: bf16[2,1,4,20,128], index: 1, kind: input, shape index: {}]
  %s2 = inlined_call_operand.vmem [shape: bf16[9,128,128], index: 2, kind: input, shape index: {}]
  %s3 = inlined_call_operand.vmem [shape: bf16[2,256,128], index: 3, kind: output, shape index: {0}]
  %s4 = inlined_call_operand.vmem [shape: f32[2,1,2,128], index: 4, kind: output, shape index: {1}]
  %5 = xla_tuple %s3, %s4
  %s6 = sld [smem:[#allocation0]]
  $region53: #{aspp_module_forward.2} parent=0
    _
  %s8 = ssub.s32 1, %s6
  %s9 = scalar_select 0, %s8, %s6
  loop: start=0, step=1, limit=4
  $region2: #{aspp_module_forward.2} parent=0 // loop_pre_header
    _
  $region3: #{aspp_module_forward.2} parent=0 // loop_header
    %s11 = sphi 0, %s15
    %p12 = scmp.ge.s32.totalorder %s11, 4
    %s18 = sphi 0, %s30
    %s19 = sphi 0, %s26
    %s20 = sphi 0, %s18
    %s21 = sphi 0, %s19
    %s22 = sphi 0, %s20
    %s23 = sphi 0, %s21
    %s35 = sphi 0, %s37
    %s38 = sphi 0, %s35
    %s39 = sphi 0, %s38
    %s55 = sphi 0, %s39
    %s63 = sphi 0, %s65
    %s66 = sphi 0, %s63
    %s67 = sphi 0, %s66
    %s83 = sphi 0, %s67
    %s87 = sphi 0, %s87
    %s89 = sphi 0, %s87
    %s90 = sphi 0, %s89
    %s104 = sphi 0, %s90
    %s112 = sphi 0, %s114
    %s115 = sphi 0, %s112
    %s116 = sphi 0, %s115
    %s132 = sphi 0, %s116
    %s140 = sphi 0, %s142
    %s143 = sphi 0, %s140
    %s144 = sphi 0, %s143
    %s160 = sphi 0, %s144
  $region4: #{aspp_module_forward.2} parent=0 // loop_header_branch
    %14 = sbr.rel (%p12) target = $region8
  $region5: #{aspp_module_forward.2} parent=0 // loop_body
    %s16 = ssub.s32 %s11, 1
    %s17 = ssub.s32 %s11, 2
    %s24 = sadd.s32 1, %s19
    %p25 = scmp.ge.s32.totalorder %s24, 1
    %s26 = scalar_select %p25, 0, %s24
    %s27 = sadd.s32 1, %s18
    %s28 = scalar_select %p25, %s27, %s18
    %p29 = scmp.ge.s32.totalorder %s28, 2
    %s30 = scalar_select %p29, 0, %s28
    %s31 = ssub.s32 %s18, %s30
    %s32 = ssub.s32 %s19, %s26
    %s33 = sor.u32 %s31, %s32
    %p34 = scmp.eq.s32.totalorder %s33, 0
    %s36 = sadd.s32 %s35, 1
    %s37 = scalar_select %p34, %s35, %s36
    %p40 = pneg %p34
    %p41 = scmp.eq.s32.totalorder %s11, 1
    %p42 = por %p40, %p41
    %p43 = scmp.ne.s32.totalorder %s35, %s38
    %p44 = scmp.eq.s32.totalorder %s11, 0
    %p45 = por %p43, %p44
    %p46 = scmp.ne.s32.totalorder %s35, %s38
    %p47 = scmp.eq.s32.totalorder %s16, 1
    %p48 = por %p46, %p47
    %p49 = scmp.ne.s32.totalorder %s38, %s39
    %p50 = scmp.eq.s32.totalorder %s16, 0
    %p51 = por %p49, %p50
    %p52 = scmp.ne.s32.totalorder %s38, %s39
    %p53 = scmp.eq.s32.totalorder %s17, 1
    %p54 = por %p52, %p53
    %p56 = scmp.ne.s32.totalorder %s39, %s55
    %p57 = scmp.eq.s32.totalorder %s17, 0
    %p58 = por %p56, %p57
    %s59 = ssub.s32 %s18, %s30
    %s60 = ssub.s32 %s19, %s26
    %s61 = sor.u32 %s59, %s60
    %p62 = scmp.eq.s32.totalorder %s61, 0
    %s64 = sadd.s32 %s63, 1
    %s65 = scalar_select %p62, %s63, %s64
    %p68 = pneg %p62
    %p69 = scmp.eq.s32.totalorder %s11, 1
    %p70 = por %p68, %p69
    %p71 = scmp.ne.s32.totalorder %s63, %s66
    %p72 = scmp.eq.s32.totalorder %s11, 0
    %p73 = por %p71, %p72
    %p74 = scmp.ne.s32.totalorder %s63, %s66
    %p75 = scmp.eq.s32.totalorder %s16, 1
    %p76 = por %p74, %p75
    %p77 = scmp.ne.s32.totalorder %s66, %s67
    %p78 = scmp.eq.s32.totalorder %s16, 0
    %p79 = por %p77, %p78
    %p80 = scmp.ne.s32.totalorder %s66, %s67
    %p81 = scmp.eq.s32.totalorder %s17, 1
    %p82 = por %p80, %p81
    %p84 = scmp.ne.s32.totalorder %s67, %s83
    %p85 = scmp.eq.s32.totalorder %s17, 0
    %p86 = por %p84, %p85
    %s88 = sadd.s32 %s87, 1
    %p91 = scmp.eq.s32.totalorder %s11, 1
    %p92 = scmp.ne.s32.totalorder %s87, %s89
    %p93 = scmp.eq.s32.totalorder %s11, 0
    %p94 = por %p92, %p93
    %p95 = scmp.ne.s32.totalorder %s87, %s89
    %p96 = scmp.eq.s32.totalorder %s16, 1
    %p97 = por %p95, %p96
    %p98 = scmp.ne.s32.totalorder %s89, %s90
    %p99 = scmp.eq.s32.totalorder %s16, 0
    %p100 = por %p98, %p99
    %p101 = scmp.ne.s32.totalorder %s89, %s90
    %p102 = scmp.eq.s32.totalorder %s17, 1
    %p103 = por %p101, %p102
    %p105 = scmp.ne.s32.totalorder %s90, %s104
    %p106 = scmp.eq.s32.totalorder %s17, 0
    %p107 = por %p105, %p106
    %s108 = ssub.s32 %s18, %s30
    %s109 = ssub.s32 %s19, %s26
    %s110 = sor.u32 %s108, %s109
    %p111 = scmp.eq.s32.totalorder %s110, 0
    %s113 = sadd.s32 %s112, 1
    %s114 = scalar_select %p111, %s112, %s113
    %p117 = pneg %p111
    %p118 = scmp.eq.s32.totalorder %s11, 1
    %p119 = por %p117, %p118
    %p120 = scmp.ne.s32.totalorder %s112, %s115
    %p121 = scmp.eq.s32.totalorder %s11, 0
    %p122 = por %p120, %p121
    %p123 = scmp.ne.s32.totalorder %s112, %s115
    %p124 = scmp.eq.s32.totalorder %s16, 1
    %p125 = por %p123, %p124
    %p126 = scmp.ne.s32.totalorder %s115, %s116
    %p127 = scmp.eq.s32.totalorder %s16, 0
    %p128 = por %p126, %p127
    %p129 = scmp.ne.s32.totalorder %s115, %s116
    %p130 = scmp.eq.s32.totalorder %s17, 1
    %p131 = por %p129, %p130
    %p133 = scmp.ne.s32.totalorder %s116, %s132
    %p134 = scmp.eq.s32.totalorder %s17, 0
    %p135 = por %p133, %p134
    %s136 = ssub.s32 %s18, %s30
    %s137 = ssub.s32 %s19, %s26
    %s138 = sor.u32 %s136, %s137
    %p139 = scmp.eq.s32.totalorder %s138, 0
    %s141 = sadd.s32 %s140, 1
    %s142 = scalar_select %p139, %s140, %s141
    %p145 = pneg %p139
    %p146 = scmp.eq.s32.totalorder %s11, 1
    %p147 = por %p145, %p146
    %p148 = scmp.ne.s32.totalorder %s140, %s143
    %p149 = scmp.eq.s32.totalorder %s11, 0
    %p150 = por %p148, %p149
    %p151 = scmp.ne.s32.totalorder %s140, %s143
    %p152 = scmp.eq.s32.totalorder %s16, 1
    %p153 = por %p151, %p152
    %p154 = scmp.ne.s32.totalorder %s143, %s144
    %p155 = scmp.eq.s32.totalorder %s16, 0
    %p156 = por %p154, %p155
    %p157 = scmp.ne.s32.totalorder %s143, %s144
    %p158 = scmp.eq.s32.totalorder %s17, 1
    %p159 = por %p157, %p158
    %p161 = scmp.ne.s32.totalorder %s144, %s160
    %p162 = scmp.eq.s32.totalorder %s17, 0
    %p163 = por %p161, %p162
    %p164 = scmp.le.s32.totalorder 1, %s11
    %p165 = scmp.lt.s32.totalorder %s11, 3
    %p166 = pnand %p164, %p165
    %p167 = pneg %p166
    // Predicated region
    $region9: #{aspp_module_forward.2} parent=5 // pred_check
      _
    $region10: #{aspp_module_forward.2} parent=5 // pred_check_branch
      %169 = sbr.rel (%p166) target = $region12
    $region11: #{aspp_module_forward.2} parent=5 // pred_region
      %s170 = ssub.s32 %s11, 1
      // Predicated region
      $region13: #{aspp_module_forward.2} parent=11 // pred_check
        %p171 = pneg %p100
      $region14: #{aspp_module_forward.2} parent=11 // pred_check_branch
        %173 = sbr.rel (%p171) target = $region16
      $region15: #{aspp_module_forward.2} parent=11 // pred_region
        _
      $region16: #{aspp_module_forward.2} parent=11 // pred_fallthru
        _
    $region12: #{aspp_module_forward.2} parent=5 // pred_fallthru
      _
    %p174 = scmp.lt.s32.totalorder %s11, 2
    // Predicated region
    $region17: #{aspp_module_forward.2} parent=5 // pred_check
      %p175 = pneg %p174
    $region18: #{aspp_module_forward.2} parent=5 // pred_check_branch
      %177 = sbr.rel (%p175) target = $region20
    $region19: #{aspp_module_forward.2} parent=5 // pred_region
      // Predicated region
      $region21: #{aspp_module_forward.2} parent=19 // pred_check
        %p178 = pneg %p45
      $region22: #{aspp_module_forward.2} parent=19 // pred_check_branch
        %180 = sbr.rel (%p178) target = $region24
      $region23: #{aspp_module_forward.2} parent=19 // pred_region
        %s181 = smul.u32 16, %s19
        %s182 = ssub.s32 20, %s181
        %p183 = scmp.lt.s32.totalorder %s182, 16
        %s184 = scalar_select %p183, %s182, 16
        %s185 = smul.u32 64, %s184
        %s186 = smul.u32 %s185, 3
        %p187 = scmp.lt.s32.totalorder %s18, 1
        %s188 = scalar_select %p187, %s18, 1
        %p189 = scmp.lt.s32.totalorder %s181, 19
        %s190 = scalar_select %p189, %s181, 19
        %s191 = smul.addr %s190, 3
        %s192 = smul.addr %s188, 60
        %s193 = sadd.s32 %s191, %s192
        %s194 = smul.addr %s193, 4
        %s195 = scalar_lea.vmem %s0, %s194
        %s196 = smul.u32 16, %s19
        %s197 = ssub.s32 20, %s196
        %p198 = scmp.lt.s32.totalorder %s197, 16
        %s199 = scalar_select %p198, %s197, 16
        %s200 = smul.u32 64, %s199
        %s201 = smul.u32 %s200, 3
      $region24: #{aspp_module_forward.2} parent=19 // pred_fallthru
        _
      // Predicated region
      $region25: #{aspp_module_forward.2} parent=19 // pred_check
        %p202 = pneg %p73
      $region26: #{aspp_module_forward.2} parent=19 // pred_check_branch
        %204 = sbr.rel (%p202) target = $region28
      $region27: #{aspp_module_forward.2} parent=19 // pred_region
        %p205 = scmp.lt.s32.totalorder %s18, 1
        %s206 = scalar_select %p205, %s18, 1
        %p207 = scmp.lt.s32.totalorder %s19, 0
        %s208 = scalar_select %p207, %s19, 0
        %s209 = smul.addr %s208, 12
        %s210 = smul.addr %s206, 12
        %s211 = sadd.s32 %s209, %s210
        %s212 = smul.addr %s211, 4
        %s213 = scalar_lea.vmem %s1, %s212
      $region28: #{aspp_module_forward.2} parent=19 // pred_fallthru
        _
    $region20: #{aspp_module_forward.2} parent=5 // pred_fallthru
      _
    %p214 = scmp.le.s32.totalorder 1, %s11
    %p215 = scmp.lt.s32.totalorder %s11, 3
    %p216 = pnand %p214, %p215
    %p217 = pneg %p216
    // Predicated region
    $region29: #{aspp_module_forward.2} parent=5 // pred_check
      _
    $region30: #{aspp_module_forward.2} parent=5 // pred_check_branch
      %219 = sbr.rel (%p216) target = $region32
    $region31: #{aspp_module_forward.2} parent=5 // pred_region
      %s220 = ssub.s32 %s11, 1
      %s221 = smul.u32 16, %s21
      %s222 = ssub.s32 20, %s221
      %p223 = scmp.lt.s32.totalorder %s222, 16
      %s224 = scalar_select %p223, %s222, 16
      %s225 = smul.u32 64, %s224
      %s226 = smul.u32 %s225, 3
      %p227 = scmp.lt.s32.totalorder %s20, 1
      %s228 = scalar_select %p227, %s20, 1
      %p229 = scmp.lt.s32.totalorder %s221, 19
      %s230 = scalar_select %p229, %s221, 19
      %s231 = smul.addr %s230, 3
      %s232 = smul.addr %s228, 60
      %s233 = sadd.s32 %s231, %s232
      %s234 = smul.addr %s233, 4
      %s235 = scalar_lea.vmem %s0, %s234
      %p236 = pneg %p51
      %p237 = pneg %p48
      %p238 = scmp.lt.s32.totalorder %s20, 1
      %s239 = scalar_select %p238, %s20, 1
      %p240 = scmp.lt.s32.totalorder %s21, 0
      %s241 = scalar_select %p240, %s21, 0
      %s242 = smul.addr %s241, 12
      %s243 = smul.addr %s239, 12
      %s244 = sadd.s32 %s242, %s243
      %s245 = smul.addr %s244, 4
      %s246 = scalar_lea.vmem %s1, %s245
      %p247 = pneg %p79
      %p248 = pneg %p76
      %p249 = pneg %p100
      %p250 = pneg %p97
      %p251 = pneg %p128
      %p252 = pneg %p125
      %s253 = smul.u32 32, %s21
      %p254 = scmp.lt.s32.totalorder %s20, 1
      %s255 = scalar_select %p254, %s20, 1
      %p256 = scmp.lt.s32.totalorder %s253, 31
      %s257 = scalar_select %p256, %s253, 31
      %s258 = smul.addr %s255, 32
      %s259 = sadd.s32 %s257, %s258
      %s260 = smul.addr %s259, 4
      %s261 = scalar_lea.vmem %s3, %s260
      %p262 = pneg %p156
      %p263 = pneg %p153
      %p264 = scmp.lt.s32.totalorder %s20, 1
      %s265 = scalar_select %p264, %s20, 1
      %p266 = scmp.lt.s32.totalorder %s21, 0
      %s267 = scalar_select %p266, %s21, 0
      %s268 = sadd.s32 %s267, %s265
      %s269 = smul.addr %s268, 2
      %s270 = scalar_lea.vmem %s4, %s269
      %s271 = smul.u32 16, %s21
      %s272 = ssub.s32 20, %s271
      %p273 = scmp.lt.s32.totalorder %s272, 16
      %s274 = scalar_select %p273, %s272, 16
      %s275 = smul.u32 64, %s274
      %s276 = smul.u32 %s275, 3
      %p277 = scmp.lt.s32.totalorder %s20, 1
      %s278 = scalar_select %p277, %s20, 1
      %p279 = scmp.lt.s32.totalorder %s271, 19
      %s280 = scalar_select %p279, %s271, 19
      %s281 = smul.addr %s280, 3
      %s282 = smul.addr %s278, 60
      %s283 = sadd.s32 %s281, %s282
      %s284 = smul.addr %s283, 4
      %s285 = scalar_lea.vmem %s0, %s284
      %s286 = smul.u32 16, %s21
      %s287 = ssub.s32 20, %s286
      %p288 = scmp.lt.s32.totalorder %s287, 16
      %s289 = scalar_select %p288, %s287, 16
      %s290 = smul.u32 64, %s289
      %s291 = smul.u32 %s290, 3
      %p292 = scmp.lt.s32.totalorder %s20, 1
      %s293 = scalar_select %p292, %s20, 1
      %p294 = scmp.lt.s32.totalorder %s21, 0
      %s295 = scalar_select %p294, %s21, 0
      %s296 = smul.addr %s295, 12
      %s297 = smul.addr %s293, 12
      %s298 = sadd.s32 %s296, %s297
      %s299 = smul.addr %s298, 4
      %s300 = scalar_lea.vmem %s1, %s299
      %s301 = smul.u32 32, %s21
      %p302 = scmp.lt.s32.totalorder %s20, 1
      %s303 = scalar_select %p302, %s20, 1
      %p304 = scmp.lt.s32.totalorder %s301, 31
      %s305 = scalar_select %p304, %s301, 31
      %s306 = smul.addr %s303, 32
      %s307 = sadd.s32 %s305, %s306
      %s308 = smul.addr %s307, 4
      %s309 = scalar_lea.vmem %s3, %s308
      %s310 = smul.u32 32, %s21
      %p311 = scmp.lt.s32.totalorder %s20, 1
      %s312 = scalar_select %p311, %s20, 1
      %p313 = scmp.lt.s32.totalorder %s21, 0
      %s314 = scalar_select %p313, %s21, 0
      %s315 = sadd.s32 %s314, %s312
      %s316 = smul.addr %s315, 2
      %s317 = scalar_lea.vmem %s4, %s316
      %v319 = vld [vmem:[%s285] sm:$0xf]
      %v320 = vld [vmem:[%s285 + $0x4] sm:$0xf]
      %v321 = vld [vmem:[%s285 + $0x8] sm:$0x3]
      %v322 = vld [vmem:[%s285 + $0xc] sm:$0xf]
      %v323 = vld [vmem:[%s285 + $0x10] sm:$0xf]
      %v324 = vld [vmem:[%s285 + $0x14] sm:$0x3]
      %v325 = vld [vmem:[%s285 + $0x18] sm:$0xf]
      %v326 = vld [vmem:[%s285 + $0x1c] sm:$0xf]
      %v327 = vld [vmem:[%s285 + $0x20] sm:$0x3]
      %v328 = vld [vmem:[%s285 + $0x24] sm:$0xf]
      %v329 = vld [vmem:[%s285 + $0x28] sm:$0xf]
      %v330 = vld [vmem:[%s285 + $0x2c] sm:$0x3]
      %v331 = vld [vmem:[%s285 + $0x30] sm:$0xf]
      %v332 = vld [vmem:[%s285 + $0x34] sm:$0xf]
      %v333 = vld [vmem:[%s285 + $0x38] sm:$0x3]
      %v334 = vld [vmem:[%s285 + $0x3c] sm:$0xf]
      %v335 = vld [vmem:[%s285 + $0x40] sm:$0xf]
      %v336 = vld [vmem:[%s285 + $0x44] sm:$0x3]
      %v337 = vld [vmem:[%s285 + $0x48] sm:$0xf]
      %v338 = vld [vmem:[%s285 + $0x4c] sm:$0xf]
      %v339 = vld [vmem:[%s285 + $0x50] sm:$0x3]
      %v340 = vld [vmem:[%s285 + $0x54] sm:$0xf]
      %v341 = vld [vmem:[%s285 + $0x58] sm:$0xf]
      %v342 = vld [vmem:[%s285 + $0x5c] sm:$0x3]
      %v343 = vld [vmem:[%s285 + $0x60] sm:$0xf]
      %v344 = vld [vmem:[%s285 + $0x64] sm:$0xf]
      %v345 = vld [vmem:[%s285 + $0x68] sm:$0x3]
      %v346 = vld [vmem:[%s285 + $0x6c] sm:$0xf]
      %v347 = vld [vmem:[%s285 + $0x70] sm:$0xf]
      %v348 = vld [vmem:[%s285 + $0x74] sm:$0x3]
      %v349 = vld [vmem:[%s285 + $0x78] sm:$0xf]
      %v350 = vld [vmem:[%s285 + $0x7c] sm:$0xf]
      %v351 = vld [vmem:[%s285 + $0x80] sm:$0x3]
      %v352 = vld [vmem:[%s285 + $0x84] sm:$0xf]
      %v353 = vld [vmem:[%s285 + $0x88] sm:$0xf]
      %v354 = vld [vmem:[%s285 + $0x8c] sm:$0x3]
      %v355 = vld [vmem:[%s285 + $0x90] sm:$0xf]
      %v356 = vld [vmem:[%s285 + $0x94] sm:$0xf]
      %v357 = vld [vmem:[%s285 + $0x98] sm:$0x3]
      %v358 = vld [vmem:[%s285 + $0x9c] sm:$0xf]
      %v359 = vld [vmem:[%s285 + $0xa0] sm:$0xf]
      %v360 = vld [vmem:[%s285 + $0xa4] sm:$0x3]
      %v361 = vld [vmem:[%s285 + $0xa8] sm:$0xf]
      %v362 = vld [vmem:[%s285 + $0xac] sm:$0xf]
      %v363 = vld [vmem:[%s285 + $0xb0] sm:$0x3]
      %v364 = vld [vmem:[%s285 + $0xb4] sm:$0xf]
      %v365 = vld [vmem:[%s285 + $0xb8] sm:$0xf]
      %v366 = vld [vmem:[%s285 + $0xbc] sm:$0x3]
      %v367 = vld [vmem:[%s300] sm:$0xf]
      %v368 = vld [vmem:[%s300 + $0x4] sm:$0xf]
      %v369 = vld [vmem:[%s300 + $0x8] sm:$0x3]
      %v370 = vld [vmem:[%s300 + $0xc] sm:$0xf]
      %v371 = vld [vmem:[%s300 + $0x10] sm:$0xf]
      %v372 = vld [vmem:[%s300 + $0x14] sm:$0x3]
      %v373 = vld [vmem:[%s300 + $0x18] sm:$0xf]
      %v374 = vld [vmem:[%s300 + $0x1c] sm:$0xf]
      %v375 = vld [vmem:[%s300 + $0x20] sm:$0x3]
      %v376 = vld [vmem:[%s300 + $0x24] sm:$0xf]
      %v377 = vld [vmem:[%s300 + $0x28] sm:$0xf]
      %v378 = vld [vmem:[%s300 + $0x2c] sm:$0x3]
      %v379 = vld [vmem:[%s2] sm:$0xf]
      %v380 = vld [vmem:[%s2 + $0x4] sm:$0xf]
      %v381 = vld [vmem:[%s2 + $0x8] sm:$0xf]
      %v382 = vld [vmem:[%s2 + $0xc] sm:$0xf]
      %v383 = vld [vmem:[%s2 + $0x10] sm:$0xf]
      %v384 = vld [vmem:[%s2 + $0x14] sm:$0xf]
      %v385 = vld [vmem:[%s2 + $0x18] sm:$0xf]
      %v386 = vld [vmem:[%s2 + $0x1c] sm:$0xf]
      %v387 = vld [vmem:[%s2 + $0x20] sm:$0xf]
      %v388 = vld [vmem:[%s2 + $0x24] sm:$0xf]
      %v389 = vld [vmem:[%s2 + $0x28] sm:$0xf]
      %v390 = vld [vmem:[%s2 + $0x2c] sm:$0xf]
      %v391 = vld [vmem:[%s2 + $0x30] sm:$0xf]
      %v392 = vld [vmem:[%s2 + $0x34] sm:$0xf]
      %v393 = vld [vmem:[%s2 + $0x38] sm:$0xf]
      %v394 = vld [vmem:[%s2 + $0x3c] sm:$0xf]
      %s395 = scalar_lea.vmem %s2, 192
      %v396 = vld [vmem:[%s395] sm:$0xf]
      %v397 = vld [vmem:[%s395 + $0x4] sm:$0xf]
      %v398 = vld [vmem:[%s395 + $0x8] sm:$0xf]
      %v399 = vld [vmem:[%s395 + $0xc] sm:$0xf]
      %v400 = vld [vmem:[%s395 + $0x10] sm:$0xf]
      %v401 = vld [vmem:[%s395 + $0x14] sm:$0xf]
      %v402 = vld [vmem:[%s395 + $0x18] sm:$0xf]
      %v403 = vld [vmem:[%s395 + $0x1c] sm:$0xf]
      %v404 = vld [vmem:[%s395 + $0x20] sm:$0xf]
      %v405 = vld [vmem:[%s395 + $0x24] sm:$0xf]
      %v406 = vld [vmem:[%s395 + $0x28] sm:$0xf]
      %v407 = vld [vmem:[%s395 + $0x2c] sm:$0xf]
      %v408 = vld [vmem:[%s395 + $0x30] sm:$0xf]
      %v409 = vld [vmem:[%s395 + $0x34] sm:$0xf]
      %v410 = vld [vmem:[%s395 + $0x38] sm:$0xf]
      %v411 = vld [vmem:[%s395 + $0x3c] sm:$0xf]
      %v444 = vunpack.c.l.b16 %v325
      %v445 = vunpack.c.l.b16 %v326
      %v446 = vunpack.c.l.b16 %v328
      %v447 = vunpack.c.l.b16 %v329
      %v448 = vunpack.c.l.b16 %v331
      %v449 = vunpack.c.l.b16 %v332
      %v450 = vunpack.c.l.b16 %v334
      %v451 = vunpack.c.l.b16 %v335
      %v452 = vunpack.c.l.b16 %v337
      %v453 = vunpack.c.l.b16 %v338
      %v454 = vunpack.c.l.b16 %v340
      %v455 = vunpack.c.l.b16 %v341
      %v456 = vunpack.c.l.b16 %v343
      %v457 = vunpack.c.l.b16 %v344
      %v458 = vunpack.c.l.b16 %v346
      %v459 = vunpack.c.l.b16 %v347
      %v460 = vunpack.c.l.b16 %v349
      %v461 = vunpack.c.l.b16 %v350
      %v462 = vunpack.c.l.b16 %v352
      %v463 = vunpack.c.l.b16 %v353
      %v464 = vunpack.c.l.b16 %v355
      %v465 = vunpack.c.l.b16 %v356
      %v466 = vunpack.c.l.b16 %v358
      %v467 = vunpack.c.l.b16 %v359
      %v468 = vunpack.c.l.b16 %v361
      %v469 = vunpack.c.l.b16 %v362
      %v470 = vunpack.c.l.b16 %v364
      %v471 = vunpack.c.l.b16 %v365
      %v472 = vunpack.c.l.b16 %v367
      %v473 = vunpack.c.l.b16 %v368
      %v474 = vunpack.c.l.b16 %v370
      %v475 = vunpack.c.l.b16 %v371
      %v476 = vpack.c.b16 %v445, %v444
      %v477 = vpack.c.b16 %v447, %v446
      %v478 = vpack.c.b16 %v449, %v448
      %v479 = vpack.c.b16 %v451, %v450
      %v480 = vpack.c.b16 %v453, %v452
      %v481 = vpack.c.b16 %v455, %v454
      %v482 = vpack.c.b16 %v457, %v456
      %v483 = vpack.c.b16 %v459, %v458
      %v484 = vpack.c.b16 %v461, %v460
      %v485 = vpack.c.b16 %v463, %v462
      %v486 = vpack.c.b16 %v465, %v464
      %v487 = vpack.c.b16 %v467, %v466
      %v488 = vpack.c.b16 %v469, %v468
      %v489 = vpack.c.b16 %v471, %v470
      %v490 = vpack.c.b16 %v473, %v472
      %v491 = vpack.c.b16 %v475, %v474
      %v524 = vunpack.c.l.b16 %v396
      %v525 = vunpack.c.l.b16 %v397
      %v526 = vunpack.c.l.b16 %v398
      %v527 = vunpack.c.l.b16 %v399
      %v528 = vunpack.c.l.b16 %v400
      %v529 = vunpack.c.l.b16 %v401
      %v530 = vunpack.c.l.b16 %v402
      %v531 = vunpack.c.l.b16 %v403
      %v532 = vunpack.c.l.b16 %v404
      %v533 = vunpack.c.l.b16 %v405
      %v534 = vunpack.c.l.b16 %v406
      %v535 = vunpack.c.l.b16 %v407
      %v536 = vunpack.c.l.b16 %v408
      %v537 = vunpack.c.l.b16 %v409
      %v538 = vunpack.c.l.b16 %v410
      %v539 = vunpack.c.l.b16 %v411
      %v540 = vpack.c.b16 %v525, %v524
      %v541 = vpack.c.b16 %v527, %v526
      %v542 = vpack.c.b16 %v529, %v528
      %v543 = vpack.c.b16 %v531, %v530
      %v544 = vpack.c.b16 %v533, %v532
      %v545 = vpack.c.b16 %v535, %v534
      %v546 = vpack.c.b16 %v537, %v536
      %v547 = vpack.c.b16 %v539, %v538
      %556 = vmatprep.subr.bf16.mxu0 0
      %557 = vmatpush1.bf16.msra.mxu0 %v547
      %558 = vmatprep.subr.bf16.mxu0 0
      %559 = vmatpush1.bf16.msra.mxu0 %v546
      %560 = vmatprep.subr.bf16.mxu0 0
      %561 = vmatpush1.bf16.msra.mxu0 %v545
      %562 = vmatprep.subr.bf16.mxu0 0
      %563 = vmatpush1.bf16.msra.mxu0 %v544
      %564 = vmatprep.subr.bf16.mxu0 0
      %565 = vmatpush1.bf16.msra.mxu0 %v543
      %566 = vmatprep.subr.bf16.mxu0 0
      %567 = vmatpush1.bf16.msra.mxu0 %v542
      %568 = vmatprep.subr.bf16.mxu0 0
      %569 = vmatpush1.bf16.msra.mxu0 %v541
      %570 = vmatprep.subr.bf16.mxu0 0
      %571 = vmatpush1.bf16.msra.mxu0 %v540
      %572 = vmatprep.subr.bf16.mxu0 0
      %573 = vmatpush2.bf16.msra.mxu0 0
      %574 = vmatprep.subr.bf16.mxu0 0
      %575 = vmatpush2.bf16.msra.mxu0 0
      %576 = vmatprep.subr.bf16.mxu0 0
      %577 = vmatpush2.bf16.msra.mxu0 0
      %578 = vmatprep.subr.bf16.mxu0 0
      %579 = vmatpush2.bf16.msra.mxu0 0
      %580 = vmatprep.subr.bf16.mxu0 0
      %581 = vmatpush2.bf16.msra.mxu0 0
      %582 = vmatprep.subr.bf16.mxu0 0
      %583 = vmatpush2.bf16.msra.mxu0 0
      %584 = vmatprep.subr.bf16.mxu0 0
      %585 = vmatpush2.bf16.msra.mxu0 0
      %586 = vmatprep.subr.bf16.mxu0 0
      %587 = vmatpush2.bf16.msra.mxu0 0
      %588 = vmatprep.mubr.bf16.mxu0 0
      %589 = vmatmul.mubr.bf16.gmra.mxu0 %v476
      %v590 = vpop.f32.mrf.mxu0
      %v591 = vadd.f32 0.0, %v590
      %v592 = vpop.f32.mrf.mxu0
      %v593 = vpop.f32.mrf.mxu0
      %v594 = vadd.f32 0.0, %v593
      %v595 = vpop.f32.mrf.mxu0
      %596 = vmatprep.mubr.bf16.mxu0 0
      %597 = vmatmul.mubr.bf16.gmra.mxu0 %v477
      %v598 = vpop.f32.mrf.mxu0
      %v599 = vadd.f32 0.0, %v598
      %v600 = vpop.f32.mrf.mxu0
      %v601 = vpop.f32.mrf.mxu0
      %v602 = vadd.f32 0.0, %v601
      %v603 = vpop.f32.mrf.mxu0
      %604 = vmatprep.mubr.bf16.mxu0 0
      %605 = vmatmul.mubr.bf16.gmra.mxu0 %v478
      %v606 = vpop.f32.mrf.mxu0
      %v607 = vadd.f32 0.0, %v606
      %v608 = vpop.f32.mrf.mxu0
      %v609 = vpop.f32.mrf.mxu0
      %v610 = vadd.f32 0.0, %v609
      %v611 = vpop.f32.mrf.mxu0
      %612 = vmatprep.mubr.bf16.mxu0 0
      %613 = vmatmul.mubr.bf16.gmra.mxu0 %v479
      %v614 = vpop.f32.mrf.mxu0
      %v615 = vadd.f32 0.0, %v614
      %v616 = vpop.f32.mrf.mxu0
      %v617 = vpop.f32.mrf.mxu0
      %v618 = vadd.f32 0.0, %v617
      %v619 = vpop.f32.mrf.mxu0
      %620 = vmatprep.mubr.bf16.mxu0 0
      %621 = vmatmul.mubr.bf16.gmra.mxu0 %v480
      %v622 = vpop.f32.mrf.mxu0
      %v623 = vadd.f32 0.0, %v622
      %v624 = vpop.f32.mrf.mxu0
      %v625 = vpop.f32.mrf.mxu0
      %v626 = vadd.f32 0.0, %v625
      %v627 = vpop.f32.mrf.mxu0
      %628 = vmatprep.mubr.bf16.mxu0 0
      %629 = vmatmul.mubr.bf16.gmra.mxu0 %v481
      %v630 = vpop.f32.mrf.mxu0
      %v631 = vadd.f32 0.0, %v630
      %v632 = vpop.f32.mrf.mxu0
      %v633 = vpop.f32.mrf.mxu0
      %v634 = vadd.f32 0.0, %v633
      %v635 = vpop.f32.mrf.mxu0
      %636 = vmatprep.mubr.bf16.mxu0 0
      %637 = vmatmul.mubr.bf16.gmra.mxu0 %v482
      %v638 = vpop.f32.mrf.mxu0
      %v639 = vadd.f32 0.0, %v638
      %v640 = vpop.f32.mrf.mxu0
      %v641 = vpop.f32.mrf.mxu0
      %v642 = vadd.f32 0.0, %v641
      %v643 = vpop.f32.mrf.mxu0
      %644 = vmatprep.mubr.bf16.mxu0 0
      %645 = vmatmul.mubr.bf16.gmra.mxu0 %v483
      %v646 = vpop.f32.mrf.mxu0
      %v647 = vadd.f32 0.0, %v646
      %v648 = vpop.f32.mrf.mxu0
      %v649 = vpop.f32.mrf.mxu0
      %v650 = vadd.f32 0.0, %v649
      %v651 = vpop.f32.mrf.mxu0
      %652 = vmatprep.mubr.bf16.mxu0 0
      %653 = vmatmul.mubr.bf16.gmra.mxu0 %v484
      %v654 = vpop.f32.mrf.mxu0
      %v655 = vadd.f32 0.0, %v654
      %v656 = vpop.f32.mrf.mxu0
      %v657 = vpop.f32.mrf.mxu0
      %v658 = vadd.f32 0.0, %v657
      %v659 = vpop.f32.mrf.mxu0
      %660 = vmatprep.mubr.bf16.mxu0 0
      %661 = vmatmul.mubr.bf16.gmra.mxu0 %v485
      %v662 = vpop.f32.mrf.mxu0
      %v663 = vadd.f32 0.0, %v662
      %v664 = vpop.f32.mrf.mxu0
      %v665 = vpop.f32.mrf.mxu0
      %v666 = vadd.f32 0.0, %v665
      %v667 = vpop.f32.mrf.mxu0
      %668 = vmatprep.mubr.bf16.mxu0 0
      %669 = vmatmul.mubr.bf16.gmra.mxu0 %v486
      %v670 = vpop.f32.mrf.mxu0
      %v671 = vadd.f32 0.0, %v670
      %v672 = vpop.f32.mrf.mxu0
      %v673 = vpop.f32.mrf.mxu0
      %v674 = vadd.f32 0.0, %v673
      %v675 = vpop.f32.mrf.mxu0
      %676 = vmatprep.mubr.bf16.mxu0 0
      %677 = vmatmul.mubr.bf16.gmra.mxu0 %v487
      %v678 = vpop.f32.mrf.mxu0
      %v679 = vadd.f32 0.0, %v678
      %v680 = vpop.f32.mrf.mxu0
      %v681 = vpop.f32.mrf.mxu0
      %v682 = vadd.f32 0.0, %v681
      %v683 = vpop.f32.mrf.mxu0
      %684 = vmatprep.mubr.bf16.mxu0 0
      %685 = vmatmul.mubr.bf16.gmra.mxu0 %v488
      %v686 = vpop.f32.mrf.mxu0
      %v687 = vadd.f32 0.0, %v686
      %v688 = vpop.f32.mrf.mxu0
      %v689 = vpop.f32.mrf.mxu0
      %v690 = vadd.f32 0.0, %v689
      %v691 = vpop.f32.mrf.mxu0
      %692 = vmatprep.mubr.bf16.mxu0 0
      %693 = vmatmul.mubr.bf16.gmra.mxu0 %v489
      %v694 = vpop.f32.mrf.mxu0
      %v695 = vadd.f32 0.0, %v694
      %v696 = vpop.f32.mrf.mxu0
      %v697 = vpop.f32.mrf.mxu0
      %v698 = vadd.f32 0.0, %v697
      %v699 = vpop.f32.mrf.mxu0
      %700 = vmatprep.mubr.bf16.mxu0 0
      %701 = vmatmul.mubr.bf16.gmra.mxu0 %v490
      %v702 = vpop.f32.mrf.mxu0
      %v703 = vadd.f32 0.0, %v702
      %v704 = vpop.f32.mrf.mxu0
      %v705 = vpop.f32.mrf.mxu0
      %v706 = vadd.f32 0.0, %v705
      %v707 = vpop.f32.mrf.mxu0
      %708 = vmatprep.mubr.bf16.mxu0 0
      %709 = vmatmul.mubr.bf16.gmra.mxu0 %v491
      %v710 = vpop.f32.mrf.mxu0
      %v711 = vadd.f32 0.0, %v710
      %v712 = vpop.f32.mrf.mxu0
      %v713 = vpop.f32.mrf.mxu0
      %v714 = vadd.f32 0.0, %v713
      %v715 = vpop.f32.mrf.mxu0
      %716 = vdwg.mxu0
      %v721 = vunpack.c.l.b16 %v319
      %v722 = vunpack.c.l.b16 %v320
      %v723 = vunpack.c.l.b16 %v322
      %v724 = vunpack.c.l.b16 %v323
      %v725 = vpack.c.b16 %v722, %v721
      %v726 = vpack.c.b16 %v724, %v723
      %v745 = vunpack.c.l.b16 %v379
      %v746 = vunpack.c.l.b16 %v380
      %v747 = vunpack.c.l.b16 %v381
      %v748 = vunpack.c.l.b16 %v382
      %v749 = vunpack.c.l.b16 %v383
      %v750 = vunpack.c.l.b16 %v384
      %v751 = vunpack.c.l.b16 %v385
      %v752 = vunpack.c.l.b16 %v386
      %v753 = vunpack.c.l.b16 %v387
      %v754 = vunpack.c.l.b16 %v388
      %v755 = vunpack.c.l.b16 %v389
      %v756 = vunpack.c.l.b16 %v390
      %v757 = vunpack.c.l.b16 %v391
      %v758 = vunpack.c.l.b16 %v392
      %v759 = vunpack.c.l.b16 %v393
      %v760 = vunpack.c.l.b16 %v394
      %v761 = vpack.c.b16 %v746, %v745
      %v762 = vpack.c.b16 %v748, %v747
      %v763 = vpack.c.b16 %v750, %v749
      %v764 = vpack.c.b16 %v752, %v751
      %v765 = vpack.c.b16 %v754, %v753
      %v766 = vpack.c.b16 %v756, %v755
      %v767 = vpack.c.b16 %v758, %v757
      %v768 = vpack.c.b16 %v760, %v759
      %777 = vmatprep.subr.bf16.mxu0 0
      %778 = vmatpush1.bf16.msra.mxu0 %v768
      %779 = vmatprep.subr.bf16.mxu0 0
      %780 = vmatpush1.bf16.msra.mxu0 %v767
      %781 = vmatprep.subr.bf16.mxu0 0
      %782 = vmatpush1.bf16.msra.mxu0 %v766
      %783 = vmatprep.subr.bf16.mxu0 0
      %784 = vmatpush1.bf16.msra.mxu0 %v765
      %785 = vmatprep.subr.bf16.mxu0 0
      %786 = vmatpush1.bf16.msra.mxu0 %v764
      %787 = vmatprep.subr.bf16.mxu0 0
      %788 = vmatpush1.bf16.msra.mxu0 %v763
      %789 = vmatprep.subr.bf16.mxu0 0
      %790 = vmatpush1.bf16.msra.mxu0 %v762
      %791 = vmatprep.subr.bf16.mxu0 0
      %792 = vmatpush1.bf16.msra.mxu0 %v761
      %793 = vmatprep.subr.bf16.mxu0 0
      %794 = vmatpush2.bf16.msra.mxu0 0
      %795 = vmatprep.subr.bf16.mxu0 0
      %796 = vmatpush2.bf16.msra.mxu0 0
      %797 = vmatprep.subr.bf16.mxu0 0
      %798 = vmatpush2.bf16.msra.mxu0 0
      %799 = vmatprep.subr.bf16.mxu0 0
      %800 = vmatpush2.bf16.msra.mxu0 0
      %801 = vmatprep.subr.bf16.mxu0 0
      %802 = vmatpush2.bf16.msra.mxu0 0
      %803 = vmatprep.subr.bf16.mxu0 0
      %804 = vmatpush2.bf16.msra.mxu0 0
      %805 = vmatprep.subr.bf16.mxu0 0
      %806 = vmatpush2.bf16.msra.mxu0 0
      %807 = vmatprep.subr.bf16.mxu0 0
      %808 = vmatpush2.bf16.msra.mxu0 0
      %809 = vmatprep.mubr.bf16.mxu0 0
      %810 = vmatmul.mubr.bf16.gmra.mxu0 %v725
      %v811 = vpop.f32.mrf.mxu0
      %v812 = vadd.f32 %v591, %v811
      %v813 = vpop.f32.mrf.mxu0
      %v814 = vpop.f32.mrf.mxu0
      %v815 = vadd.f32 %v594, %v814
      %v816 = vpop.f32.mrf.mxu0
      %817 = vmatprep.mubr.bf16.mxu0 0
      %818 = vmatmul.mubr.bf16.gmra.mxu0 %v726
      %v819 = vpop.f32.mrf.mxu0
      %v820 = vadd.f32 %v599, %v819
      %v821 = vpop.f32.mrf.mxu0
      %v822 = vpop.f32.mrf.mxu0
      %v823 = vadd.f32 %v602, %v822
      %v824 = vpop.f32.mrf.mxu0
      %825 = vmatprep.mubr.bf16.mxu0 0
      %826 = vmatmul.mubr.bf16.gmra.mxu0 %v476
      %v827 = vpop.f32.mrf.mxu0
      %v828 = vadd.f32 %v607, %v827
      %v829 = vpop.f32.mrf.mxu0
      %v830 = vpop.f32.mrf.mxu0
      %v831 = vadd.f32 %v610, %v830
      %v832 = vpop.f32.mrf.mxu0
      %833 = vmatprep.mubr.bf16.mxu0 0
      %834 = vmatmul.mubr.bf16.gmra.mxu0 %v477
      %v835 = vpop.f32.mrf.mxu0
      %v836 = vadd.f32 %v615, %v835
      %v837 = vpop.f32.mrf.mxu0
      %v838 = vpop.f32.mrf.mxu0
      %v839 = vadd.f32 %v618, %v838
      %v840 = vpop.f32.mrf.mxu0
      %841 = vmatprep.mubr.bf16.mxu0 0
      %842 = vmatmul.mubr.bf16.gmra.mxu0 %v478
      %v843 = vpop.f32.mrf.mxu0
      %v844 = vadd.f32 %v623, %v843
      %v845 = vpop.f32.mrf.mxu0
      %v846 = vpop.f32.mrf.mxu0
      %v847 = vadd.f32 %v626, %v846
      %v848 = vpop.f32.mrf.mxu0
      %849 = vmatprep.mubr.bf16.mxu0 0
      %850 = vmatmul.mubr.bf16.gmra.mxu0 %v479
      %v851 = vpop.f32.mrf.mxu0
      %v852 = vadd.f32 %v631, %v851
      %v853 = vpop.f32.mrf.mxu0
      %v854 = vpop.f32.mrf.mxu0
      %v855 = vadd.f32 %v634, %v854
      %v856 = vpop.f32.mrf.mxu0
      %857 = vmatprep.mubr.bf16.mxu0 0
      %858 = vmatmul.mubr.bf16.gmra.mxu0 %v480
      %v859 = vpop.f32.mrf.mxu0
      %v860 = vadd.f32 %v639, %v859
      %v861 = vpop.f32.mrf.mxu0
      %v862 = vpop.f32.mrf.mxu0
      %v863 = vadd.f32 %v642, %v862
      %v864 = vpop.f32.mrf.mxu0
      %865 = vmatprep.mubr.bf16.mxu0 0
      %866 = vmatmul.mubr.bf16.gmra.mxu0 %v481
      %v867 = vpop.f32.mrf.mxu0
      %v868 = vadd.f32 %v647, %v867
      %v869 = vpop.f32.mrf.mxu0
      %v870 = vpop.f32.mrf.mxu0
      %v871 = vadd.f32 %v650, %v870
      %v872 = vpop.f32.mrf.mxu0
      %873 = vmatprep.mubr.bf16.mxu0 0
      %874 = vmatmul.mubr.bf16.gmra.mxu0 %v482
      %v875 = vpop.f32.mrf.mxu0
      %v876 = vadd.f32 %v655, %v875
      %v877 = vpop.f32.mrf.mxu0
      %v878 = vpop.f32.mrf.mxu0
      %v879 = vadd.f32 %v658, %v878
      %v880 = vpop.f32.mrf.mxu0
      %881 = vmatprep.mubr.bf16.mxu0 0
      %882 = vmatmul.mubr.bf16.gmra.mxu0 %v483
      %v883 = vpop.f32.mrf.mxu0
      %v884 = vadd.f32 %v663, %v883
      %v885 = vpop.f32.mrf.mxu0
      %v886 = vpop.f32.mrf.mxu0
      %v887 = vadd.f32 %v666, %v886
      %v888 = vpop.f32.mrf.mxu0
      %889 = vmatprep.mubr.bf16.mxu0 0
      %890 = vmatmul.mubr.bf16.gmra.mxu0 %v484
      %v891 = vpop.f32.mrf.mxu0
      %v892 = vadd.f32 %v671, %v891
      %v893 = vpop.f32.mrf.mxu0
      %v894 = vpop.f32.mrf.mxu0
      %v895 = vadd.f32 %v674, %v894
      %v896 = vpop.f32.mrf.mxu0
      %897 = vmatprep.mubr.bf16.mxu0 0
      %898 = vmatmul.mubr.bf16.gmra.mxu0 %v485
      %v899 = vpop.f32.mrf.mxu0
      %v900 = vadd.f32 %v679, %v899
      %v901 = vpop.f32.mrf.mxu0
      %v902 = vpop.f32.mrf.mxu0
      %v903 = vadd.f32 %v682, %v902
      %v904 = vpop.f32.mrf.mxu0
      %905 = vmatprep.mubr.bf16.mxu0 0
      %906 = vmatmul.mubr.bf16.gmra.mxu0 %v486
      %v907 = vpop.f32.mrf.mxu0
      %v908 = vadd.f32 %v687, %v907
      %v909 = vpop.f32.mrf.mxu0
      %v910 = vpop.f32.mrf.mxu0
      %v911 = vadd.f32 %v690, %v910
      %v912 = vpop.f32.mrf.mxu0
      %913 = vmatprep.mubr.bf16.mxu0 0
      %914 = vmatmul.mubr.bf16.gmra.mxu0 %v487
      %v915 = vpop.f32.mrf.mxu0
      %v916 = vadd.f32 %v695, %v915
      %v917 = vpop.f32.mrf.mxu0
      %v918 = vpop.f32.mrf.mxu0
      %v919 = vadd.f32 %v698, %v918
      %v920 = vpop.f32.mrf.mxu0
      %921 = vmatprep.mubr.bf16.mxu0 0
      %922 = vmatmul.mubr.bf16.gmra.mxu0 %v488
      %v923 = vpop.f32.mrf.mxu0
      %v924 = vadd.f32 %v703, %v923
      %v925 = vpop.f32.mrf.mxu0
      %v926 = vpop.f32.mrf.mxu0
      %v927 = vadd.f32 %v706, %v926
      %v928 = vpop.f32.mrf.mxu0
      %929 = vmatprep.mubr.bf16.mxu0 0
      %930 = vmatmul.mubr.bf16.gmra.mxu0 %v489
      %v931 = vpop.f32.mrf.mxu0
      %v932 = vadd.f32 %v711, %v931
      %v933 = vpop.f32.mrf.mxu0
      %v934 = vpop.f32.mrf.mxu0
      %v935 = vadd.f32 %v714, %v934
      %v936 = vpop.f32.mrf.mxu0
      %937 = vdwg.mxu0
      %s938 = scalar_lea.vmem %s2, 384
      %v939 = vld [vmem:[%s938] sm:$0xf]
      %v940 = vld [vmem:[%s938 + $0x4] sm:$0xf]
      %v941 = vld [vmem:[%s938 + $0x8] sm:$0xf]
      %v942 = vld [vmem:[%s938 + $0xc] sm:$0xf]
      %v943 = vld [vmem:[%s938 + $0x10] sm:$0xf]
      %v944 = vld [vmem:[%s938 + $0x14] sm:$0xf]
      %v945 = vld [vmem:[%s938 + $0x18] sm:$0xf]
      %v946 = vld [vmem:[%s938 + $0x1c] sm:$0xf]
      %v947 = vld [vmem:[%s938 + $0x20] sm:$0xf]
      %v948 = vld [vmem:[%s938 + $0x24] sm:$0xf]
      %v949 = vld [vmem:[%s938 + $0x28] sm:$0xf]
      %v950 = vld [vmem:[%s938 + $0x2c] sm:$0xf]
      %v951 = vld [vmem:[%s938 + $0x30] sm:$0xf]
      %v952 = vld [vmem:[%s938 + $0x34] sm:$0xf]
      %v953 = vld [vmem:[%s938 + $0x38] sm:$0xf]
      %v954 = vld [vmem:[%s938 + $0x3c] sm:$0xf]
      %v959 = vunpack.c.l.b16 %v373
      %v960 = vunpack.c.l.b16 %v374
      %v961 = vunpack.c.l.b16 %v376
      %v962 = vunpack.c.l.b16 %v377
      %v963 = vpack.c.b16 %v960, %v959
      %v964 = vpack.c.b16 %v962, %v961
      %v983 = vunpack.c.l.b16 %v939
      %v984 = vunpack.c.l.b16 %v940
      %v985 = vunpack.c.l.b16 %v941
      %v986 = vunpack.c.l.b16 %v942
      %v987 = vunpack.c.l.b16 %v943
      %v988 = vunpack.c.l.b16 %v944
      %v989 = vunpack.c.l.b16 %v945
      %v990 = vunpack.c.l.b16 %v946
      %v991 = vunpack.c.l.b16 %v947
      %v992 = vunpack.c.l.b16 %v948
      %v993 = vunpack.c.l.b16 %v949
      %v994 = vunpack.c.l.b16 %v950
      %v995 = vunpack.c.l.b16 %v951
      %v996 = vunpack.c.l.b16 %v952
      %v997 = vunpack.c.l.b16 %v953
      %v998 = vunpack.c.l.b16 %v954
      %v999 = vpack.c.b16 %v984, %v983
      %v1000 = vpack.c.b16 %v986, %v985
      %v1001 = vpack.c.b16 %v988, %v987
      %v1002 = vpack.c.b16 %v990, %v989
      %v1003 = vpack.c.b16 %v992, %v991
      %v1004 = vpack.c.b16 %v994, %v993
      %v1005 = vpack.c.b16 %v996, %v995
      %v1006 = vpack.c.b16 %v998, %v997
      %1015 = vmatprep.subr.bf16.mxu0 0
      %1016 = vmatpush1.bf16.msra.mxu0 %v1006
      %1017 = vmatprep.subr.bf16.mxu0 0
      %1018 = vmatpush1.bf16.msra.mxu0 %v1005
      %1019 = vmatprep.subr.bf16.mxu0 0
      %1020 = vmatpush1.bf16.msra.mxu0 %v1004
      %1021 = vmatprep.subr.bf16.mxu0 0
      %1022 = vmatpush1.bf16.msra.mxu0 %v1003
      %1023 = vmatprep.subr.bf16.mxu0 0
      %1024 = vmatpush1.bf16.msra.mxu0 %v1002
      %1025 = vmatprep.subr.bf16.mxu0 0
      %1026 = vmatpush1.bf16.msra.mxu0 %v1001
      %1027 = vmatprep.subr.bf16.mxu0 0
      %1028 = vmatpush1.bf16.msra.mxu0 %v1000
      %1029 = vmatprep.subr.bf16.mxu0 0
      %1030 = vmatpush1.bf16.msra.mxu0 %v999
      %1031 = vmatprep.subr.bf16.mxu0 0
      %1032 = vmatpush2.bf16.msra.mxu0 0
      %1033 = vmatprep.subr.bf16.mxu0 0
      %1034 = vmatpush2.bf16.msra.mxu0 0
      %1035 = vmatprep.subr.bf16.mxu0 0
      %1036 = vmatpush2.bf16.msra.mxu0 0
      %1037 = vmatprep.subr.bf16.mxu0 0
      %1038 = vmatpush2.bf16.msra.mxu0 0
      %1039 = vmatprep.subr.bf16.mxu0 0
      %1040 = vmatpush2.bf16.msra.mxu0 0
      %1041 = vmatprep.subr.bf16.mxu0 0
      %1042 = vmatpush2.bf16.msra.mxu0 0
      %1043 = vmatprep.subr.bf16.mxu0 0
      %1044 = vmatpush2.bf16.msra.mxu0 0
      %1045 = vmatprep.subr.bf16.mxu0 0
      %1046 = vmatpush2.bf16.msra.mxu0 0
      %1047 = vmatprep.mubr.bf16.mxu0 0
      %1048 = vmatmul.mubr.bf16.gmra.mxu0 %v478
      %v1049 = vpop.f32.mrf.mxu0
      %v1050 = vadd.f32 0.0, %v1049
      %v1051 = vpop.f32.mrf.mxu0
      %v1052 = vpop.f32.mrf.mxu0
      %v1053 = vadd.f32 0.0, %v1052
      %v1054 = vpop.f32.mrf.mxu0
      %1055 = vmatprep.mubr.bf16.mxu0 0
      %1056 = vmatmul.mubr.bf16.gmra.mxu0 %v479
      %v1057 = vpop.f32.mrf.mxu0
      %v1058 = vadd.f32 0.0, %v1057
      %v1059 = vpop.f32.mrf.mxu0
      %v1060 = vpop.f32.mrf.mxu0
      %v1061 = vadd.f32 0.0, %v1060
      %v1062 = vpop.f32.mrf.mxu0
      %1063 = vmatprep.mubr.bf16.mxu0 0
      %1064 = vmatmul.mubr.bf16.gmra.mxu0 %v480
      %v1065 = vpop.f32.mrf.mxu0
      %v1066 = vadd.f32 0.0, %v1065
      %v1067 = vpop.f32.mrf.mxu0
      %v1068 = vpop.f32.mrf.mxu0
      %v1069 = vadd.f32 0.0, %v1068
      %v1070 = vpop.f32.mrf.mxu0
      %1071 = vmatprep.mubr.bf16.mxu0 0
      %1072 = vmatmul.mubr.bf16.gmra.mxu0 %v481
      %v1073 = vpop.f32.mrf.mxu0
      %v1074 = vadd.f32 0.0, %v1073
      %v1075 = vpop.f32.mrf.mxu0
      %v1076 = vpop.f32.mrf.mxu0
      %v1077 = vadd.f32 0.0, %v1076
      %v1078 = vpop.f32.mrf.mxu0
      %1079 = vmatprep.mubr.bf16.mxu0 0
      %1080 = vmatmul.mubr.bf16.gmra.mxu0 %v482
      %v1081 = vpop.f32.mrf.mxu0
      %v1082 = vadd.f32 0.0, %v1081
      %v1083 = vpop.f32.mrf.mxu0
      %v1084 = vpop.f32.mrf.mxu0
      %v1085 = vadd.f32 0.0, %v1084
      %v1086 = vpop.f32.mrf.mxu0
      %1087 = vmatprep.mubr.bf16.mxu0 0
      %1088 = vmatmul.mubr.bf16.gmra.mxu0 %v483
      %v1089 = vpop.f32.mrf.mxu0
      %v1090 = vadd.f32 0.0, %v1089
      %v1091 = vpop.f32.mrf.mxu0
      %v1092 = vpop.f32.mrf.mxu0
      %v1093 = vadd.f32 0.0, %v1092
      %v1094 = vpop.f32.mrf.mxu0
      %1095 = vmatprep.mubr.bf16.mxu0 0
      %1096 = vmatmul.mubr.bf16.gmra.mxu0 %v484
      %v1097 = vpop.f32.mrf.mxu0
      %v1098 = vadd.f32 0.0, %v1097
      %v1099 = vpop.f32.mrf.mxu0
      %v1100 = vpop.f32.mrf.mxu0
      %v1101 = vadd.f32 0.0, %v1100
      %v1102 = vpop.f32.mrf.mxu0
      %1103 = vmatprep.mubr.bf16.mxu0 0
      %1104 = vmatmul.mubr.bf16.gmra.mxu0 %v485
      %v1105 = vpop.f32.mrf.mxu0
      %v1106 = vadd.f32 0.0, %v1105
      %v1107 = vpop.f32.mrf.mxu0
      %v1108 = vpop.f32.mrf.mxu0
      %v1109 = vadd.f32 0.0, %v1108
      %v1110 = vpop.f32.mrf.mxu0
      %1111 = vmatprep.mubr.bf16.mxu0 0
      %1112 = vmatmul.mubr.bf16.gmra.mxu0 %v486
      %v1113 = vpop.f32.mrf.mxu0
      %v1114 = vadd.f32 0.0, %v1113
      %v1115 = vpop.f32.mrf.mxu0
      %v1116 = vpop.f32.mrf.mxu0
      %v1117 = vadd.f32 0.0, %v1116
      %v1118 = vpop.f32.mrf.mxu0
      %1119 = vmatprep.mubr.bf16.mxu0 0
      %1120 = vmatmul.mubr.bf16.gmra.mxu0 %v487
      %v1121 = vpop.f32.mrf.mxu0
      %v1122 = vadd.f32 0.0, %v1121
      %v1123 = vpop.f32.mrf.mxu0
      %v1124 = vpop.f32.mrf.mxu0
      %v1125 = vadd.f32 0.0, %v1124
      %v1126 = vpop.f32.mrf.mxu0
      %1127 = vmatprep.mubr.bf16.mxu0 0
      %1128 = vmatmul.mubr.bf16.gmra.mxu0 %v488
      %v1129 = vpop.f32.mrf.mxu0
      %v1130 = vadd.f32 0.0, %v1129
      %v1131 = vpop.f32.mrf.mxu0
      %v1132 = vpop.f32.mrf.mxu0
      %v1133 = vadd.f32 0.0, %v1132
      %v1134 = vpop.f32.mrf.mxu0
      %1135 = vmatprep.mubr.bf16.mxu0 0
      %1136 = vmatmul.mubr.bf16.gmra.mxu0 %v489
      %v1137 = vpop.f32.mrf.mxu0
      %v1138 = vadd.f32 0.0, %v1137
      %v1139 = vpop.f32.mrf.mxu0
      %v1140 = vpop.f32.mrf.mxu0
      %v1141 = vadd.f32 0.0, %v1140
      %v1142 = vpop.f32.mrf.mxu0
      %1143 = vmatprep.mubr.bf16.mxu0 0
      %1144 = vmatmul.mubr.bf16.gmra.mxu0 %v490
      %v1145 = vpop.f32.mrf.mxu0
      %v1146 = vadd.f32 0.0, %v1145
      %v1147 = vpop.f32.mrf.mxu0
      %v1148 = vpop.f32.mrf.mxu0
      %v1149 = vadd.f32 0.0, %v1148
      %v1150 = vpop.f32.mrf.mxu0
      %1151 = vmatprep.mubr.bf16.mxu0 0
      %1152 = vmatmul.mubr.bf16.gmra.mxu0 %v491
      %v1153 = vpop.f32.mrf.mxu0
      %v1154 = vadd.f32 0.0, %v1153
      %v1155 = vpop.f32.mrf.mxu0
      %v1156 = vpop.f32.mrf.mxu0
      %v1157 = vadd.f32 0.0, %v1156
      %v1158 = vpop.f32.mrf.mxu0
      %1159 = vmatprep.mubr.bf16.mxu0 0
      %1160 = vmatmul.mubr.bf16.gmra.mxu0 %v963
      %v1161 = vpop.f32.mrf.mxu0
      %v1162 = vadd.f32 0.0, %v1161
      %v1163 = vpop.f32.mrf.mxu0
      %v1164 = vpop.f32.mrf.mxu0
      %v1165 = vadd.f32 0.0, %v1164
      %v1166 = vpop.f32.mrf.mxu0
      %1167 = vmatprep.mubr.bf16.mxu0 0
      %1168 = vmatmul.mubr.bf16.gmra.mxu0 %v964
      %v1169 = vpop.f32.mrf.mxu0
      %v1170 = vadd.f32 0.0, %v1169
      %v1171 = vpop.f32.mrf.mxu0
      %v1172 = vpop.f32.mrf.mxu0
      %v1173 = vadd.f32 0.0, %v1172
      %v1174 = vpop.f32.mrf.mxu0
      %1175 = vdwg.mxu0
      %v1176 = vadd.f32 %v812, %v1050
      %v1177 = vadd.f32 %v815, %v1053
      %v1178 = vadd.f32 %v820, %v1058
      %v1179 = vadd.f32 %v823, %v1061
      %v1180 = vadd.f32 %v828, %v1066
      %v1181 = vadd.f32 %v831, %v1069
      %v1182 = vadd.f32 %v836, %v1074
      %v1183 = vadd.f32 %v839, %v1077
      %v1184 = vadd.f32 %v844, %v1082
      %v1185 = vadd.f32 %v847, %v1085
      %v1186 = vadd.f32 %v852, %v1090
      %v1187 = vadd.f32 %v855, %v1093
      %v1188 = vadd.f32 %v860, %v1098
      %v1189 = vadd.f32 %v863, %v1101
      %v1190 = vadd.f32 %v868, %v1106
      %v1191 = vadd.f32 %v871, %v1109
      %v1192 = vadd.f32 %v876, %v1114
      %v1193 = vadd.f32 %v879, %v1117
      %v1194 = vadd.f32 %v884, %v1122
      %v1195 = vadd.f32 %v887, %v1125
      %v1196 = vadd.f32 %v892, %v1130
      %v1197 = vadd.f32 %v895, %v1133
      %v1198 = vadd.f32 %v900, %v1138
      %v1199 = vadd.f32 %v903, %v1141
      %v1200 = vadd.f32 %v908, %v1146
      %v1201 = vadd.f32 %v911, %v1149
      %v1202 = vadd.f32 %v916, %v1154
      %v1203 = vadd.f32 %v919, %v1157
      %v1204 = vadd.f32 %v924, %v1162
      %v1205 = vadd.f32 %v927, %v1165
      %v1206 = vadd.f32 %v932, %v1170
      %v1207 = vadd.f32 %v935, %v1173
      %vm1224 = vcmask 1042432
      %vm1225 = vcmask 1046532
      %vm1226 = vmor %vm1224, %vm1225
      %v1227 = vrot.slane %v319, 5
      %v1228 = vrot.slane %v1227, 4
      %v1229 = vrot.slane %v320, 5
      %v1230 = vsel %vm1226, %v1228, %v1229
      %v1231 = vrot.slane %v1229, 4
      %v1232 = vrot.slane %v321, 5
      %v1233 = vsel %vm1226, %v1231, %v1232
      %v1234 = vrot.slane %v322, 5
      %v1235 = vrot.slane %v1234, 4
      %v1236 = vrot.slane %v323, 5
      %v1237 = vsel %vm1226, %v1235, %v1236
      %v1238 = vrot.slane %v1236, 4
      %v1239 = vrot.slane %v324, 5
      %v1240 = vsel %vm1226, %v1238, %v1239
      %v1241 = vrot.slane %v325, 5
      %v1242 = vrot.slane %v1241, 4
      %v1243 = vrot.slane %v326, 5
      %v1244 = vsel %vm1226, %v1242, %v1243
      %v1245 = vrot.slane %v1243, 4
      %v1246 = vrot.slane %v327, 5
      %v1247 = vsel %vm1226, %v1245, %v1246
      %v1248 = vrot.slane %v328, 5
      %v1249 = vrot.slane %v1248, 4
      %v1250 = vrot.slane %v329, 5
      %v1251 = vsel %vm1226, %v1249, %v1250
      %v1252 = vrot.slane %v1250, 4
      %v1253 = vrot.slane %v330, 5
      %v1254 = vsel %vm1226, %v1252, %v1253
      %v1255 = vrot.slane %v331, 5
      %v1256 = vrot.slane %v1255, 4
      %v1257 = vrot.slane %v332, 5
      %v1258 = vsel %vm1226, %v1256, %v1257
      %v1259 = vrot.slane %v1257, 4
      %v1260 = vrot.slane %v333, 5
      %v1261 = vsel %vm1226, %v1259, %v1260
      %v1262 = vrot.slane %v334, 5
      %v1263 = vrot.slane %v1262, 4
      %v1264 = vrot.slane %v335, 5
      %v1265 = vsel %vm1226, %v1263, %v1264
      %v1266 = vrot.slane %v1264, 4
      %v1267 = vrot.slane %v336, 5
      %v1268 = vsel %vm1226, %v1266, %v1267
      %v1269 = vrot.slane %v337, 5
      %v1270 = vrot.slane %v1269, 4
      %v1271 = vrot.slane %v338, 5
      %v1272 = vsel %vm1226, %v1270, %v1271
      %v1273 = vrot.slane %v1271, 4
      %v1274 = vrot.slane %v339, 5
      %v1275 = vsel %vm1226, %v1273, %v1274
      %v1276 = vrot.slane %v340, 5
      %v1277 = vrot.slane %v1276, 4
      %v1278 = vrot.slane %v341, 5
      %v1279 = vsel %vm1226, %v1277, %v1278
      %v1280 = vrot.slane %v1278, 4
      %v1281 = vrot.slane %v342, 5
      %v1282 = vsel %vm1226, %v1280, %v1281
      %v1283 = vrot.slane %v343, 5
      %v1284 = vrot.slane %v1283, 4
      %v1285 = vrot.slane %v344, 5
      %v1286 = vsel %vm1226, %v1284, %v1285
      %v1287 = vrot.slane %v1285, 4
      %v1288 = vrot.slane %v345, 5
      %v1289 = vsel %vm1226, %v1287, %v1288
      %v1290 = vrot.slane %v346, 5
      %v1291 = vrot.slane %v1290, 4
      %v1292 = vrot.slane %v347, 5
      %v1293 = vsel %vm1226, %v1291, %v1292
      %v1294 = vrot.slane %v1292, 4
      %v1295 = vrot.slane %v348, 5
      %v1296 = vsel %vm1226, %v1294, %v1295
      %v1297 = vrot.slane %v349, 5
      %v1298 = vrot.slane %v1297, 4
      %v1299 = vrot.slane %v350, 5
      %v1300 = vsel %vm1226, %v1298, %v1299
      %v1301 = vrot.slane %v1299, 4
      %v1302 = vrot.slane %v351, 5
      %v1303 = vsel %vm1226, %v1301, %v1302
      %v1304 = vrot.slane %v352, 5
      %v1305 = vrot.slane %v1304, 4
      %v1306 = vrot.slane %v353, 5
      %v1307 = vsel %vm1226, %v1305, %v1306
      %v1308 = vrot.slane %v1306, 4
      %v1309 = vrot.slane %v354, 5
      %v1310 = vsel %vm1226, %v1308, %v1309
      %v1311 = vrot.slane %v355, 5
      %v1312 = vrot.slane %v1311, 4
      %v1313 = vrot.slane %v356, 5
      %v1314 = vsel %vm1226, %v1312, %v1313
      %v1315 = vrot.slane %v1313, 4
      %v1316 = vrot.slane %v357, 5
      %v1317 = vsel %vm1226, %v1315, %v1316
      %v1318 = vrot.slane %v358, 5
      %v1319 = vrot.slane %v1318, 4
      %v1320 = vrot.slane %v359, 5
      %v1321 = vsel %vm1226, %v1319, %v1320
      %v1322 = vrot.slane %v1320, 4
      %v1323 = vrot.slane %v360, 5
      %v1324 = vsel %vm1226, %v1322, %v1323
      %v1325 = vrot.slane %v361, 5
      %v1326 = vrot.slane %v1325, 4
      %v1327 = vrot.slane %v362, 5
      %v1328 = vsel %vm1226, %v1326, %v1327
      %v1329 = vrot.slane %v1327, 4
      %v1330 = vrot.slane %v363, 5
      %v1331 = vsel %vm1226, %v1329, %v1330
      %v1332 = vrot.slane %v364, 5
      %v1333 = vrot.slane %v1332, 4
      %v1334 = vrot.slane %v365, 5
      %v1335 = vsel %vm1226, %v1333, %v1334
      %v1336 = vrot.slane %v1334, 4
      %v1337 = vrot.slane %v366, 5
      %v1338 = vsel %vm1226, %v1336, %v1337
      %s1339 = scalar_lea.vmem %s2, 64
      %v1340 = vld [vmem:[%s1339] sm:$0xf]
      %v1341 = vld [vmem:[%s1339 + $0x4] sm:$0xf]
      %v1342 = vld [vmem:[%s1339 + $0x8] sm:$0xf]
      %v1343 = vld [vmem:[%s1339 + $0xc] sm:$0xf]
      %v1344 = vld [vmem:[%s1339 + $0x10] sm:$0xf]
      %v1345 = vld [vmem:[%s1339 + $0x14] sm:$0xf]
      %v1346 = vld [vmem:[%s1339 + $0x18] sm:$0xf]
      %v1347 = vld [vmem:[%s1339 + $0x1c] sm:$0xf]
      %v1348 = vld [vmem:[%s1339 + $0x20] sm:$0xf]
      %v1349 = vld [vmem:[%s1339 + $0x24] sm:$0xf]
      %v1350 = vld [vmem:[%s1339 + $0x28] sm:$0xf]
      %v1351 = vld [vmem:[%s1339 + $0x2c] sm:$0xf]
      %v1352 = vld [vmem:[%s1339 + $0x30] sm:$0xf]
      %v1353 = vld [vmem:[%s1339 + $0x34] sm:$0xf]
      %v1354 = vld [vmem:[%s1339 + $0x38] sm:$0xf]
      %v1355 = vld [vmem:[%s1339 + $0x3c] sm:$0xf]
      %v1356 = vunpack.c.l.b16 %v1230
      %v1357 = vunpack.c.l.b16 %v1233
      %v1358 = vunpack.c.l.b16 %v1237
      %v1359 = vunpack.c.l.b16 %v1240
      %v1360 = vunpack.c.l.b16 %v1244
      %v1361 = vunpack.c.l.b16 %v1247
      %v1362 = vunpack.c.l.b16 %v1251
      %v1363 = vunpack.c.l.b16 %v1254
      %v1364 = vunpack.c.l.b16 %v1258
      %v1365 = vunpack.c.l.b16 %v1261
      %v1366 = vunpack.c.l.b16 %v1265
      %v1367 = vunpack.c.l.b16 %v1268
      %v1368 = vunpack.c.l.b16 %v1272
      %v1369 = vunpack.c.l.b16 %v1275
      %v1370 = vunpack.c.l.b16 %v1279
      %v1371 = vunpack.c.l.b16 %v1282
      %v1372 = vunpack.c.l.b16 %v1286
      %v1373 = vunpack.c.l.b16 %v1289
      %v1374 = vunpack.c.l.b16 %v1293
      %v1375 = vunpack.c.l.b16 %v1296
      %v1376 = vunpack.c.l.b16 %v1300
      %v1377 = vunpack.c.l.b16 %v1303
      %v1378 = vunpack.c.l.b16 %v1307
      %v1379 = vunpack.c.l.b16 %v1310
      %v1380 = vunpack.c.l.b16 %v1314
      %v1381 = vunpack.c.l.b16 %v1317
      %v1382 = vunpack.c.l.b16 %v1321
      %v1383 = vunpack.c.l.b16 %v1324
      %v1384 = vunpack.c.l.b16 %v1328
      %v1385 = vunpack.c.l.b16 %v1331
      %v1386 = vunpack.c.l.b16 %v1335
      %v1387 = vunpack.c.l.b16 %v1338
      %v1388 = vpack.c.b16 %v1357, %v1356
      %v1389 = vpack.c.b16 %v1359, %v1358
      %v1390 = vpack.c.b16 %v1361, %v1360
      %v1391 = vpack.c.b16 %v1363, %v1362
      %v1392 = vpack.c.b16 %v1365, %v1364
      %v1393 = vpack.c.b16 %v1367, %v1366
      %v1394 = vpack.c.b16 %v1369, %v1368
      %v1395 = vpack.c.b16 %v1371, %v1370
      %v1396 = vpack.c.b16 %v1373, %v1372
      %v1397 = vpack.c.b16 %v1375, %v1374
      %v1398 = vpack.c.b16 %v1377, %v1376
      %v1399 = vpack.c.b16 %v1379, %v1378
      %v1400 = vpack.c.b16 %v1381, %v1380
      %v1401 = vpack.c.b16 %v1383, %v1382
      %v1402 = vpack.c.b16 %v1385, %v1384
      %v1403 = vpack.c.b16 %v1387, %v1386
      %v1436 = vunpack.c.l.b16 %v1340
      %v1437 = vunpack.c.l.b16 %v1341
      %v1438 = vunpack.c.l.b16 %v1342
      %v1439 = vunpack.c.l.b16 %v1343
      %v1440 = vunpack.c.l.b16 %v1344
      %v1441 = vunpack.c.l.b16 %v1345
      %v1442 = vunpack.c.l.b16 %v1346
      %v1443 = vunpack.c.l.b16 %v1347
      %v1444 = vunpack.c.l.b16 %v1348
      %v1445 = vunpack.c.l.b16 %v1349
      %v1446 = vunpack.c.l.b16 %v1350
      %v1447 = vunpack.c.l.b16 %v1351
      %v1448 = vunpack.c.l.b16 %v1352
      %v1449 = vunpack.c.l.b16 %v1353
      %v1450 = vunpack.c.l.b16 %v1354
      %v1451 = vunpack.c.l.b16 %v1355
      %v1452 = vpack.c.b16 %v1437, %v1436
      %v1453 = vpack.c.b16 %v1439, %v1438
      %v1454 = vpack.c.b16 %v1441, %v1440
      %v1455 = vpack.c.b16 %v1443, %v1442
      %v1456 = vpack.c.b16 %v1445, %v1444
      %v1457 = vpack.c.b16 %v1447, %v1446
      %v1458 = vpack.c.b16 %v1449, %v1448
      %v1459 = vpack.c.b16 %v1451, %v1450
      %1468 = vmatprep.subr.bf16.mxu0 0
      %1469 = vmatpush1.bf16.msra.mxu0 %v1459
      %1470 = vmatprep.subr.bf16.mxu0 0
      %1471 = vmatpush1.bf16.msra.mxu0 %v1458
      %1472 = vmatprep.subr.bf16.mxu0 0
      %1473 = vmatpush1.bf16.msra.mxu0 %v1457
      %1474 = vmatprep.subr.bf16.mxu0 0
      %1475 = vmatpush1.bf16.msra.mxu0 %v1456
      %1476 = vmatprep.subr.bf16.mxu0 0
      %1477 = vmatpush1.bf16.msra.mxu0 %v1455
      %1478 = vmatprep.subr.bf16.mxu0 0
      %1479 = vmatpush1.bf16.msra.mxu0 %v1454
      %1480 = vmatprep.subr.bf16.mxu0 0
      %1481 = vmatpush1.bf16.msra.mxu0 %v1453
      %1482 = vmatprep.subr.bf16.mxu0 0
      %1483 = vmatpush1.bf16.msra.mxu0 %v1452
      %1484 = vmatprep.subr.bf16.mxu0 0
      %1485 = vmatpush2.bf16.msra.mxu0 0
      %1486 = vmatprep.subr.bf16.mxu0 0
      %1487 = vmatpush2.bf16.msra.mxu0 0
      %1488 = vmatprep.subr.bf16.mxu0 0
      %1489 = vmatpush2.bf16.msra.mxu0 0
      %1490 = vmatprep.subr.bf16.mxu0 0
      %1491 = vmatpush2.bf16.msra.mxu0 0
      %1492 = vmatprep.subr.bf16.mxu0 0
      %1493 = vmatpush2.bf16.msra.mxu0 0
      %1494 = vmatprep.subr.bf16.mxu0 0
      %1495 = vmatpush2.bf16.msra.mxu0 0
      %1496 = vmatprep.subr.bf16.mxu0 0
      %1497 = vmatpush2.bf16.msra.mxu0 0
      %1498 = vmatprep.subr.bf16.mxu0 0
      %1499 = vmatpush2.bf16.msra.mxu0 0
      %1500 = vmatprep.mubr.bf16.mxu0 0
      %1501 = vmatmul.mubr.bf16.gmra.mxu0 %v1388
      %v1502 = vpop.f32.mrf.mxu0
      %v1503 = vadd.f32 0.0, %v1502
      %v1504 = vpop.f32.mrf.mxu0
      %v1505 = vpop.f32.mrf.mxu0
      %v1506 = vadd.f32 0.0, %v1505
      %v1507 = vpop.f32.mrf.mxu0
      %1508 = vmatprep.mubr.bf16.mxu0 0
      %1509 = vmatmul.mubr.bf16.gmra.mxu0 %v1389
      %v1510 = vpop.f32.mrf.mxu0
      %v1511 = vadd.f32 0.0, %v1510
      %v1512 = vpop.f32.mrf.mxu0
      %v1513 = vpop.f32.mrf.mxu0
      %v1514 = vadd.f32 0.0, %v1513
      %v1515 = vpop.f32.mrf.mxu0
      %1516 = vmatprep.mubr.bf16.mxu0 0
      %1517 = vmatmul.mubr.bf16.gmra.mxu0 %v1390
      %v1518 = vpop.f32.mrf.mxu0
      %v1519 = vadd.f32 0.0, %v1518
      %v1520 = vpop.f32.mrf.mxu0
      %v1521 = vpop.f32.mrf.mxu0
      %v1522 = vadd.f32 0.0, %v1521
      %v1523 = vpop.f32.mrf.mxu0
      %1524 = vmatprep.mubr.bf16.mxu0 0
      %1525 = vmatmul.mubr.bf16.gmra.mxu0 %v1391
      %v1526 = vpop.f32.mrf.mxu0
      %v1527 = vadd.f32 0.0, %v1526
      %v1528 = vpop.f32.mrf.mxu0
      %v1529 = vpop.f32.mrf.mxu0
      %v1530 = vadd.f32 0.0, %v1529
      %v1531 = vpop.f32.mrf.mxu0
      %1532 = vmatprep.mubr.bf16.mxu0 0
      %1533 = vmatmul.mubr.bf16.gmra.mxu0 %v1392
      %v1534 = vpop.f32.mrf.mxu0
      %v1535 = vadd.f32 0.0, %v1534
      %v1536 = vpop.f32.mrf.mxu0
      %v1537 = vpop.f32.mrf.mxu0
      %v1538 = vadd.f32 0.0, %v1537
      %v1539 = vpop.f32.mrf.mxu0
      %1540 = vmatprep.mubr.bf16.mxu0 0
      %1541 = vmatmul.mubr.bf16.gmra.mxu0 %v1393
      %v1542 = vpop.f32.mrf.mxu0
      %v1543 = vadd.f32 0.0, %v1542
      %v1544 = vpop.f32.mrf.mxu0
      %v1545 = vpop.f32.mrf.mxu0
      %v1546 = vadd.f32 0.0, %v1545
      %v1547 = vpop.f32.mrf.mxu0
      %1548 = vmatprep.mubr.bf16.mxu0 0
      %1549 = vmatmul.mubr.bf16.gmra.mxu0 %v1394
      %v1550 = vpop.f32.mrf.mxu0
      %v1551 = vadd.f32 0.0, %v1550
      %v1552 = vpop.f32.mrf.mxu0
      %v1553 = vpop.f32.mrf.mxu0
      %v1554 = vadd.f32 0.0, %v1553
      %v1555 = vpop.f32.mrf.mxu0
      %1556 = vmatprep.mubr.bf16.mxu0 0
      %1557 = vmatmul.mubr.bf16.gmra.mxu0 %v1395
      %v1558 = vpop.f32.mrf.mxu0
      %v1559 = vadd.f32 0.0, %v1558
      %v1560 = vpop.f32.mrf.mxu0
      %v1561 = vpop.f32.mrf.mxu0
      %v1562 = vadd.f32 0.0, %v1561
      %v1563 = vpop.f32.mrf.mxu0
      %1564 = vmatprep.mubr.bf16.mxu0 0
      %1565 = vmatmul.mubr.bf16.gmra.mxu0 %v1396
      %v1566 = vpop.f32.mrf.mxu0
      %v1567 = vadd.f32 0.0, %v1566
      %v1568 = vpop.f32.mrf.mxu0
      %v1569 = vpop.f32.mrf.mxu0
      %v1570 = vadd.f32 0.0, %v1569
      %v1571 = vpop.f32.mrf.mxu0
      %1572 = vmatprep.mubr.bf16.mxu0 0
      %1573 = vmatmul.mubr.bf16.gmra.mxu0 %v1397
      %v1574 = vpop.f32.mrf.mxu0
      %v1575 = vadd.f32 0.0, %v1574
      %v1576 = vpop.f32.mrf.mxu0
      %v1577 = vpop.f32.mrf.mxu0
      %v1578 = vadd.f32 0.0, %v1577
      %v1579 = vpop.f32.mrf.mxu0
      %1580 = vmatprep.mubr.bf16.mxu0 0
      %1581 = vmatmul.mubr.bf16.gmra.mxu0 %v1398
      %v1582 = vpop.f32.mrf.mxu0
      %v1583 = vadd.f32 0.0, %v1582
      %v1584 = vpop.f32.mrf.mxu0
      %v1585 = vpop.f32.mrf.mxu0
      %v1586 = vadd.f32 0.0, %v1585
      %v1587 = vpop.f32.mrf.mxu0
      %1588 = vmatprep.mubr.bf16.mxu0 0
      %1589 = vmatmul.mubr.bf16.gmra.mxu0 %v1399
      %v1590 = vpop.f32.mrf.mxu0
      %v1591 = vadd.f32 0.0, %v1590
      %v1592 = vpop.f32.mrf.mxu0
      %v1593 = vpop.f32.mrf.mxu0
      %v1594 = vadd.f32 0.0, %v1593
      %v1595 = vpop.f32.mrf.mxu0
      %1596 = vmatprep.mubr.bf16.mxu0 0
      %1597 = vmatmul.mubr.bf16.gmra.mxu0 %v1400
      %v1598 = vpop.f32.mrf.mxu0
      %v1599 = vadd.f32 0.0, %v1598
      %v1600 = vpop.f32.mrf.mxu0
      %v1601 = vpop.f32.mrf.mxu0
      %v1602 = vadd.f32 0.0, %v1601
      %v1603 = vpop.f32.mrf.mxu0
      %1604 = vmatprep.mubr.bf16.mxu0 0
      %1605 = vmatmul.mubr.bf16.gmra.mxu0 %v1401
      %v1606 = vpop.f32.mrf.mxu0
      %v1607 = vadd.f32 0.0, %v1606
      %v1608 = vpop.f32.mrf.mxu0
      %v1609 = vpop.f32.mrf.mxu0
      %v1610 = vadd.f32 0.0, %v1609
      %v1611 = vpop.f32.mrf.mxu0
      %1612 = vmatprep.mubr.bf16.mxu0 0
      %1613 = vmatmul.mubr.bf16.gmra.mxu0 %v1402
      %v1614 = vpop.f32.mrf.mxu0
      %v1615 = vadd.f32 0.0, %v1614
      %v1616 = vpop.f32.mrf.mxu0
      %v1617 = vpop.f32.mrf.mxu0
      %v1618 = vadd.f32 0.0, %v1617
      %v1619 = vpop.f32.mrf.mxu0
      %1620 = vmatprep.mubr.bf16.mxu0 0
      %1621 = vmatmul.mubr.bf16.gmra.mxu0 %v1403
      %v1622 = vpop.f32.mrf.mxu0
      %v1623 = vadd.f32 0.0, %v1622
      %v1624 = vpop.f32.mrf.mxu0
      %v1625 = vpop.f32.mrf.mxu0
      %v1626 = vadd.f32 0.0, %v1625
      %v1627 = vpop.f32.mrf.mxu0
      %1628 = vdwg.mxu0
      %v1629 = vadd.f32 %v1176, %v1503
      %v1630 = vadd.f32 %v1177, %v1506
      %v1631 = vadd.f32 %v1178, %v1511
      %v1632 = vadd.f32 %v1179, %v1514
      %v1633 = vadd.f32 %v1180, %v1519
      %v1634 = vadd.f32 %v1181, %v1522
      %v1635 = vadd.f32 %v1182, %v1527
      %v1636 = vadd.f32 %v1183, %v1530
      %v1637 = vadd.f32 %v1184, %v1535
      %v1638 = vadd.f32 %v1185, %v1538
      %v1639 = vadd.f32 %v1186, %v1543
      %v1640 = vadd.f32 %v1187, %v1546
      %v1641 = vadd.f32 %v1188, %v1551
      %v1642 = vadd.f32 %v1189, %v1554
      %v1643 = vadd.f32 %v1190, %v1559
      %v1644 = vadd.f32 %v1191, %v1562
      %v1645 = vadd.f32 %v1192, %v1567
      %v1646 = vadd.f32 %v1193, %v1570
      %v1647 = vadd.f32 %v1194, %v1575
      %v1648 = vadd.f32 %v1195, %v1578
      %v1649 = vadd.f32 %v1196, %v1583
      %v1650 = vadd.f32 %v1197, %v1586
      %v1651 = vadd.f32 %v1198, %v1591
      %v1652 = vadd.f32 %v1199, %v1594
      %v1653 = vadd.f32 %v1200, %v1599
      %v1654 = vadd.f32 %v1201, %v1602
      %v1655 = vadd.f32 %v1202, %v1607
      %v1656 = vadd.f32 %v1203, %v1610
      %v1657 = vadd.f32 %v1204, %v1615
      %v1658 = vadd.f32 %v1205, %v1618
      %v1659 = vadd.f32 %v1206, %v1623
      %v1660 = vadd.f32 %v1207, %v1626
      %v1663 = vrot.slane %v367, 5
      %v1664 = vrot.slane %v1663, 4
      %v1665 = vrot.slane %v368, 5
      %v1666 = vsel %vm1226, %v1664, %v1665
      %v1667 = vrot.slane %v1665, 4
      %v1668 = vrot.slane %v369, 5
      %v1669 = vsel %vm1226, %v1667, %v1668
      %v1670 = vrot.slane %v370, 5
      %v1671 = vrot.slane %v1670, 4
      %v1672 = vrot.slane %v371, 5
      %v1673 = vsel %vm1226, %v1671, %v1672
      %v1674 = vrot.slane %v1672, 4
      %v1675 = vrot.slane %v372, 5
      %v1676 = vsel %vm1226, %v1674, %v1675
      %s1677 = scalar_lea.vmem %s2, 256
      %v1678 = vld [vmem:[%s1677] sm:$0xf]
      %v1679 = vld [vmem:[%s1677 + $0x4] sm:$0xf]
      %v1680 = vld [vmem:[%s1677 + $0x8] sm:$0xf]
      %v1681 = vld [vmem:[%s1677 + $0xc] sm:$0xf]
      %v1682 = vld [vmem:[%s1677 + $0x10] sm:$0xf]
      %v1683 = vld [vmem:[%s1677 + $0x14] sm:$0xf]
      %v1684 = vld [vmem:[%s1677 + $0x18] sm:$0xf]
      %v1685 = vld [vmem:[%s1677 + $0x1c] sm:$0xf]
      %v1686 = vld [vmem:[%s1677 + $0x20] sm:$0xf]
      %v1687 = vld [vmem:[%s1677 + $0x24] sm:$0xf]
      %v1688 = vld [vmem:[%s1677 + $0x28] sm:$0xf]
      %v1689 = vld [vmem:[%s1677 + $0x2c] sm:$0xf]
      %v1690 = vld [vmem:[%s1677 + $0x30] sm:$0xf]
      %v1691 = vld [vmem:[%s1677 + $0x34] sm:$0xf]
      %v1692 = vld [vmem:[%s1677 + $0x38] sm:$0xf]
      %v1693 = vld [vmem:[%s1677 + $0x3c] sm:$0xf]
      %v1694 = vunpack.c.l.b16 %v1666
      %v1695 = vunpack.c.l.b16 %v1669
      %v1696 = vunpack.c.l.b16 %v1673
      %v1697 = vunpack.c.l.b16 %v1676
      %v1698 = vpack.c.b16 %v1695, %v1694
      %v1699 = vpack.c.b16 %v1697, %v1696
      %v1718 = vunpack.c.l.b16 %v1678
      %v1719 = vunpack.c.l.b16 %v1679
      %v1720 = vunpack.c.l.b16 %v1680
      %v1721 = vunpack.c.l.b16 %v1681
      %v1722 = vunpack.c.l.b16 %v1682
      %v1723 = vunpack.c.l.b16 %v1683
      %v1724 = vunpack.c.l.b16 %v1684
      %v1725 = vunpack.c.l.b16 %v1685
      %v1726 = vunpack.c.l.b16 %v1686
      %v1727 = vunpack.c.l.b16 %v1687
      %v1728 = vunpack.c.l.b16 %v1688
      %v1729 = vunpack.c.l.b16 %v1689
      %v1730 = vunpack.c.l.b16 %v1690
      %v1731 = vunpack.c.l.b16 %v1691
      %v1732 = vunpack.c.l.b16 %v1692
      %v1733 = vunpack.c.l.b16 %v1693
      %v1734 = vpack.c.b16 %v1719, %v1718
      %v1735 = vpack.c.b16 %v1721, %v1720
      %v1736 = vpack.c.b16 %v1723, %v1722
      %v1737 = vpack.c.b16 %v1725, %v1724
      %v1738 = vpack.c.b16 %v1727, %v1726
      %v1739 = vpack.c.b16 %v1729, %v1728
      %v1740 = vpack.c.b16 %v1731, %v1730
      %v1741 = vpack.c.b16 %v1733, %v1732
      %1750 = vmatprep.subr.bf16.mxu0 0
      %1751 = vmatpush1.bf16.msra.mxu0 %v1741
      %1752 = vmatprep.subr.bf16.mxu0 0
      %1753 = vmatpush1.bf16.msra.mxu0 %v1740
      %1754 = vmatprep.subr.bf16.mxu0 0
      %1755 = vmatpush1.bf16.msra.mxu0 %v1739
      %1756 = vmatprep.subr.bf16.mxu0 0
      %1757 = vmatpush1.bf16.msra.mxu0 %v1738
      %1758 = vmatprep.subr.bf16.mxu0 0
      %1759 = vmatpush1.bf16.msra.mxu0 %v1737
      %1760 = vmatprep.subr.bf16.mxu0 0
      %1761 = vmatpush1.bf16.msra.mxu0 %v1736
      %1762 = vmatprep.subr.bf16.mxu0 0
      %1763 = vmatpush1.bf16.msra.mxu0 %v1735
      %1764 = vmatprep.subr.bf16.mxu0 0
      %1765 = vmatpush1.bf16.msra.mxu0 %v1734
      %1766 = vmatprep.subr.bf16.mxu0 0
      %1767 = vmatpush2.bf16.msra.mxu0 0
      %1768 = vmatprep.subr.bf16.mxu0 0
      %1769 = vmatpush2.bf16.msra.mxu0 0
      %1770 = vmatprep.subr.bf16.mxu0 0
      %1771 = vmatpush2.bf16.msra.mxu0 0
      %1772 = vmatprep.subr.bf16.mxu0 0
      %1773 = vmatpush2.bf16.msra.mxu0 0
      %1774 = vmatprep.subr.bf16.mxu0 0
      %1775 = vmatpush2.bf16.msra.mxu0 0
      %1776 = vmatprep.subr.bf16.mxu0 0
      %1777 = vmatpush2.bf16.msra.mxu0 0
      %1778 = vmatprep.subr.bf16.mxu0 0
      %1779 = vmatpush2.bf16.msra.mxu0 0
      %1780 = vmatprep.subr.bf16.mxu0 0
      %1781 = vmatpush2.bf16.msra.mxu0 0
      %1782 = vmatprep.mubr.bf16.mxu0 0
      %1783 = vmatmul.mubr.bf16.gmra.mxu0 %v1390
      %v1784 = vpop.f32.mrf.mxu0
      %v1785 = vadd.f32 0.0, %v1784
      %v1786 = vpop.f32.mrf.mxu0
      %v1787 = vpop.f32.mrf.mxu0
      %v1788 = vadd.f32 0.0, %v1787
      %v1789 = vpop.f32.mrf.mxu0
      %1790 = vmatprep.mubr.bf16.mxu0 0
      %1791 = vmatmul.mubr.bf16.gmra.mxu0 %v1391
      %v1792 = vpop.f32.mrf.mxu0
      %v1793 = vadd.f32 0.0, %v1792
      %v1794 = vpop.f32.mrf.mxu0
      %v1795 = vpop.f32.mrf.mxu0
      %v1796 = vadd.f32 0.0, %v1795
      %v1797 = vpop.f32.mrf.mxu0
      %1798 = vmatprep.mubr.bf16.mxu0 0
      %1799 = vmatmul.mubr.bf16.gmra.mxu0 %v1392
      %v1800 = vpop.f32.mrf.mxu0
      %v1801 = vadd.f32 0.0, %v1800
      %v1802 = vpop.f32.mrf.mxu0
      %v1803 = vpop.f32.mrf.mxu0
      %v1804 = vadd.f32 0.0, %v1803
      %v1805 = vpop.f32.mrf.mxu0
      %1806 = vmatprep.mubr.bf16.mxu0 0
      %1807 = vmatmul.mubr.bf16.gmra.mxu0 %v1393
      %v1808 = vpop.f32.mrf.mxu0
      %v1809 = vadd.f32 0.0, %v1808
      %v1810 = vpop.f32.mrf.mxu0
      %v1811 = vpop.f32.mrf.mxu0
      %v1812 = vadd.f32 0.0, %v1811
      %v1813 = vpop.f32.mrf.mxu0
      %1814 = vmatprep.mubr.bf16.mxu0 0
      %1815 = vmatmul.mubr.bf16.gmra.mxu0 %v1394
      %v1816 = vpop.f32.mrf.mxu0
      %v1817 = vadd.f32 0.0, %v1816
      %v1818 = vpop.f32.mrf.mxu0
      %v1819 = vpop.f32.mrf.mxu0
      %v1820 = vadd.f32 0.0, %v1819
      %v1821 = vpop.f32.mrf.mxu0
      %1822 = vmatprep.mubr.bf16.mxu0 0
      %1823 = vmatmul.mubr.bf16.gmra.mxu0 %v1395
      %v1824 = vpop.f32.mrf.mxu0
      %v1825 = vadd.f32 0.0, %v1824
      %v1826 = vpop.f32.mrf.mxu0
      %v1827 = vpop.f32.mrf.mxu0
      %v1828 = vadd.f32 0.0, %v1827
      %v1829 = vpop.f32.mrf.mxu0
      %1830 = vmatprep.mubr.bf16.mxu0 0
      %1831 = vmatmul.mubr.bf16.gmra.mxu0 %v1396
      %v1832 = vpop.f32.mrf.mxu0
      %v1833 = vadd.f32 0.0, %v1832
      %v1834 = vpop.f32.mrf.mxu0
      %v1835 = vpop.f32.mrf.mxu0
      %v1836 = vadd.f32 0.0, %v1835
      %v1837 = vpop.f32.mrf.mxu0
      %1838 = vmatprep.mubr.bf16.mxu0 0
      %1839 = vmatmul.mubr.bf16.gmra.mxu0 %v1397
      %v1840 = vpop.f32.mrf.mxu0
      %v1841 = vadd.f32 0.0, %v1840
      %v1842 = vpop.f32.mrf.mxu0
      %v1843 = vpop.f32.mrf.mxu0
      %v1844 = vadd.f32 0.0, %v1843
      %v1845 = vpop.f32.mrf.mxu0
      %1846 = vmatprep.mubr.bf16.mxu0 0
      %1847 = vmatmul.mubr.bf16.gmra.mxu0 %v1398
      %v1848 = vpop.f32.mrf.mxu0
      %v1849 = vadd.f32 0.0, %v1848
      %v1850 = vpop.f32.mrf.mxu0
      %v1851 = vpop.f32.mrf.mxu0
      %v1852 = vadd.f32 0.0, %v1851
      %v1853 = vpop.f32.mrf.mxu0
      %1854 = vmatprep.mubr.bf16.mxu0 0
      %1855 = vmatmul.mubr.bf16.gmra.mxu0 %v1399
      %v1856 = vpop.f32.mrf.mxu0
      %v1857 = vadd.f32 0.0, %v1856
      %v1858 = vpop.f32.mrf.mxu0
      %v1859 = vpop.f32.mrf.mxu0
      %v1860 = vadd.f32 0.0, %v1859
      %v1861 = vpop.f32.mrf.mxu0
      %1862 = vmatprep.mubr.bf16.mxu0 0
      %1863 = vmatmul.mubr.bf16.gmra.mxu0 %v1400
      %v1864 = vpop.f32.mrf.mxu0
      %v1865 = vadd.f32 0.0, %v1864
      %v1866 = vpop.f32.mrf.mxu0
      %v1867 = vpop.f32.mrf.mxu0
      %v1868 = vadd.f32 0.0, %v1867
      %v1869 = vpop.f32.mrf.mxu0
      %1870 = vmatprep.mubr.bf16.mxu0 0
      %1871 = vmatmul.mubr.bf16.gmra.mxu0 %v1401
      %v1872 = vpop.f32.mrf.mxu0
      %v1873 = vadd.f32 0.0, %v1872
      %v1874 = vpop.f32.mrf.mxu0
      %v1875 = vpop.f32.mrf.mxu0
      %v1876 = vadd.f32 0.0, %v1875
      %v1877 = vpop.f32.mrf.mxu0
      %1878 = vmatprep.mubr.bf16.mxu0 0
      %1879 = vmatmul.mubr.bf16.gmra.mxu0 %v1402
      %v1880 = vpop.f32.mrf.mxu0
      %v1881 = vadd.f32 0.0, %v1880
      %v1882 = vpop.f32.mrf.mxu0
      %v1883 = vpop.f32.mrf.mxu0
      %v1884 = vadd.f32 0.0, %v1883
      %v1885 = vpop.f32.mrf.mxu0
      %1886 = vmatprep.mubr.bf16.mxu0 0
      %1887 = vmatmul.mubr.bf16.gmra.mxu0 %v1403
      %v1888 = vpop.f32.mrf.mxu0
      %v1889 = vadd.f32 0.0, %v1888
      %v1890 = vpop.f32.mrf.mxu0
      %v1891 = vpop.f32.mrf.mxu0
      %v1892 = vadd.f32 0.0, %v1891
      %v1893 = vpop.f32.mrf.mxu0
      %1894 = vmatprep.mubr.bf16.mxu0 0
      %1895 = vmatmul.mubr.bf16.gmra.mxu0 %v1698
      %v1896 = vpop.f32.mrf.mxu0
      %v1897 = vadd.f32 0.0, %v1896
      %v1898 = vpop.f32.mrf.mxu0
      %v1899 = vpop.f32.mrf.mxu0
      %v1900 = vadd.f32 0.0, %v1899
      %v1901 = vpop.f32.mrf.mxu0
      %1902 = vmatprep.mubr.bf16.mxu0 0
      %1903 = vmatmul.mubr.bf16.gmra.mxu0 %v1699
      %v1904 = vpop.f32.mrf.mxu0
      %v1905 = vadd.f32 0.0, %v1904
      %v1906 = vpop.f32.mrf.mxu0
      %v1907 = vpop.f32.mrf.mxu0
      %v1908 = vadd.f32 0.0, %v1907
      %v1909 = vpop.f32.mrf.mxu0
      %1910 = vdwg.mxu0
      %v1911 = vadd.f32 %v1629, %v1785
      %v1912 = vadd.f32 %v1630, %v1788
      %v1913 = vadd.f32 %v1631, %v1793
      %v1914 = vadd.f32 %v1632, %v1796
      %v1915 = vadd.f32 %v1633, %v1801
      %v1916 = vadd.f32 %v1634, %v1804
      %v1917 = vadd.f32 %v1635, %v1809
      %v1918 = vadd.f32 %v1636, %v1812
      %v1919 = vadd.f32 %v1637, %v1817
      %v1920 = vadd.f32 %v1638, %v1820
      %v1921 = vadd.f32 %v1639, %v1825
      %v1922 = vadd.f32 %v1640, %v1828
      %v1923 = vadd.f32 %v1641, %v1833
      %v1924 = vadd.f32 %v1642, %v1836
      %v1925 = vadd.f32 %v1643, %v1841
      %v1926 = vadd.f32 %v1644, %v1844
      %v1927 = vadd.f32 %v1645, %v1849
      %v1928 = vadd.f32 %v1646, %v1852
      %v1929 = vadd.f32 %v1647, %v1857
      %v1930 = vadd.f32 %v1648, %v1860
      %v1931 = vadd.f32 %v1649, %v1865
      %v1932 = vadd.f32 %v1650, %v1868
      %v1933 = vadd.f32 %v1651, %v1873
      %v1934 = vadd.f32 %v1652, %v1876
      %v1935 = vadd.f32 %v1653, %v1881
      %v1936 = vadd.f32 %v1654, %v1884
      %v1937 = vadd.f32 %v1655, %v1889
      %v1938 = vadd.f32 %v1656, %v1892
      %v1939 = vadd.f32 %v1657, %v1897
      %v1940 = vadd.f32 %v1658, %v1900
      %v1941 = vadd.f32 %v1659, %v1905
      %v1942 = vadd.f32 %v1660, %v1908
      %v1945 = vrot.slane %v373, 5
      %v1946 = vrot.slane %v1945, 4
      %v1947 = vrot.slane %v374, 5
      %v1948 = vsel %vm1226, %v1946, %v1947
      %v1949 = vrot.slane %v1947, 4
      %v1950 = vrot.slane %v375, 5
      %v1951 = vsel %vm1226, %v1949, %v1950
      %v1952 = vrot.slane %v376, 5
      %v1953 = vrot.slane %v1952, 4
      %v1954 = vrot.slane %v377, 5
      %v1955 = vsel %vm1226, %v1953, %v1954
      %v1956 = vrot.slane %v1954, 4
      %v1957 = vrot.slane %v378, 5
      %v1958 = vsel %vm1226, %v1956, %v1957
      %s1959 = scalar_lea.vmem %s2, 448
      %v1960 = vld [vmem:[%s1959] sm:$0xf]
      %v1961 = vld [vmem:[%s1959 + $0x4] sm:$0xf]
      %v1962 = vld [vmem:[%s1959 + $0x8] sm:$0xf]
      %v1963 = vld [vmem:[%s1959 + $0xc] sm:$0xf]
      %v1964 = vld [vmem:[%s1959 + $0x10] sm:$0xf]
      %v1965 = vld [vmem:[%s1959 + $0x14] sm:$0xf]
      %v1966 = vld [vmem:[%s1959 + $0x18] sm:$0xf]
      %v1967 = vld [vmem:[%s1959 + $0x1c] sm:$0xf]
      %v1968 = vld [vmem:[%s1959 + $0x20] sm:$0xf]
      %v1969 = vld [vmem:[%s1959 + $0x24] sm:$0xf]
      %v1970 = vld [vmem:[%s1959 + $0x28] sm:$0xf]
      %v1971 = vld [vmem:[%s1959 + $0x2c] sm:$0xf]
      %v1972 = vld [vmem:[%s1959 + $0x30] sm:$0xf]
      %v1973 = vld [vmem:[%s1959 + $0x34] sm:$0xf]
      %v1974 = vld [vmem:[%s1959 + $0x38] sm:$0xf]
      %v1975 = vld [vmem:[%s1959 + $0x3c] sm:$0xf]
      %v1976 = vunpack.c.l.b16 %v1948
      %v1977 = vunpack.c.l.b16 %v1951
      %v1978 = vunpack.c.l.b16 %v1955
      %v1979 = vunpack.c.l.b16 %v1958
      %v1980 = vpack.c.b16 %v1977, %v1976
      %v1981 = vpack.c.b16 %v1979, %v1978
      %v2000 = vunpack.c.l.b16 %v1960
      %v2001 = vunpack.c.l.b16 %v1961
      %v2002 = vunpack.c.l.b16 %v1962
      %v2003 = vunpack.c.l.b16 %v1963
      %v2004 = vunpack.c.l.b16 %v1964
      %v2005 = vunpack.c.l.b16 %v1965
      %v2006 = vunpack.c.l.b16 %v1966
      %v2007 = vunpack.c.l.b16 %v1967
      %v2008 = vunpack.c.l.b16 %v1968
      %v2009 = vunpack.c.l.b16 %v1969
      %v2010 = vunpack.c.l.b16 %v1970
      %v2011 = vunpack.c.l.b16 %v1971
      %v2012 = vunpack.c.l.b16 %v1972
      %v2013 = vunpack.c.l.b16 %v1973
      %v2014 = vunpack.c.l.b16 %v1974
      %v2015 = vunpack.c.l.b16 %v1975
      %v2016 = vpack.c.b16 %v2001, %v2000
      %v2017 = vpack.c.b16 %v2003, %v2002
      %v2018 = vpack.c.b16 %v2005, %v2004
      %v2019 = vpack.c.b16 %v2007, %v2006
      %v2020 = vpack.c.b16 %v2009, %v2008
      %v2021 = vpack.c.b16 %v2011, %v2010
      %v2022 = vpack.c.b16 %v2013, %v2012
      %v2023 = vpack.c.b16 %v2015, %v2014
      %2032 = vmatprep.subr.bf16.mxu0 0
      %2033 = vmatpush1.bf16.msra.mxu0 %v2023
      %2034 = vmatprep.subr.bf16.mxu0 0
      %2035 = vmatpush1.bf16.msra.mxu0 %v2022
      %2036 = vmatprep.subr.bf16.mxu0 0
      %2037 = vmatpush1.bf16.msra.mxu0 %v2021
      %2038 = vmatprep.subr.bf16.mxu0 0
      %2039 = vmatpush1.bf16.msra.mxu0 %v2020
      %2040 = vmatprep.subr.bf16.mxu0 0
      %2041 = vmatpush1.bf16.msra.mxu0 %v2019
      %2042 = vmatprep.subr.bf16.mxu0 0
      %2043 = vmatpush1.bf16.msra.mxu0 %v2018
      %2044 = vmatprep.subr.bf16.mxu0 0
      %2045 = vmatpush1.bf16.msra.mxu0 %v2017
      %2046 = vmatprep.subr.bf16.mxu0 0
      %2047 = vmatpush1.bf16.msra.mxu0 %v2016
      %2048 = vmatprep.subr.bf16.mxu0 0
      %2049 = vmatpush2.bf16.msra.mxu0 0
      %2050 = vmatprep.subr.bf16.mxu0 0
      %2051 = vmatpush2.bf16.msra.mxu0 0
      %2052 = vmatprep.subr.bf16.mxu0 0
      %2053 = vmatpush2.bf16.msra.mxu0 0
      %2054 = vmatprep.subr.bf16.mxu0 0
      %2055 = vmatpush2.bf16.msra.mxu0 0
      %2056 = vmatprep.subr.bf16.mxu0 0
      %2057 = vmatpush2.bf16.msra.mxu0 0
      %2058 = vmatprep.subr.bf16.mxu0 0
      %2059 = vmatpush2.bf16.msra.mxu0 0
      %2060 = vmatprep.subr.bf16.mxu0 0
      %2061 = vmatpush2.bf16.msra.mxu0 0
      %2062 = vmatprep.subr.bf16.mxu0 0
      %2063 = vmatpush2.bf16.msra.mxu0 0
      %2064 = vmatprep.mubr.bf16.mxu0 0
      %2065 = vmatmul.mubr.bf16.gmra.mxu0 %v1392
      %v2066 = vpop.f32.mrf.mxu0
      %v2067 = vadd.f32 0.0, %v2066
      %v2068 = vpop.f32.mrf.mxu0
      %v2069 = vpop.f32.mrf.mxu0
      %v2070 = vadd.f32 0.0, %v2069
      %v2071 = vpop.f32.mrf.mxu0
      %2072 = vmatprep.mubr.bf16.mxu0 0
      %2073 = vmatmul.mubr.bf16.gmra.mxu0 %v1393
      %v2074 = vpop.f32.mrf.mxu0
      %v2075 = vadd.f32 0.0, %v2074
      %v2076 = vpop.f32.mrf.mxu0
      %v2077 = vpop.f32.mrf.mxu0
      %v2078 = vadd.f32 0.0, %v2077
      %v2079 = vpop.f32.mrf.mxu0
      %2080 = vmatprep.mubr.bf16.mxu0 0
      %2081 = vmatmul.mubr.bf16.gmra.mxu0 %v1394
      %v2082 = vpop.f32.mrf.mxu0
      %v2083 = vadd.f32 0.0, %v2082
      %v2084 = vpop.f32.mrf.mxu0
      %v2085 = vpop.f32.mrf.mxu0
      %v2086 = vadd.f32 0.0, %v2085
      %v2087 = vpop.f32.mrf.mxu0
      %2088 = vmatprep.mubr.bf16.mxu0 0
      %2089 = vmatmul.mubr.bf16.gmra.mxu0 %v1395
      %v2090 = vpop.f32.mrf.mxu0
      %v2091 = vadd.f32 0.0, %v2090
      %v2092 = vpop.f32.mrf.mxu0
      %v2093 = vpop.f32.mrf.mxu0
      %v2094 = vadd.f32 0.0, %v2093
      %v2095 = vpop.f32.mrf.mxu0
      %2096 = vmatprep.mubr.bf16.mxu0 0
      %2097 = vmatmul.mubr.bf16.gmra.mxu0 %v1396
      %v2098 = vpop.f32.mrf.mxu0
      %v2099 = vadd.f32 0.0, %v2098
      %v2100 = vpop.f32.mrf.mxu0
      %v2101 = vpop.f32.mrf.mxu0
      %v2102 = vadd.f32 0.0, %v2101
      %v2103 = vpop.f32.mrf.mxu0
      %2104 = vmatprep.mubr.bf16.mxu0 0
      %2105 = vmatmul.mubr.bf16.gmra.mxu0 %v1397
      %v2106 = vpop.f32.mrf.mxu0
      %v2107 = vadd.f32 0.0, %v2106
      %v2108 = vpop.f32.mrf.mxu0
      %v2109 = vpop.f32.mrf.mxu0
      %v2110 = vadd.f32 0.0, %v2109
      %v2111 = vpop.f32.mrf.mxu0
      %2112 = vmatprep.mubr.bf16.mxu0 0
      %2113 = vmatmul.mubr.bf16.gmra.mxu0 %v1398
      %v2114 = vpop.f32.mrf.mxu0
      %v2115 = vadd.f32 0.0, %v2114
      %v2116 = vpop.f32.mrf.mxu0
      %v2117 = vpop.f32.mrf.mxu0
      %v2118 = vadd.f32 0.0, %v2117
      %v2119 = vpop.f32.mrf.mxu0
      %2120 = vmatprep.mubr.bf16.mxu0 0
      %2121 = vmatmul.mubr.bf16.gmra.mxu0 %v1399
      %v2122 = vpop.f32.mrf.mxu0
      %v2123 = vadd.f32 0.0, %v2122
      %v2124 = vpop.f32.mrf.mxu0
      %v2125 = vpop.f32.mrf.mxu0
      %v2126 = vadd.f32 0.0, %v2125
      %v2127 = vpop.f32.mrf.mxu0
      %2128 = vmatprep.mubr.bf16.mxu0 0
      %2129 = vmatmul.mubr.bf16.gmra.mxu0 %v1400
      %v2130 = vpop.f32.mrf.mxu0
      %v2131 = vadd.f32 0.0, %v2130
      %v2132 = vpop.f32.mrf.mxu0
      %v2133 = vpop.f32.mrf.mxu0
      %v2134 = vadd.f32 0.0, %v2133
      %v2135 = vpop.f32.mrf.mxu0
      %2136 = vmatprep.mubr.bf16.mxu0 0
      %2137 = vmatmul.mubr.bf16.gmra.mxu0 %v1401
      %v2138 = vpop.f32.mrf.mxu0
      %v2139 = vadd.f32 0.0, %v2138
      %v2140 = vpop.f32.mrf.mxu0
      %v2141 = vpop.f32.mrf.mxu0
      %v2142 = vadd.f32 0.0, %v2141
      %v2143 = vpop.f32.mrf.mxu0
      %2144 = vmatprep.mubr.bf16.mxu0 0
      %2145 = vmatmul.mubr.bf16.gmra.mxu0 %v1402
      %v2146 = vpop.f32.mrf.mxu0
      %v2147 = vadd.f32 0.0, %v2146
      %v2148 = vpop.f32.mrf.mxu0
      %v2149 = vpop.f32.mrf.mxu0
      %v2150 = vadd.f32 0.0, %v2149
      %v2151 = vpop.f32.mrf.mxu0
      %2152 = vmatprep.mubr.bf16.mxu0 0
      %2153 = vmatmul.mubr.bf16.gmra.mxu0 %v1403
      %v2154 = vpop.f32.mrf.mxu0
      %v2155 = vadd.f32 0.0, %v2154
      %v2156 = vpop.f32.mrf.mxu0
      %v2157 = vpop.f32.mrf.mxu0
      %v2158 = vadd.f32 0.0, %v2157
      %v2159 = vpop.f32.mrf.mxu0
      %2160 = vmatprep.mubr.bf16.mxu0 0
      %2161 = vmatmul.mubr.bf16.gmra.mxu0 %v1698
      %v2162 = vpop.f32.mrf.mxu0
      %v2163 = vadd.f32 0.0, %v2162
      %v2164 = vpop.f32.mrf.mxu0
      %v2165 = vpop.f32.mrf.mxu0
      %v2166 = vadd.f32 0.0, %v2165
      %v2167 = vpop.f32.mrf.mxu0
      %2168 = vmatprep.mubr.bf16.mxu0 0
      %2169 = vmatmul.mubr.bf16.gmra.mxu0 %v1699
      %v2170 = vpop.f32.mrf.mxu0
      %v2171 = vadd.f32 0.0, %v2170
      %v2172 = vpop.f32.mrf.mxu0
      %v2173 = vpop.f32.mrf.mxu0
      %v2174 = vadd.f32 0.0, %v2173
      %v2175 = vpop.f32.mrf.mxu0
      %2176 = vmatprep.mubr.bf16.mxu0 0
      %2177 = vmatmul.mubr.bf16.gmra.mxu0 %v1980
      %v2178 = vpop.f32.mrf.mxu0
      %v2179 = vadd.f32 0.0, %v2178
      %v2180 = vpop.f32.mrf.mxu0
      %v2181 = vpop.f32.mrf.mxu0
      %v2182 = vadd.f32 0.0, %v2181
      %v2183 = vpop.f32.mrf.mxu0
      %2184 = vmatprep.mubr.bf16.mxu0 0
      %2185 = vmatmul.mubr.bf16.gmra.mxu0 %v1981
      %v2186 = vpop.f32.mrf.mxu0
      %v2187 = vadd.f32 0.0, %v2186
      %v2188 = vpop.f32.mrf.mxu0
      %v2189 = vpop.f32.mrf.mxu0
      %v2190 = vadd.f32 0.0, %v2189
      %v2191 = vpop.f32.mrf.mxu0
      %2192 = vdwg.mxu0
      %v2193 = vadd.f32 %v1911, %v2067
      %v2194 = vadd.f32 %v1912, %v2070
      %v2195 = vadd.f32 %v1913, %v2075
      %v2196 = vadd.f32 %v1914, %v2078
      %v2197 = vadd.f32 %v1915, %v2083
      %v2198 = vadd.f32 %v1916, %v2086
      %v2199 = vadd.f32 %v1917, %v2091
      %v2200 = vadd.f32 %v1918, %v2094
      %v2201 = vadd.f32 %v1919, %v2099
      %v2202 = vadd.f32 %v1920, %v2102
      %v2203 = vadd.f32 %v1921, %v2107
      %v2204 = vadd.f32 %v1922, %v2110
      %v2205 = vadd.f32 %v1923, %v2115
      %v2206 = vadd.f32 %v1924, %v2118
      %v2207 = vadd.f32 %v1925, %v2123
      %v2208 = vadd.f32 %v1926, %v2126
      %v2209 = vadd.f32 %v1927, %v2131
      %v2210 = vadd.f32 %v1928, %v2134
      %v2211 = vadd.f32 %v1929, %v2139
      %v2212 = vadd.f32 %v1930, %v2142
      %v2213 = vadd.f32 %v1931, %v2147
      %v2214 = vadd.f32 %v1932, %v2150
      %v2215 = vadd.f32 %v1933, %v2155
      %v2216 = vadd.f32 %v1934, %v2158
      %v2217 = vadd.f32 %v1935, %v2163
      %v2218 = vadd.f32 %v1936, %v2166
      %v2219 = vadd.f32 %v1937, %v2171
      %v2220 = vadd.f32 %v1938, %v2174
      %v2221 = vadd.f32 %v1939, %v2179
      %v2222 = vadd.f32 %v1940, %v2182
      %v2223 = vadd.f32 %v1941, %v2187
      %v2224 = vadd.f32 %v1942, %v2190
      %vm2225 = vcmask 1041408
      %vm2226 = vcmask 1045508
      %vm2227 = vmor %vm2225, %vm2226
      %v2228 = vrot.slane %v319, 6
      %v2229 = vrot.slane %v2228, 4
      %v2230 = vrot.slane %v320, 6
      %v2231 = vsel %vm2227, %v2229, %v2230
      %v2232 = vrot.slane %v2230, 4
      %v2233 = vrot.slane %v321, 6
      %v2234 = vsel %vm2227, %v2232, %v2233
      %v2235 = vrot.slane %v322, 6
      %v2236 = vrot.slane %v2235, 4
      %v2237 = vrot.slane %v323, 6
      %v2238 = vsel %vm2227, %v2236, %v2237
      %v2239 = vrot.slane %v2237, 4
      %v2240 = vrot.slane %v324, 6
      %v2241 = vsel %vm2227, %v2239, %v2240
      %v2242 = vrot.slane %v325, 6
      %v2243 = vrot.slane %v2242, 4
      %v2244 = vrot.slane %v326, 6
      %v2245 = vsel %vm2227, %v2243, %v2244
      %v2246 = vrot.slane %v2244, 4
      %v2247 = vrot.slane %v327, 6
      %v2248 = vsel %vm2227, %v2246, %v2247
      %v2249 = vrot.slane %v328, 6
      %v2250 = vrot.slane %v2249, 4
      %v2251 = vrot.slane %v329, 6
      %v2252 = vsel %vm2227, %v2250, %v2251
      %v2253 = vrot.slane %v2251, 4
      %v2254 = vrot.slane %v330, 6
      %v2255 = vsel %vm2227, %v2253, %v2254
      %v2256 = vrot.slane %v331, 6
      %v2257 = vrot.slane %v2256, 4
      %v2258 = vrot.slane %v332, 6
      %v2259 = vsel %vm2227, %v2257, %v2258
      %v2260 = vrot.slane %v2258, 4
      %v2261 = vrot.slane %v333, 6
      %v2262 = vsel %vm2227, %v2260, %v2261
      %v2263 = vrot.slane %v334, 6
      %v2264 = vrot.slane %v2263, 4
      %v2265 = vrot.slane %v335, 6
      %v2266 = vsel %vm2227, %v2264, %v2265
      %v2267 = vrot.slane %v2265, 4
      %v2268 = vrot.slane %v336, 6
      %v2269 = vsel %vm2227, %v2267, %v2268
      %v2270 = vrot.slane %v337, 6
      %v2271 = vrot.slane %v2270, 4
      %v2272 = vrot.slane %v338, 6
      %v2273 = vsel %vm2227, %v2271, %v2272
      %v2274 = vrot.slane %v2272, 4
      %v2275 = vrot.slane %v339, 6
      %v2276 = vsel %vm2227, %v2274, %v2275
      %v2277 = vrot.slane %v340, 6
      %v2278 = vrot.slane %v2277, 4
      %v2279 = vrot.slane %v341, 6
      %v2280 = vsel %vm2227, %v2278, %v2279
      %v2281 = vrot.slane %v2279, 4
      %v2282 = vrot.slane %v342, 6
      %v2283 = vsel %vm2227, %v2281, %v2282
      %v2284 = vrot.slane %v343, 6
      %v2285 = vrot.slane %v2284, 4
      %v2286 = vrot.slane %v344, 6
      %v2287 = vsel %vm2227, %v2285, %v2286
      %v2288 = vrot.slane %v2286, 4
      %v2289 = vrot.slane %v345, 6
      %v2290 = vsel %vm2227, %v2288, %v2289
      %v2291 = vrot.slane %v346, 6
      %v2292 = vrot.slane %v2291, 4
      %v2293 = vrot.slane %v347, 6
      %v2294 = vsel %vm2227, %v2292, %v2293
      %v2295 = vrot.slane %v2293, 4
      %v2296 = vrot.slane %v348, 6
      %v2297 = vsel %vm2227, %v2295, %v2296
      %v2298 = vrot.slane %v349, 6
      %v2299 = vrot.slane %v2298, 4
      %v2300 = vrot.slane %v350, 6
      %v2301 = vsel %vm2227, %v2299, %v2300
      %v2302 = vrot.slane %v2300, 4
      %v2303 = vrot.slane %v351, 6
      %v2304 = vsel %vm2227, %v2302, %v2303
      %v2305 = vrot.slane %v352, 6
      %v2306 = vrot.slane %v2305, 4
      %v2307 = vrot.slane %v353, 6
      %v2308 = vsel %vm2227, %v2306, %v2307
      %v2309 = vrot.slane %v2307, 4
      %v2310 = vrot.slane %v354, 6
      %v2311 = vsel %vm2227, %v2309, %v2310
      %v2312 = vrot.slane %v355, 6
      %v2313 = vrot.slane %v2312, 4
      %v2314 = vrot.slane %v356, 6
      %v2315 = vsel %vm2227, %v2313, %v2314
      %v2316 = vrot.slane %v2314, 4
      %v2317 = vrot.slane %v357, 6
      %v2318 = vsel %vm2227, %v2316, %v2317
      %v2319 = vrot.slane %v358, 6
      %v2320 = vrot.slane %v2319, 4
      %v2321 = vrot.slane %v359, 6
      %v2322 = vsel %vm2227, %v2320, %v2321
      %v2323 = vrot.slane %v2321, 4
      %v2324 = vrot.slane %v360, 6
      %v2325 = vsel %vm2227, %v2323, %v2324
      %v2326 = vrot.slane %v361, 6
      %v2327 = vrot.slane %v2326, 4
      %v2328 = vrot.slane %v362, 6
      %v2329 = vsel %vm2227, %v2327, %v2328
      %v2330 = vrot.slane %v2328, 4
      %v2331 = vrot.slane %v363, 6
      %v2332 = vsel %vm2227, %v2330, %v2331
      %v2333 = vrot.slane %v364, 6
      %v2334 = vrot.slane %v2333, 4
      %v2335 = vrot.slane %v365, 6
      %v2336 = vsel %vm2227, %v2334, %v2335
      %v2337 = vrot.slane %v2335, 4
      %v2338 = vrot.slane %v366, 6
      %v2339 = vsel %vm2227, %v2337, %v2338
      %s2340 = scalar_lea.vmem %s2, 128
      %v2341 = vld [vmem:[%s2340] sm:$0xf]
      %v2342 = vld [vmem:[%s2340 + $0x4] sm:$0xf]
      %v2343 = vld [vmem:[%s2340 + $0x8] sm:$0xf]
      %v2344 = vld [vmem:[%s2340 + $0xc] sm:$0xf]
      %v2345 = vld [vmem:[%s2340 + $0x10] sm:$0xf]
      %v2346 = vld [vmem:[%s2340 + $0x14] sm:$0xf]
      %v2347 = vld [vmem:[%s2340 + $0x18] sm:$0xf]
      %v2348 = vld [vmem:[%s2340 + $0x1c] sm:$0xf]
      %v2349 = vld [vmem:[%s2340 + $0x20] sm:$0xf]
      %v2350 = vld [vmem:[%s2340 + $0x24] sm:$0xf]
      %v2351 = vld [vmem:[%s2340 + $0x28] sm:$0xf]
      %v2352 = vld [vmem:[%s2340 + $0x2c] sm:$0xf]
      %v2353 = vld [vmem:[%s2340 + $0x30] sm:$0xf]
      %v2354 = vld [vmem:[%s2340 + $0x34] sm:$0xf]
      %v2355 = vld [vmem:[%s2340 + $0x38] sm:$0xf]
      %v2356 = vld [vmem:[%s2340 + $0x3c] sm:$0xf]
      %v2357 = vunpack.c.l.b16 %v2231
      %v2358 = vunpack.c.l.b16 %v2234
      %v2359 = vunpack.c.l.b16 %v2238
      %v2360 = vunpack.c.l.b16 %v2241
      %v2361 = vunpack.c.l.b16 %v2245
      %v2362 = vunpack.c.l.b16 %v2248
      %v2363 = vunpack.c.l.b16 %v2252
      %v2364 = vunpack.c.l.b16 %v2255
      %v2365 = vunpack.c.l.b16 %v2259
      %v2366 = vunpack.c.l.b16 %v2262
      %v2367 = vunpack.c.l.b16 %v2266
      %v2368 = vunpack.c.l.b16 %v2269
      %v2369 = vunpack.c.l.b16 %v2273
      %v2370 = vunpack.c.l.b16 %v2276
      %v2371 = vunpack.c.l.b16 %v2280
      %v2372 = vunpack.c.l.b16 %v2283
      %v2373 = vunpack.c.l.b16 %v2287
      %v2374 = vunpack.c.l.b16 %v2290
      %v2375 = vunpack.c.l.b16 %v2294
      %v2376 = vunpack.c.l.b16 %v2297
      %v2377 = vunpack.c.l.b16 %v2301
      %v2378 = vunpack.c.l.b16 %v2304
      %v2379 = vunpack.c.l.b16 %v2308
      %v2380 = vunpack.c.l.b16 %v2311
      %v2381 = vunpack.c.l.b16 %v2315
      %v2382 = vunpack.c.l.b16 %v2318
      %v2383 = vunpack.c.l.b16 %v2322
      %v2384 = vunpack.c.l.b16 %v2325
      %v2385 = vunpack.c.l.b16 %v2329
      %v2386 = vunpack.c.l.b16 %v2332
      %v2387 = vunpack.c.l.b16 %v2336
      %v2388 = vunpack.c.l.b16 %v2339
      %v2389 = vpack.c.b16 %v2358, %v2357
      %v2390 = vpack.c.b16 %v2360, %v2359
      %v2391 = vpack.c.b16 %v2362, %v2361
      %v2392 = vpack.c.b16 %v2364, %v2363
      %v2393 = vpack.c.b16 %v2366, %v2365
      %v2394 = vpack.c.b16 %v2368, %v2367
      %v2395 = vpack.c.b16 %v2370, %v2369
      %v2396 = vpack.c.b16 %v2372, %v2371
      %v2397 = vpack.c.b16 %v2374, %v2373
      %v2398 = vpack.c.b16 %v2376, %v2375
      %v2399 = vpack.c.b16 %v2378, %v2377
      %v2400 = vpack.c.b16 %v2380, %v2379
      %v2401 = vpack.c.b16 %v2382, %v2381
      %v2402 = vpack.c.b16 %v2384, %v2383
      %v2403 = vpack.c.b16 %v2386, %v2385
      %v2404 = vpack.c.b16 %v2388, %v2387
      %v2437 = vunpack.c.l.b16 %v2341
      %v2438 = vunpack.c.l.b16 %v2342
      %v2439 = vunpack.c.l.b16 %v2343
      %v2440 = vunpack.c.l.b16 %v2344
      %v2441 = vunpack.c.l.b16 %v2345
      %v2442 = vunpack.c.l.b16 %v2346
      %v2443 = vunpack.c.l.b16 %v2347
      %v2444 = vunpack.c.l.b16 %v2348
      %v2445 = vunpack.c.l.b16 %v2349
      %v2446 = vunpack.c.l.b16 %v2350
      %v2447 = vunpack.c.l.b16 %v2351
      %v2448 = vunpack.c.l.b16 %v2352
      %v2449 = vunpack.c.l.b16 %v2353
      %v2450 = vunpack.c.l.b16 %v2354
      %v2451 = vunpack.c.l.b16 %v2355
      %v2452 = vunpack.c.l.b16 %v2356
      %v2453 = vpack.c.b16 %v2438, %v2437
      %v2454 = vpack.c.b16 %v2440, %v2439
      %v2455 = vpack.c.b16 %v2442, %v2441
      %v2456 = vpack.c.b16 %v2444, %v2443
      %v2457 = vpack.c.b16 %v2446, %v2445
      %v2458 = vpack.c.b16 %v2448, %v2447
      %v2459 = vpack.c.b16 %v2450, %v2449
      %v2460 = vpack.c.b16 %v2452, %v2451
      %2469 = vmatprep.subr.bf16.mxu0 0
      %2470 = vmatpush1.bf16.msra.mxu0 %v2460
      %2471 = vmatprep.subr.bf16.mxu0 0
      %2472 = vmatpush1.bf16.msra.mxu0 %v2459
      %2473 = vmatprep.subr.bf16.mxu0 0
      %2474 = vmatpush1.bf16.msra.mxu0 %v2458
      %2475 = vmatprep.subr.bf16.mxu0 0
      %2476 = vmatpush1.bf16.msra.mxu0 %v2457
      %2477 = vmatprep.subr.bf16.mxu0 0
      %2478 = vmatpush1.bf16.msra.mxu0 %v2456
      %2479 = vmatprep.subr.bf16.mxu0 0
      %2480 = vmatpush1.bf16.msra.mxu0 %v2455
      %2481 = vmatprep.subr.bf16.mxu0 0
      %2482 = vmatpush1.bf16.msra.mxu0 %v2454
      %2483 = vmatprep.subr.bf16.mxu0 0
      %2484 = vmatpush1.bf16.msra.mxu0 %v2453
      %2485 = vmatprep.subr.bf16.mxu0 0
      %2486 = vmatpush2.bf16.msra.mxu0 0
      %2487 = vmatprep.subr.bf16.mxu0 0
      %2488 = vmatpush2.bf16.msra.mxu0 0
      %2489 = vmatprep.subr.bf16.mxu0 0
      %2490 = vmatpush2.bf16.msra.mxu0 0
      %2491 = vmatprep.subr.bf16.mxu0 0
      %2492 = vmatpush2.bf16.msra.mxu0 0
      %2493 = vmatprep.subr.bf16.mxu0 0
      %2494 = vmatpush2.bf16.msra.mxu0 0
      %2495 = vmatprep.subr.bf16.mxu0 0
      %2496 = vmatpush2.bf16.msra.mxu0 0
      %2497 = vmatprep.subr.bf16.mxu0 0
      %2498 = vmatpush2.bf16.msra.mxu0 0
      %2499 = vmatprep.subr.bf16.mxu0 0
      %2500 = vmatpush2.bf16.msra.mxu0 0
      %2501 = vmatprep.mubr.bf16.mxu0 0
      %2502 = vmatmul.mubr.bf16.gmra.mxu0 %v2389
      %v2503 = vpop.f32.mrf.mxu0
      %v2504 = vadd.f32 0.0, %v2503
      %v2505 = vpop.f32.mrf.mxu0
      %v2506 = vpop.f32.mrf.mxu0
      %v2507 = vadd.f32 0.0, %v2506
      %v2508 = vpop.f32.mrf.mxu0
      %2509 = vmatprep.mubr.bf16.mxu0 0
      %2510 = vmatmul.mubr.bf16.gmra.mxu0 %v2390
      %v2511 = vpop.f32.mrf.mxu0
      %v2512 = vadd.f32 0.0, %v2511
      %v2513 = vpop.f32.mrf.mxu0
      %v2514 = vpop.f32.mrf.mxu0
      %v2515 = vadd.f32 0.0, %v2514
      %v2516 = vpop.f32.mrf.mxu0
      %2517 = vmatprep.mubr.bf16.mxu0 0
      %2518 = vmatmul.mubr.bf16.gmra.mxu0 %v2391
      %v2519 = vpop.f32.mrf.mxu0
      %v2520 = vadd.f32 0.0, %v2519
      %v2521 = vpop.f32.mrf.mxu0
      %v2522 = vpop.f32.mrf.mxu0
      %v2523 = vadd.f32 0.0, %v2522
      %v2524 = vpop.f32.mrf.mxu0
      %2525 = vmatprep.mubr.bf16.mxu0 0
      %2526 = vmatmul.mubr.bf16.gmra.mxu0 %v2392
      %v2527 = vpop.f32.mrf.mxu0
      %v2528 = vadd.f32 0.0, %v2527
      %v2529 = vpop.f32.mrf.mxu0
      %v2530 = vpop.f32.mrf.mxu0
      %v2531 = vadd.f32 0.0, %v2530
      %v2532 = vpop.f32.mrf.mxu0
      %2533 = vmatprep.mubr.bf16.mxu0 0
      %2534 = vmatmul.mubr.bf16.gmra.mxu0 %v2393
      %v2535 = vpop.f32.mrf.mxu0
      %v2536 = vadd.f32 0.0, %v2535
      %v2537 = vpop.f32.mrf.mxu0
      %v2538 = vpop.f32.mrf.mxu0
      %v2539 = vadd.f32 0.0, %v2538
      %v2540 = vpop.f32.mrf.mxu0
      %2541 = vmatprep.mubr.bf16.mxu0 0
      %2542 = vmatmul.mubr.bf16.gmra.mxu0 %v2394
      %v2543 = vpop.f32.mrf.mxu0
      %v2544 = vadd.f32 0.0, %v2543
      %v2545 = vpop.f32.mrf.mxu0
      %v2546 = vpop.f32.mrf.mxu0
      %v2547 = vadd.f32 0.0, %v2546
      %v2548 = vpop.f32.mrf.mxu0
      %2549 = vmatprep.mubr.bf16.mxu0 0
      %2550 = vmatmul.mubr.bf16.gmra.mxu0 %v2395
      %v2551 = vpop.f32.mrf.mxu0
      %v2552 = vadd.f32 0.0, %v2551
      %v2553 = vpop.f32.mrf.mxu0
      %v2554 = vpop.f32.mrf.mxu0
      %v2555 = vadd.f32 0.0, %v2554
      %v2556 = vpop.f32.mrf.mxu0
      %2557 = vmatprep.mubr.bf16.mxu0 0
      %2558 = vmatmul.mubr.bf16.gmra.mxu0 %v2396
      %v2559 = vpop.f32.mrf.mxu0
      %v2560 = vadd.f32 0.0, %v2559
      %v2561 = vpop.f32.mrf.mxu0
      %v2562 = vpop.f32.mrf.mxu0
      %v2563 = vadd.f32 0.0, %v2562
      %v2564 = vpop.f32.mrf.mxu0
      %2565 = vmatprep.mubr.bf16.mxu0 0
      %2566 = vmatmul.mubr.bf16.gmra.mxu0 %v2397
      %v2567 = vpop.f32.mrf.mxu0
      %v2568 = vadd.f32 0.0, %v2567
      %v2569 = vpop.f32.mrf.mxu0
      %v2570 = vpop.f32.mrf.mxu0
      %v2571 = vadd.f32 0.0, %v2570
      %v2572 = vpop.f32.mrf.mxu0
      %2573 = vmatprep.mubr.bf16.mxu0 0
      %2574 = vmatmul.mubr.bf16.gmra.mxu0 %v2398
      %v2575 = vpop.f32.mrf.mxu0
      %v2576 = vadd.f32 0.0, %v2575
      %v2577 = vpop.f32.mrf.mxu0
      %v2578 = vpop.f32.mrf.mxu0
      %v2579 = vadd.f32 0.0, %v2578
      %v2580 = vpop.f32.mrf.mxu0
      %2581 = vmatprep.mubr.bf16.mxu0 0
      %2582 = vmatmul.mubr.bf16.gmra.mxu0 %v2399
      %v2583 = vpop.f32.mrf.mxu0
      %v2584 = vadd.f32 0.0, %v2583
      %v2585 = vpop.f32.mrf.mxu0
      %v2586 = vpop.f32.mrf.mxu0
      %v2587 = vadd.f32 0.0, %v2586
      %v2588 = vpop.f32.mrf.mxu0
      %2589 = vmatprep.mubr.bf16.mxu0 0
      %2590 = vmatmul.mubr.bf16.gmra.mxu0 %v2400
      %v2591 = vpop.f32.mrf.mxu0
      %v2592 = vadd.f32 0.0, %v2591
      %v2593 = vpop.f32.mrf.mxu0
      %v2594 = vpop.f32.mrf.mxu0
      %v2595 = vadd.f32 0.0, %v2594
      %v2596 = vpop.f32.mrf.mxu0
      %2597 = vmatprep.mubr.bf16.mxu0 0
      %2598 = vmatmul.mubr.bf16.gmra.mxu0 %v2401
      %v2599 = vpop.f32.mrf.mxu0
      %v2600 = vadd.f32 0.0, %v2599
      %v2601 = vpop.f32.mrf.mxu0
      %v2602 = vpop.f32.mrf.mxu0
      %v2603 = vadd.f32 0.0, %v2602
      %v2604 = vpop.f32.mrf.mxu0
      %2605 = vmatprep.mubr.bf16.mxu0 0
      %2606 = vmatmul.mubr.bf16.gmra.mxu0 %v2402
      %v2607 = vpop.f32.mrf.mxu0
      %v2608 = vadd.f32 0.0, %v2607
      %v2609 = vpop.f32.mrf.mxu0
      %v2610 = vpop.f32.mrf.mxu0
      %v2611 = vadd.f32 0.0, %v2610
      %v2612 = vpop.f32.mrf.mxu0
      %2613 = vmatprep.mubr.bf16.mxu0 0
      %2614 = vmatmul.mubr.bf16.gmra.mxu0 %v2403
      %v2615 = vpop.f32.mrf.mxu0
      %v2616 = vadd.f32 0.0, %v2615
      %v2617 = vpop.f32.mrf.mxu0
      %v2618 = vpop.f32.mrf.mxu0
      %v2619 = vadd.f32 0.0, %v2618
      %v2620 = vpop.f32.mrf.mxu0
      %2621 = vmatprep.mubr.bf16.mxu0 0
      %2622 = vmatmul.mubr.bf16.gmra.mxu0 %v2404
      %v2623 = vpop.f32.mrf.mxu0
      %v2624 = vadd.f32 0.0, %v2623
      %v2625 = vpop.f32.mrf.mxu0
      %v2626 = vpop.f32.mrf.mxu0
      %v2627 = vadd.f32 0.0, %v2626
      %v2628 = vpop.f32.mrf.mxu0
      %2629 = vdwg.mxu0
      %v2630 = vadd.f32 %v2193, %v2504
      %v2631 = vadd.f32 %v2194, %v2507
      %v2632 = vadd.f32 %v2195, %v2512
      %v2633 = vadd.f32 %v2196, %v2515
      %v2634 = vadd.f32 %v2197, %v2520
      %v2635 = vadd.f32 %v2198, %v2523
      %v2636 = vadd.f32 %v2199, %v2528
      %v2637 = vadd.f32 %v2200, %v2531
      %v2638 = vadd.f32 %v2201, %v2536
      %v2639 = vadd.f32 %v2202, %v2539
      %v2640 = vadd.f32 %v2203, %v2544
      %v2641 = vadd.f32 %v2204, %v2547
      %v2642 = vadd.f32 %v2205, %v2552
      %v2643 = vadd.f32 %v2206, %v2555
      %v2644 = vadd.f32 %v2207, %v2560
      %v2645 = vadd.f32 %v2208, %v2563
      %v2646 = vadd.f32 %v2209, %v2568
      %v2647 = vadd.f32 %v2210, %v2571
      %v2648 = vadd.f32 %v2211, %v2576
      %v2649 = vadd.f32 %v2212, %v2579
      %v2650 = vadd.f32 %v2213, %v2584
      %v2651 = vadd.f32 %v2214, %v2587
      %v2652 = vadd.f32 %v2215, %v2592
      %v2653 = vadd.f32 %v2216, %v2595
      %v2654 = vadd.f32 %v2217, %v2600
      %v2655 = vadd.f32 %v2218, %v2603
      %v2656 = vadd.f32 %v2219, %v2608
      %v2657 = vadd.f32 %v2220, %v2611
      %v2658 = vadd.f32 %v2221, %v2616
      %v2659 = vadd.f32 %v2222, %v2619
      %v2660 = vadd.f32 %v2223, %v2624
      %v2661 = vadd.f32 %v2224, %v2627
      %v2662 = vrot.slane %v367, 6
      %v2663 = vrot.slane %v2662, 4
      %v2664 = vrot.slane %v368, 6
      %v2665 = vsel %vm2227, %v2663, %v2664
      %v2666 = vrot.slane %v2664, 4
      %v2667 = vrot.slane %v369, 6
      %v2668 = vsel %vm2227, %v2666, %v2667
      %v2669 = vrot.slane %v370, 6
      %v2670 = vrot.slane %v2669, 4
      %v2671 = vrot.slane %v371, 6
      %v2672 = vsel %vm2227, %v2670, %v2671
      %v2673 = vrot.slane %v2671, 4
      %v2674 = vrot.slane %v372, 6
      %v2675 = vsel %vm2227, %v2673, %v2674
      %s2676 = scalar_lea.vmem %s2, 320
      %v2677 = vld [vmem:[%s2676] sm:$0xf]
      %v2678 = vld [vmem:[%s2676 + $0x4] sm:$0xf]
      %v2679 = vld [vmem:[%s2676 + $0x8] sm:$0xf]
      %v2680 = vld [vmem:[%s2676 + $0xc] sm:$0xf]
      %v2681 = vld [vmem:[%s2676 + $0x10] sm:$0xf]
      %v2682 = vld [vmem:[%s2676 + $0x14] sm:$0xf]
      %v2683 = vld [vmem:[%s2676 + $0x18] sm:$0xf]
      %v2684 = vld [vmem:[%s2676 + $0x1c] sm:$0xf]
      %v2685 = vld [vmem:[%s2676 + $0x20] sm:$0xf]
      %v2686 = vld [vmem:[%s2676 + $0x24] sm:$0xf]
      %v2687 = vld [vmem:[%s2676 + $0x28] sm:$0xf]
      %v2688 = vld [vmem:[%s2676 + $0x2c] sm:$0xf]
      %v2689 = vld [vmem:[%s2676 + $0x30] sm:$0xf]
      %v2690 = vld [vmem:[%s2676 + $0x34] sm:$0xf]
      %v2691 = vld [vmem:[%s2676 + $0x38] sm:$0xf]
      %v2692 = vld [vmem:[%s2676 + $0x3c] sm:$0xf]
      %v2693 = vunpack.c.l.b16 %v2665
      %v2694 = vunpack.c.l.b16 %v2668
      %v2695 = vunpack.c.l.b16 %v2672
      %v2696 = vunpack.c.l.b16 %v2675
      %v2697 = vpack.c.b16 %v2694, %v2693
      %v2698 = vpack.c.b16 %v2696, %v2695
      %v2717 = vunpack.c.l.b16 %v2677
      %v2718 = vunpack.c.l.b16 %v2678
      %v2719 = vunpack.c.l.b16 %v2679
      %v2720 = vunpack.c.l.b16 %v2680
      %v2721 = vunpack.c.l.b16 %v2681
      %v2722 = vunpack.c.l.b16 %v2682
      %v2723 = vunpack.c.l.b16 %v2683
      %v2724 = vunpack.c.l.b16 %v2684
      %v2725 = vunpack.c.l.b16 %v2685
      %v2726 = vunpack.c.l.b16 %v2686
      %v2727 = vunpack.c.l.b16 %v2687
      %v2728 = vunpack.c.l.b16 %v2688
      %v2729 = vunpack.c.l.b16 %v2689
      %v2730 = vunpack.c.l.b16 %v2690
      %v2731 = vunpack.c.l.b16 %v2691
      %v2732 = vunpack.c.l.b16 %v2692
      %v2733 = vpack.c.b16 %v2718, %v2717
      %v2734 = vpack.c.b16 %v2720, %v2719
      %v2735 = vpack.c.b16 %v2722, %v2721
      %v2736 = vpack.c.b16 %v2724, %v2723
      %v2737 = vpack.c.b16 %v2726, %v2725
      %v2738 = vpack.c.b16 %v2728, %v2727
      %v2739 = vpack.c.b16 %v2730, %v2729
      %v2740 = vpack.c.b16 %v2732, %v2731
      %2749 = vmatprep.subr.bf16.mxu0 0
      %2750 = vmatpush1.bf16.msra.mxu0 %v2740
      %2751 = vmatprep.subr.bf16.mxu0 0
      %2752 = vmatpush1.bf16.msra.mxu0 %v2739
      %2753 = vmatprep.subr.bf16.mxu0 0
      %2754 = vmatpush1.bf16.msra.mxu0 %v2738
      %2755 = vmatprep.subr.bf16.mxu0 0
      %2756 = vmatpush1.bf16.msra.mxu0 %v2737
      %2757 = vmatprep.subr.bf16.mxu0 0
      %2758 = vmatpush1.bf16.msra.mxu0 %v2736
      %2759 = vmatprep.subr.bf16.mxu0 0
      %2760 = vmatpush1.bf16.msra.mxu0 %v2735
      %2761 = vmatprep.subr.bf16.mxu0 0
      %2762 = vmatpush1.bf16.msra.mxu0 %v2734
      %2763 = vmatprep.subr.bf16.mxu0 0
      %2764 = vmatpush1.bf16.msra.mxu0 %v2733
      %2765 = vmatprep.subr.bf16.mxu0 0
      %2766 = vmatpush2.bf16.msra.mxu0 0
      %2767 = vmatprep.subr.bf16.mxu0 0
      %2768 = vmatpush2.bf16.msra.mxu0 0
      %2769 = vmatprep.subr.bf16.mxu0 0
      %2770 = vmatpush2.bf16.msra.mxu0 0
      %2771 = vmatprep.subr.bf16.mxu0 0
      %2772 = vmatpush2.bf16.msra.mxu0 0
      %2773 = vmatprep.subr.bf16.mxu0 0
      %2774 = vmatpush2.bf16.msra.mxu0 0
      %2775 = vmatprep.subr.bf16.mxu0 0
      %2776 = vmatpush2.bf16.msra.mxu0 0
      %2777 = vmatprep.subr.bf16.mxu0 0
      %2778 = vmatpush2.bf16.msra.mxu0 0
      %2779 = vmatprep.subr.bf16.mxu0 0
      %2780 = vmatpush2.bf16.msra.mxu0 0
      %2781 = vmatprep.mubr.bf16.mxu0 0
      %2782 = vmatmul.mubr.bf16.gmra.mxu0 %v2391
      %v2783 = vpop.f32.mrf.mxu0
      %v2784 = vadd.f32 0.0, %v2783
      %v2785 = vpop.f32.mrf.mxu0
      %v2786 = vpop.f32.mrf.mxu0
      %v2787 = vadd.f32 0.0, %v2786
      %v2788 = vpop.f32.mrf.mxu0
      %2789 = vmatprep.mubr.bf16.mxu0 0
      %2790 = vmatmul.mubr.bf16.gmra.mxu0 %v2392
      %v2791 = vpop.f32.mrf.mxu0
      %v2792 = vadd.f32 0.0, %v2791
      %v2793 = vpop.f32.mrf.mxu0
      %v2794 = vpop.f32.mrf.mxu0
      %v2795 = vadd.f32 0.0, %v2794
      %v2796 = vpop.f32.mrf.mxu0
      %2797 = vmatprep.mubr.bf16.mxu0 0
      %2798 = vmatmul.mubr.bf16.gmra.mxu0 %v2393
      %v2799 = vpop.f32.mrf.mxu0
      %v2800 = vadd.f32 0.0, %v2799
      %v2801 = vpop.f32.mrf.mxu0
      %v2802 = vpop.f32.mrf.mxu0
      %v2803 = vadd.f32 0.0, %v2802
      %v2804 = vpop.f32.mrf.mxu0
      %2805 = vmatprep.mubr.bf16.mxu0 0
      %2806 = vmatmul.mubr.bf16.gmra.mxu0 %v2394
      %v2807 = vpop.f32.mrf.mxu0
      %v2808 = vadd.f32 0.0, %v2807
      %v2809 = vpop.f32.mrf.mxu0
      %v2810 = vpop.f32.mrf.mxu0
      %v2811 = vadd.f32 0.0, %v2810
      %v2812 = vpop.f32.mrf.mxu0
      %2813 = vmatprep.mubr.bf16.mxu0 0
      %2814 = vmatmul.mubr.bf16.gmra.mxu0 %v2395
      %v2815 = vpop.f32.mrf.mxu0
      %v2816 = vadd.f32 0.0, %v2815
      %v2817 = vpop.f32.mrf.mxu0
      %v2818 = vpop.f32.mrf.mxu0
      %v2819 = vadd.f32 0.0, %v2818
      %v2820 = vpop.f32.mrf.mxu0
      %2821 = vmatprep.mubr.bf16.mxu0 0
      %2822 = vmatmul.mubr.bf16.gmra.mxu0 %v2396
      %v2823 = vpop.f32.mrf.mxu0
      %v2824 = vadd.f32 0.0, %v2823
      %v2825 = vpop.f32.mrf.mxu0
      %v2826 = vpop.f32.mrf.mxu0
      %v2827 = vadd.f32 0.0, %v2826
      %v2828 = vpop.f32.mrf.mxu0
      %2829 = vmatprep.mubr.bf16.mxu0 0
      %2830 = vmatmul.mubr.bf16.gmra.mxu0 %v2397
      %v2831 = vpop.f32.mrf.mxu0
      %v2832 = vadd.f32 0.0, %v2831
      %v2833 = vpop.f32.mrf.mxu0
      %v2834 = vpop.f32.mrf.mxu0
      %v2835 = vadd.f32 0.0, %v2834
      %v2836 = vpop.f32.mrf.mxu0
      %2837 = vmatprep.mubr.bf16.mxu0 0
      %2838 = vmatmul.mubr.bf16.gmra.mxu0 %v2398
      %v2839 = vpop.f32.mrf.mxu0
      %v2840 = vadd.f32 0.0, %v2839
      %v2841 = vpop.f32.mrf.mxu0
      %v2842 = vpop.f32.mrf.mxu0
      %v2843 = vadd.f32 0.0, %v2842
      %v2844 = vpop.f32.mrf.mxu0
      %2845 = vmatprep.mubr.bf16.mxu0 0
      %2846 = vmatmul.mubr.bf16.gmra.mxu0 %v2399
      %v2847 = vpop.f32.mrf.mxu0
      %v2848 = vadd.f32 0.0, %v2847
      %v2849 = vpop.f32.mrf.mxu0
      %v2850 = vpop.f32.mrf.mxu0
      %v2851 = vadd.f32 0.0, %v2850
      %v2852 = vpop.f32.mrf.mxu0
      %2853 = vmatprep.mubr.bf16.mxu0 0
      %2854 = vmatmul.mubr.bf16.gmra.mxu0 %v2400
      %v2855 = vpop.f32.mrf.mxu0
      %v2856 = vadd.f32 0.0, %v2855
      %v2857 = vpop.f32.mrf.mxu0
      %v2858 = vpop.f32.mrf.mxu0
      %v2859 = vadd.f32 0.0, %v2858
      %v2860 = vpop.f32.mrf.mxu0
      %2861 = vmatprep.mubr.bf16.mxu0 0
      %2862 = vmatmul.mubr.bf16.gmra.mxu0 %v2401
      %v2863 = vpop.f32.mrf.mxu0
      %v2864 = vadd.f32 0.0, %v2863
      %v2865 = vpop.f32.mrf.mxu0
      %v2866 = vpop.f32.mrf.mxu0
      %v2867 = vadd.f32 0.0, %v2866
      %v2868 = vpop.f32.mrf.mxu0
      %2869 = vmatprep.mubr.bf16.mxu0 0
      %2870 = vmatmul.mubr.bf16.gmra.mxu0 %v2402
      %v2871 = vpop.f32.mrf.mxu0
      %v2872 = vadd.f32 0.0, %v2871
      %v2873 = vpop.f32.mrf.mxu0
      %v2874 = vpop.f32.mrf.mxu0
      %v2875 = vadd.f32 0.0, %v2874
      %v2876 = vpop.f32.mrf.mxu0
      %2877 = vmatprep.mubr.bf16.mxu0 0
      %2878 = vmatmul.mubr.bf16.gmra.mxu0 %v2403
      %v2879 = vpop.f32.mrf.mxu0
      %v2880 = vadd.f32 0.0, %v2879
      %v2881 = vpop.f32.mrf.mxu0
      %v2882 = vpop.f32.mrf.mxu0
      %v2883 = vadd.f32 0.0, %v2882
      %v2884 = vpop.f32.mrf.mxu0
      %2885 = vmatprep.mubr.bf16.mxu0 0
      %2886 = vmatmul.mubr.bf16.gmra.mxu0 %v2404
      %v2887 = vpop.f32.mrf.mxu0
      %v2888 = vadd.f32 0.0, %v2887
      %v2889 = vpop.f32.mrf.mxu0
      %v2890 = vpop.f32.mrf.mxu0
      %v2891 = vadd.f32 0.0, %v2890
      %v2892 = vpop.f32.mrf.mxu0
      %2893 = vmatprep.mubr.bf16.mxu0 0
      %2894 = vmatmul.mubr.bf16.gmra.mxu0 %v2697
      %v2895 = vpop.f32.mrf.mxu0
      %v2896 = vadd.f32 0.0, %v2895
      %v2897 = vpop.f32.mrf.mxu0
      %v2898 = vpop.f32.mrf.mxu0
      %v2899 = vadd.f32 0.0, %v2898
      %v2900 = vpop.f32.mrf.mxu0
      %2901 = vmatprep.mubr.bf16.mxu0 0
      %2902 = vmatmul.mubr.bf16.gmra.mxu0 %v2698
      %v2903 = vpop.f32.mrf.mxu0
      %v2904 = vadd.f32 0.0, %v2903
      %v2905 = vpop.f32.mrf.mxu0
      %v2906 = vpop.f32.mrf.mxu0
      %v2907 = vadd.f32 0.0, %v2906
      %v2908 = vpop.f32.mrf.mxu0
      %2909 = vdwg.mxu0
      %v2910 = vadd.f32 %v2630, %v2784
      %v2911 = vadd.f32 %v2631, %v2787
      %v2912 = vadd.f32 %v2632, %v2792
      %v2913 = vadd.f32 %v2633, %v2795
      %v2914 = vadd.f32 %v2634, %v2800
      %v2915 = vadd.f32 %v2635, %v2803
      %v2916 = vadd.f32 %v2636, %v2808
      %v2917 = vadd.f32 %v2637, %v2811
      %v2918 = vadd.f32 %v2638, %v2816
      %v2919 = vadd.f32 %v2639, %v2819
      %v2920 = vadd.f32 %v2640, %v2824
      %v2921 = vadd.f32 %v2641, %v2827
      %v2922 = vadd.f32 %v2642, %v2832
      %v2923 = vadd.f32 %v2643, %v2835
      %v2924 = vadd.f32 %v2644, %v2840
      %v2925 = vadd.f32 %v2645, %v2843
      %v2926 = vadd.f32 %v2646, %v2848
      %v2927 = vadd.f32 %v2647, %v2851
      %v2928 = vadd.f32 %v2648, %v2856
      %v2929 = vadd.f32 %v2649, %v2859
      %v2930 = vadd.f32 %v2650, %v2864
      %v2931 = vadd.f32 %v2651, %v2867
      %v2932 = vadd.f32 %v2652, %v2872
      %v2933 = vadd.f32 %v2653, %v2875
      %v2934 = vadd.f32 %v2654, %v2880
      %v2935 = vadd.f32 %v2655, %v2883
      %v2936 = vadd.f32 %v2656, %v2888
      %v2937 = vadd.f32 %v2657, %v2891
      %v2938 = vadd.f32 %v2658, %v2896
      %v2939 = vadd.f32 %v2659, %v2899
      %v2940 = vadd.f32 %v2660, %v2904
      %v2941 = vadd.f32 %v2661, %v2907
      %v2942 = vrot.slane %v373, 6
      %v2943 = vrot.slane %v2942, 4
      %v2944 = vrot.slane %v374, 6
      %v2945 = vsel %vm2227, %v2943, %v2944
      %v2946 = vrot.slane %v2944, 4
      %v2947 = vrot.slane %v375, 6
      %v2948 = vsel %vm2227, %v2946, %v2947
      %v2949 = vrot.slane %v376, 6
      %v2950 = vrot.slane %v2949, 4
      %v2951 = vrot.slane %v377, 6
      %v2952 = vsel %vm2227, %v2950, %v2951
      %v2953 = vrot.slane %v2951, 4
      %v2954 = vrot.slane %v378, 6
      %v2955 = vsel %vm2227, %v2953, %v2954
      %s2956 = scalar_lea.vmem %s2, 512
      %v2957 = vld [vmem:[%s2956] sm:$0xf]
      %v2958 = vld [vmem:[%s2956 + $0x4] sm:$0xf]
      %v2959 = vld [vmem:[%s2956 + $0x8] sm:$0xf]
      %v2960 = vld [vmem:[%s2956 + $0xc] sm:$0xf]
      %v2961 = vld [vmem:[%s2956 + $0x10] sm:$0xf]
      %v2962 = vld [vmem:[%s2956 + $0x14] sm:$0xf]
      %v2963 = vld [vmem:[%s2956 + $0x18] sm:$0xf]
      %v2964 = vld [vmem:[%s2956 + $0x1c] sm:$0xf]
      %v2965 = vld [vmem:[%s2956 + $0x20] sm:$0xf]
      %v2966 = vld [vmem:[%s2956 + $0x24] sm:$0xf]
      %v2967 = vld [vmem:[%s2956 + $0x28] sm:$0xf]
      %v2968 = vld [vmem:[%s2956 + $0x2c] sm:$0xf]
      %v2969 = vld [vmem:[%s2956 + $0x30] sm:$0xf]
      %v2970 = vld [vmem:[%s2956 + $0x34] sm:$0xf]
      %v2971 = vld [vmem:[%s2956 + $0x38] sm:$0xf]
      %v2972 = vld [vmem:[%s2956 + $0x3c] sm:$0xf]
      %v2973 = vunpack.c.l.b16 %v2945
      %v2974 = vunpack.c.l.b16 %v2948
      %v2975 = vunpack.c.l.b16 %v2952
      %v2976 = vunpack.c.l.b16 %v2955
      %v2977 = vpack.c.b16 %v2974, %v2973
      %v2978 = vpack.c.b16 %v2976, %v2975
      %v2997 = vunpack.c.l.b16 %v2957
      %v2998 = vunpack.c.l.b16 %v2958
      %v2999 = vunpack.c.l.b16 %v2959
      %v3000 = vunpack.c.l.b16 %v2960
      %v3001 = vunpack.c.l.b16 %v2961
      %v3002 = vunpack.c.l.b16 %v2962
      %v3003 = vunpack.c.l.b16 %v2963
      %v3004 = vunpack.c.l.b16 %v2964
      %v3005 = vunpack.c.l.b16 %v2965
      %v3006 = vunpack.c.l.b16 %v2966
      %v3007 = vunpack.c.l.b16 %v2967
      %v3008 = vunpack.c.l.b16 %v2968
      %v3009 = vunpack.c.l.b16 %v2969
      %v3010 = vunpack.c.l.b16 %v2970
      %v3011 = vunpack.c.l.b16 %v2971
      %v3012 = vunpack.c.l.b16 %v2972
      %v3013 = vpack.c.b16 %v2998, %v2997
      %v3014 = vpack.c.b16 %v3000, %v2999
      %v3015 = vpack.c.b16 %v3002, %v3001
      %v3016 = vpack.c.b16 %v3004, %v3003
      %v3017 = vpack.c.b16 %v3006, %v3005
      %v3018 = vpack.c.b16 %v3008, %v3007
      %v3019 = vpack.c.b16 %v3010, %v3009
      %v3020 = vpack.c.b16 %v3012, %v3011
      %3029 = vmatprep.subr.bf16.mxu0 0
      %3030 = vmatpush1.bf16.msra.mxu0 %v3020
      %3031 = vmatprep.subr.bf16.mxu0 0
      %3032 = vmatpush1.bf16.msra.mxu0 %v3019
      %3033 = vmatprep.subr.bf16.mxu0 0
      %3034 = vmatpush1.bf16.msra.mxu0 %v3018
      %3035 = vmatprep.subr.bf16.mxu0 0
      %3036 = vmatpush1.bf16.msra.mxu0 %v3017
      %3037 = vmatprep.subr.bf16.mxu0 0
      %3038 = vmatpush1.bf16.msra.mxu0 %v3016
      %3039 = vmatprep.subr.bf16.mxu0 0
      %3040 = vmatpush1.bf16.msra.mxu0 %v3015
      %3041 = vmatprep.subr.bf16.mxu0 0
      %3042 = vmatpush1.bf16.msra.mxu0 %v3014
      %3043 = vmatprep.subr.bf16.mxu0 0
      %3044 = vmatpush1.bf16.msra.mxu0 %v3013
      %3045 = vmatprep.subr.bf16.mxu0 0
      %3046 = vmatpush2.bf16.msra.mxu0 0
      %3047 = vmatprep.subr.bf16.mxu0 0
      %3048 = vmatpush2.bf16.msra.mxu0 0
      %3049 = vmatprep.subr.bf16.mxu0 0
      %3050 = vmatpush2.bf16.msra.mxu0 0
      %3051 = vmatprep.subr.bf16.mxu0 0
      %3052 = vmatpush2.bf16.msra.mxu0 0
      %3053 = vmatprep.subr.bf16.mxu0 0
      %3054 = vmatpush2.bf16.msra.mxu0 0
      %3055 = vmatprep.subr.bf16.mxu0 0
      %3056 = vmatpush2.bf16.msra.mxu0 0
      %3057 = vmatprep.subr.bf16.mxu0 0
      %3058 = vmatpush2.bf16.msra.mxu0 0
      %3059 = vmatprep.subr.bf16.mxu0 0
      %3060 = vmatpush2.bf16.msra.mxu0 0
      %3061 = vmatprep.mubr.bf16.mxu0 0
      %3062 = vmatmul.mubr.bf16.gmra.mxu0 %v2393
      %v3063 = vpop.f32.mrf.mxu0
      %v3064 = vadd.f32 0.0, %v3063
      %v3065 = vpop.f32.mrf.mxu0
      %v3066 = vpop.f32.mrf.mxu0
      %v3067 = vadd.f32 0.0, %v3066
      %v3068 = vpop.f32.mrf.mxu0
      %3069 = vmatprep.mubr.bf16.mxu0 0
      %3070 = vmatmul.mubr.bf16.gmra.mxu0 %v2394
      %v3071 = vpop.f32.mrf.mxu0
      %v3072 = vadd.f32 0.0, %v3071
      %v3073 = vpop.f32.mrf.mxu0
      %v3074 = vpop.f32.mrf.mxu0
      %v3075 = vadd.f32 0.0, %v3074
      %v3076 = vpop.f32.mrf.mxu0
      %3077 = vmatprep.mubr.bf16.mxu0 0
      %3078 = vmatmul.mubr.bf16.gmra.mxu0 %v2395
      %v3079 = vpop.f32.mrf.mxu0
      %v3080 = vadd.f32 0.0, %v3079
      %v3081 = vpop.f32.mrf.mxu0
      %v3082 = vpop.f32.mrf.mxu0
      %v3083 = vadd.f32 0.0, %v3082
      %v3084 = vpop.f32.mrf.mxu0
      %3085 = vmatprep.mubr.bf16.mxu0 0
      %3086 = vmatmul.mubr.bf16.gmra.mxu0 %v2396
      %v3087 = vpop.f32.mrf.mxu0
      %v3088 = vadd.f32 0.0, %v3087
      %v3089 = vpop.f32.mrf.mxu0
      %v3090 = vpop.f32.mrf.mxu0
      %v3091 = vadd.f32 0.0, %v3090
      %v3092 = vpop.f32.mrf.mxu0
      %3093 = vmatprep.mubr.bf16.mxu0 0
      %3094 = vmatmul.mubr.bf16.gmra.mxu0 %v2397
      %v3095 = vpop.f32.mrf.mxu0
      %v3096 = vadd.f32 0.0, %v3095
      %v3097 = vpop.f32.mrf.mxu0
      %v3098 = vpop.f32.mrf.mxu0
      %v3099 = vadd.f32 0.0, %v3098
      %v3100 = vpop.f32.mrf.mxu0
      %3101 = vmatprep.mubr.bf16.mxu0 0
      %3102 = vmatmul.mubr.bf16.gmra.mxu0 %v2398
      %v3103 = vpop.f32.mrf.mxu0
      %v3104 = vadd.f32 0.0, %v3103
      %v3105 = vpop.f32.mrf.mxu0
      %v3106 = vpop.f32.mrf.mxu0
      %v3107 = vadd.f32 0.0, %v3106
      %v3108 = vpop.f32.mrf.mxu0
      %3109 = vmatprep.mubr.bf16.mxu0 0
      %3110 = vmatmul.mubr.bf16.gmra.mxu0 %v2399
      %v3111 = vpop.f32.mrf.mxu0
      %v3112 = vadd.f32 0.0, %v3111
      %v3113 = vpop.f32.mrf.mxu0
      %v3114 = vpop.f32.mrf.mxu0
      %v3115 = vadd.f32 0.0, %v3114
      %v3116 = vpop.f32.mrf.mxu0
      %3117 = vmatprep.mubr.bf16.mxu0 0
      %3118 = vmatmul.mubr.bf16.gmra.mxu0 %v2400
      %v3119 = vpop.f32.mrf.mxu0
      %v3120 = vadd.f32 0.0, %v3119
      %v3121 = vpop.f32.mrf.mxu0
      %v3122 = vpop.f32.mrf.mxu0
      %v3123 = vadd.f32 0.0, %v3122
      %v3124 = vpop.f32.mrf.mxu0
      %3125 = vmatprep.mubr.bf16.mxu0 0
      %3126 = vmatmul.mubr.bf16.gmra.mxu0 %v2401
      %v3127 = vpop.f32.mrf.mxu0
      %v3128 = vadd.f32 0.0, %v3127
      %v3129 = vpop.f32.mrf.mxu0
      %v3130 = vpop.f32.mrf.mxu0
      %v3131 = vadd.f32 0.0, %v3130
      %v3132 = vpop.f32.mrf.mxu0
      %3133 = vmatprep.mubr.bf16.mxu0 0
      %3134 = vmatmul.mubr.bf16.gmra.mxu0 %v2402
      %v3135 = vpop.f32.mrf.mxu0
      %v3136 = vadd.f32 0.0, %v3135
      %v3137 = vpop.f32.mrf.mxu0
      %v3138 = vpop.f32.mrf.mxu0
      %v3139 = vadd.f32 0.0, %v3138
      %v3140 = vpop.f32.mrf.mxu0
      %3141 = vmatprep.mubr.bf16.mxu0 0
      %3142 = vmatmul.mubr.bf16.gmra.mxu0 %v2403
      %v3143 = vpop.f32.mrf.mxu0
      %v3144 = vadd.f32 0.0, %v3143
      %v3145 = vpop.f32.mrf.mxu0
      %v3146 = vpop.f32.mrf.mxu0
      %v3147 = vadd.f32 0.0, %v3146
      %v3148 = vpop.f32.mrf.mxu0
      %3149 = vmatprep.mubr.bf16.mxu0 0
      %3150 = vmatmul.mubr.bf16.gmra.mxu0 %v2404
      %v3151 = vpop.f32.mrf.mxu0
      %v3152 = vadd.f32 0.0, %v3151
      %v3153 = vpop.f32.mrf.mxu0
      %v3154 = vpop.f32.mrf.mxu0
      %v3155 = vadd.f32 0.0, %v3154
      %v3156 = vpop.f32.mrf.mxu0
      %3157 = vmatprep.mubr.bf16.mxu0 0
      %3158 = vmatmul.mubr.bf16.gmra.mxu0 %v2697
      %v3159 = vpop.f32.mrf.mxu0
      %v3160 = vadd.f32 0.0, %v3159
      %v3161 = vpop.f32.mrf.mxu0
      %v3162 = vpop.f32.mrf.mxu0
      %v3163 = vadd.f32 0.0, %v3162
      %v3164 = vpop.f32.mrf.mxu0
      %3165 = vmatprep.mubr.bf16.mxu0 0
      %3166 = vmatmul.mubr.bf16.gmra.mxu0 %v2698
      %v3167 = vpop.f32.mrf.mxu0
      %v3168 = vadd.f32 0.0, %v3167
      %v3169 = vpop.f32.mrf.mxu0
      %v3170 = vpop.f32.mrf.mxu0
      %v3171 = vadd.f32 0.0, %v3170
      %v3172 = vpop.f32.mrf.mxu0
      %3173 = vmatprep.mubr.bf16.mxu0 0
      %3174 = vmatmul.mubr.bf16.gmra.mxu0 %v2977
      %v3175 = vpop.f32.mrf.mxu0
      %v3176 = vadd.f32 0.0, %v3175
      %v3177 = vpop.f32.mrf.mxu0
      %v3178 = vpop.f32.mrf.mxu0
      %v3179 = vadd.f32 0.0, %v3178
      %v3180 = vpop.f32.mrf.mxu0
      %3181 = vmatprep.mubr.bf16.mxu0 0
      %3182 = vmatmul.mubr.bf16.gmra.mxu0 %v2978
      %v3183 = vpop.f32.mrf.mxu0
      %v3184 = vadd.f32 0.0, %v3183
      %v3185 = vpop.f32.mrf.mxu0
      %v3186 = vpop.f32.mrf.mxu0
      %v3187 = vadd.f32 0.0, %v3186
      %v3188 = vpop.f32.mrf.mxu0
      %3189 = vdwg.mxu0
      %v3190 = vadd.f32 %v2910, %v3064
      %v3191 = vadd.f32 %v2911, %v3067
      %v3192 = vadd.f32 %v2912, %v3072
      %v3193 = vadd.f32 %v2913, %v3075
      %v3194 = vadd.f32 %v2914, %v3080
      %v3195 = vadd.f32 %v2915, %v3083
      %v3196 = vadd.f32 %v2916, %v3088
      %v3197 = vadd.f32 %v2917, %v3091
      %v3198 = vadd.f32 %v2918, %v3096
      %v3199 = vadd.f32 %v2919, %v3099
      %v3200 = vadd.f32 %v2920, %v3104
      %v3201 = vadd.f32 %v2921, %v3107
      %v3202 = vadd.f32 %v2922, %v3112
      %v3203 = vadd.f32 %v2923, %v3115
      %v3204 = vadd.f32 %v2924, %v3120
      %v3205 = vadd.f32 %v2925, %v3123
      %v3206 = vadd.f32 %v2926, %v3128
      %v3207 = vadd.f32 %v2927, %v3131
      %v3208 = vadd.f32 %v2928, %v3136
      %v3209 = vadd.f32 %v2929, %v3139
      %v3210 = vadd.f32 %v2930, %v3144
      %v3211 = vadd.f32 %v2931, %v3147
      %v3212 = vadd.f32 %v2932, %v3152
      %v3213 = vadd.f32 %v2933, %v3155
      %v3214 = vadd.f32 %v2934, %v3160
      %v3215 = vadd.f32 %v2935, %v3163
      %v3216 = vadd.f32 %v2936, %v3168
      %v3217 = vadd.f32 %v2937, %v3171
      %v3218 = vadd.f32 %v2938, %v3176
      %v3219 = vadd.f32 %v2939, %v3179
      %v3220 = vadd.f32 %v2940, %v3184
      %v3221 = vadd.f32 %v2941, %v3187
      %v3222 = vpack.c.bf16 %v3191, %v3190
      %v3223 = vpack.c.bf16 %v3193, %v3192
      %v3224 = vpack.c.bf16 %v3195, %v3194
      %v3225 = vpack.c.bf16 %v3197, %v3196
      %v3226 = vpack.c.bf16 %v3199, %v3198
      %v3227 = vpack.c.bf16 %v3201, %v3200
      %v3228 = vpack.c.bf16 %v3203, %v3202
      %v3229 = vpack.c.bf16 %v3205, %v3204
      %v3230 = vpack.c.bf16 %v3207, %v3206
      %v3231 = vpack.c.bf16 %v3209, %v3208
      %v3232 = vpack.c.bf16 %v3211, %v3210
      %v3233 = vpack.c.bf16 %v3213, %v3212
      %v3234 = vpack.c.bf16 %v3215, %v3214
      %v3235 = vpack.c.bf16 %v3217, %v3216
      %v3236 = vpack.c.bf16 %v3219, %v3218
      %v3237 = vpack.c.bf16 %v3221, %v3220
      %v3254 = vunpack.c.l.b16 %v3222
      %v3255 = vunpack.c.h.b16 %v3222
      %v3256 = vunpack.c.l.b16 %v3223
      %v3257 = vunpack.c.h.b16 %v3223
      %v3258 = vunpack.c.l.b16 %v3224
      %v3259 = vunpack.c.h.b16 %v3224
      %v3260 = vunpack.c.l.b16 %v3225
      %v3261 = vunpack.c.h.b16 %v3225
      %v3262 = vunpack.c.l.b16 %v3226
      %v3263 = vunpack.c.h.b16 %v3226
      %v3264 = vunpack.c.l.b16 %v3227
      %v3265 = vunpack.c.h.b16 %v3227
      %v3266 = vunpack.c.l.b16 %v3228
      %v3267 = vunpack.c.h.b16 %v3228
      %v3268 = vunpack.c.l.b16 %v3229
      %v3269 = vunpack.c.h.b16 %v3229
      %v3270 = vunpack.c.l.b16 %v3230
      %v3271 = vunpack.c.h.b16 %v3230
      %v3272 = vunpack.c.l.b16 %v3231
      %v3273 = vunpack.c.h.b16 %v3231
      %v3274 = vunpack.c.l.b16 %v3232
      %v3275 = vunpack.c.h.b16 %v3232
      %v3276 = vunpack.c.l.b16 %v3233
      %v3277 = vunpack.c.h.b16 %v3233
      %v3278 = vunpack.c.l.b16 %v3234
      %v3279 = vunpack.c.h.b16 %v3234
      %v3280 = vunpack.c.l.b16 %v3235
      %v3281 = vunpack.c.h.b16 %v3235
      %v3282 = vunpack.c.l.b16 %v3236
      %v3283 = vunpack.c.h.b16 %v3236
      %v3284 = vunpack.c.l.b16 %v3237
      %v3285 = vunpack.c.h.b16 %v3237
      %v3286 = vpack.c.b16 %v3254, %v3254
      %v3287 = vpack.c.b16 %v3255, %v3255
      %v3288 = vpack.c.b16 %v3256, %v3256
      %v3289 = vpack.c.b16 %v3257, %v3257
      %v3290 = vpack.c.b16 %v3258, %v3258
      %v3291 = vpack.c.b16 %v3259, %v3259
      %v3292 = vpack.c.b16 %v3260, %v3260
      %v3293 = vpack.c.b16 %v3261, %v3261
      %v3294 = vpack.c.b16 %v3262, %v3262
      %v3295 = vpack.c.b16 %v3263, %v3263
      %v3296 = vpack.c.b16 %v3264, %v3264
      %v3297 = vpack.c.b16 %v3265, %v3265
      %v3298 = vpack.c.b16 %v3266, %v3266
      %v3299 = vpack.c.b16 %v3267, %v3267
      %v3300 = vpack.c.b16 %v3268, %v3268
      %v3301 = vpack.c.b16 %v3269, %v3269
      %v3302 = vpack.c.b16 %v3270, %v3270
      %v3303 = vpack.c.b16 %v3271, %v3271
      %v3304 = vpack.c.b16 %v3272, %v3272
      %v3305 = vpack.c.b16 %v3273, %v3273
      %v3306 = vpack.c.b16 %v3274, %v3274
      %v3307 = vpack.c.b16 %v3275, %v3275
      %v3308 = vpack.c.b16 %v3276, %v3276
      %v3309 = vpack.c.b16 %v3277, %v3277
      %v3310 = vpack.c.b16 %v3278, %v3278
      %v3311 = vpack.c.b16 %v3279, %v3279
      %v3312 = vpack.c.b16 %v3280, %v3280
      %v3313 = vpack.c.b16 %v3281, %v3281
      %v3314 = vpack.c.b16 %v3282, %v3282
      %v3315 = vpack.c.b16 %v3283, %v3283
      %v3316 = vpack.c.b16 %v3284, %v3284
      %v3317 = vpack.c.b16 %v3285, %v3285
      %3350 = vst [vmem:[%s309] sm:$0xf] %v3286
      %3351 = vst [vmem:[%s309 + $0x4] sm:$0xf] %v3287
      %3352 = vst [vmem:[%s309 + $0x8] sm:$0xf] %v3288
      %3353 = vst [vmem:[%s309 + $0xc] sm:$0xf] %v3289
      %3354 = vst [vmem:[%s309 + $0x10] sm:$0xf] %v3290
      %3355 = vst [vmem:[%s309 + $0x14] sm:$0xf] %v3291
      %3356 = vst [vmem:[%s309 + $0x18] sm:$0xf] %v3292
      %3357 = vst [vmem:[%s309 + $0x1c] sm:$0xf] %v3293
      %3358 = vst [vmem:[%s309 + $0x20] sm:$0xf] %v3294
      %3359 = vst [vmem:[%s309 + $0x24] sm:$0xf] %v3295
      %3360 = vst [vmem:[%s309 + $0x28] sm:$0xf] %v3296
      %3361 = vst [vmem:[%s309 + $0x2c] sm:$0xf] %v3297
      %3362 = vst [vmem:[%s309 + $0x30] sm:$0xf] %v3298
      %3363 = vst [vmem:[%s309 + $0x34] sm:$0xf] %v3299
      %3364 = vst [vmem:[%s309 + $0x38] sm:$0xf] %v3300
      %3365 = vst [vmem:[%s309 + $0x3c] sm:$0xf] %v3301
      %3366 = vst [vmem:[%s309 + $0x40] sm:$0xf] %v3302
      %3367 = vst [vmem:[%s309 + $0x44] sm:$0xf] %v3303
      %3368 = vst [vmem:[%s309 + $0x48] sm:$0xf] %v3304
      %3369 = vst [vmem:[%s309 + $0x4c] sm:$0xf] %v3305
      %3370 = vst [vmem:[%s309 + $0x50] sm:$0xf] %v3306
      %3371 = vst [vmem:[%s309 + $0x54] sm:$0xf] %v3307
      %3372 = vst [vmem:[%s309 + $0x58] sm:$0xf] %v3308
      %3373 = vst [vmem:[%s309 + $0x5c] sm:$0xf] %v3309
      %3374 = vst [vmem:[%s309 + $0x60] sm:$0xf] %v3310
      %3375 = vst [vmem:[%s309 + $0x64] sm:$0xf] %v3311
      %3376 = vst [vmem:[%s309 + $0x68] sm:$0xf] %v3312
      %3377 = vst [vmem:[%s309 + $0x6c] sm:$0xf] %v3313
      %3378 = vst [vmem:[%s309 + $0x70] sm:$0xf] %v3314
      %3379 = vst [vmem:[%s309 + $0x74] sm:$0xf] %v3315
      %3380 = vst [vmem:[%s309 + $0x78] sm:$0xf] %v3316
      %3381 = vst [vmem:[%s309 + $0x7c] sm:$0xf] %v3317
      %v3382 = vadd.f32 %v3190, %v3191
      %v3383 = vadd.f32 %v3382, %v3192
      %v3384 = vadd.f32 %v3383, %v3193
      %v3385 = vadd.f32 %v3384, %v3194
      %v3386 = vadd.f32 %v3385, %v3195
      %v3387 = vadd.f32 %v3386, %v3196
      %v3388 = vadd.f32 %v3387, %v3197
      %v3389 = vadd.f32 %v3388, %v3198
      %v3390 = vadd.f32 %v3389, %v3199
      %v3391 = vadd.f32 %v3390, %v3200
      %v3392 = vadd.f32 %v3391, %v3201
      %v3393 = vadd.f32 %v3392, %v3202
      %v3394 = vadd.f32 %v3393, %v3203
      %v3395 = vadd.f32 %v3394, %v3204
      %v3396 = vadd.f32 %v3395, %v3205
      %v3397 = vadd.f32 %v3396, %v3206
      %v3398 = vadd.f32 %v3397, %v3207
      %v3399 = vadd.f32 %v3398, %v3208
      %v3400 = vadd.f32 %v3399, %v3209
      %v3401 = vadd.f32 %v3400, %v3210
      %v3402 = vadd.f32 %v3401, %v3211
      %v3403 = vadd.f32 %v3402, %v3212
      %v3404 = vadd.f32 %v3403, %v3213
      %v3405 = vadd.f32 %v3404, %v3214
      %v3406 = vadd.f32 %v3405, %v3215
      %v3407 = vadd.f32 %v3406, %v3216
      %v3408 = vadd.f32 %v3407, %v3217
      %v3409 = vadd.f32 %v3408, %v3218
      %v3410 = vadd.f32 %v3409, %v3219
      %v3411 = vadd.f32 %v3410, %v3220
      %v3412 = vadd.f32 %v3411, %v3221
      %v3413 = vrot.slane %v3412, 4
      %v3414 = vadd.f32 %v3412, %v3413
      %v3415 = vrot.slane %v3414, 2
      %v3416 = vadd.f32 %v3414, %v3415
      %v3417 = vrot.slane %v3416, 1
      %v3418 = vadd.f32 %v3416, %v3417
      %v3419 = vmul.f32 %v3190, %v3190
      %v3420 = vmul.f32 %v3191, %v3191
      %v3421 = vmul.f32 %v3192, %v3192
      %v3422 = vmul.f32 %v3193, %v3193
      %v3423 = vmul.f32 %v3194, %v3194
      %v3424 = vmul.f32 %v3195, %v3195
      %v3425 = vmul.f32 %v3196, %v3196
      %v3426 = vmul.f32 %v3197, %v3197
      %v3427 = vmul.f32 %v3198, %v3198
      %v3428 = vmul.f32 %v3199, %v3199
      %v3429 = vmul.f32 %v3200, %v3200
      %v3430 = vmul.f32 %v3201, %v3201
      %v3431 = vmul.f32 %v3202, %v3202
      %v3432 = vmul.f32 %v3203, %v3203
      %v3433 = vmul.f32 %v3204, %v3204
      %v3434 = vmul.f32 %v3205, %v3205
      %v3435 = vmul.f32 %v3206, %v3206
      %v3436 = vmul.f32 %v3207, %v3207
      %v3437 = vmul.f32 %v3208, %v3208
      %v3438 = vmul.f32 %v3209, %v3209
      %v3439 = vmul.f32 %v3210, %v3210
      %v3440 = vmul.f32 %v3211, %v3211
      %v3441 = vmul.f32 %v3212, %v3212
      %v3442 = vmul.f32 %v3213, %v3213
      %v3443 = vmul.f32 %v3214, %v3214
      %v3444 = vmul.f32 %v3215, %v3215
      %v3445 = vmul.f32 %v3216, %v3216
      %v3446 = vmul.f32 %v3217, %v3217
      %v3447 = vmul.f32 %v3218, %v3218
      %v3448 = vmul.f32 %v3219, %v3219
      %v3449 = vmul.f32 %v3220, %v3220
      %v3450 = vmul.f32 %v3221, %v3221
      %v3451 = vadd.f32 %v3419, %v3420
      %v3452 = vadd.f32 %v3451, %v3421
      %v3453 = vadd.f32 %v3452, %v3422
      %v3454 = vadd.f32 %v3453, %v3423
      %v3455 = vadd.f32 %v3454, %v3424
      %v3456 = vadd.f32 %v3455, %v3425
      %v3457 = vadd.f32 %v3456, %v3426
      %v3458 = vadd.f32 %v3457, %v3427
      %v3459 = vadd.f32 %v3458, %v3428
      %v3460 = vadd.f32 %v3459, %v3429
      %v3461 = vadd.f32 %v3460, %v3430
      %v3462 = vadd.f32 %v3461, %v3431
      %v3463 = vadd.f32 %v3462, %v3432
      %v3464 = vadd.f32 %v3463, %v3433
      %v3465 = vadd.f32 %v3464, %v3434
      %v3466 = vadd.f32 %v3465, %v3435
      %v3467 = vadd.f32 %v3466, %v3436
      %v3468 = vadd.f32 %v3467, %v3437
      %v3469 = vadd.f32 %v3468, %v3438
      %v3470 = vadd.f32 %v3469, %v3439
      %v3471 = vadd.f32 %v3470, %v3440
      %v3472 = vadd.f32 %v3471, %v3441
      %v3473 = vadd.f32 %v3472, %v3442
      %v3474 = vadd.f32 %v3473, %v3443
      %v3475 = vadd.f32 %v3474, %v3444
      %v3476 = vadd.f32 %v3475, %v3445
      %v3477 = vadd.f32 %v3476, %v3446
      %v3478 = vadd.f32 %v3477, %v3447
      %v3479 = vadd.f32 %v3478, %v3448
      %v3480 = vadd.f32 %v3479, %v3449
      %v3481 = vadd.f32 %v3480, %v3450
      %v3482 = vrot.slane %v3481, 4
      %v3483 = vadd.f32 %v3481, %v3482
      %v3484 = vrot.slane %v3483, 2
      %v3485 = vadd.f32 %v3483, %v3484
      %v3486 = vrot.slane %v3485, 1
      %v3487 = vadd.f32 %v3485, %v3486
      %vm3488 = vcmask 1040384
      %v3489 = vsel %vm3488, %v3418, %v3487
      %3490 = vst [vmem:[%s317] sm:$0x3] %v3489
      %s3491 = smul.u32 32, %s21
      %p3492 = scmp.lt.s32.totalorder %s20, 1
      %s3493 = scalar_select %p3492, %s20, 1
      %p3494 = scmp.lt.s32.totalorder %s3491, 31
      %s3495 = scalar_select %p3494, %s3491, 31
      %s3496 = smul.addr %s3493, 32
      %s3497 = sadd.s32 %s3495, %s3496
      %s3498 = smul.addr %s3497, 4
      %s3499 = scalar_lea.vmem %s3, %s3498
      %p3500 = scmp.lt.s32.totalorder %s20, 1
      %s3501 = scalar_select %p3500, %s20, 1
      %p3502 = scmp.lt.s32.totalorder %s21, 0
      %s3503 = scalar_select %p3502, %s21, 0
      %s3504 = sadd.s32 %s3503, %s3501
      %s3505 = smul.addr %s3504, 2
      %s3506 = scalar_lea.vmem %s4, %s3505
      // Predicated region
      $region33: #{aspp_module_forward.2} parent=31 // pred_check
        %p3507 = pneg %p125
      $region34: #{aspp_module_forward.2} parent=31 // pred_check_branch
        %3509 = sbr.rel (%p3507) target = $region36
      $region35: #{aspp_module_forward.2} parent=31 // pred_region
        %s3510 = smul.u32 32, %s21
      $region36: #{aspp_module_forward.2} parent=31 // pred_fallthru
        _
      // Predicated region
      $region37: #{aspp_module_forward.2} parent=31 // pred_check
        %p3511 = pneg %p153
      $region38: #{aspp_module_forward.2} parent=31 // pred_check_branch
        %3513 = sbr.rel (%p3511) target = $region40
      $region39: #{aspp_module_forward.2} parent=31 // pred_region
        _
      $region40: #{aspp_module_forward.2} parent=31 // pred_fallthru
        _
    $region32: #{aspp_module_forward.2} parent=5 // pred_fallthru
      _
    %p3514 = scmp.le.s32.totalorder 2, %s11
    // Predicated region
    $region41: #{aspp_module_forward.2} parent=5 // pred_check
      %p3515 = pneg %p3514
    $region42: #{aspp_module_forward.2} parent=5 // pred_check_branch
      %3517 = sbr.rel (%p3515) target = $region44
    $region43: #{aspp_module_forward.2} parent=5 // pred_region
      %s3518 = ssub.s32 %s11, 2
      // Predicated region
      $region45: #{aspp_module_forward.2} parent=43 // pred_check
        %p3519 = pneg %p131
      $region46: #{aspp_module_forward.2} parent=43 // pred_check_branch
        %3521 = sbr.rel (%p3519) target = $region48
      $region47: #{aspp_module_forward.2} parent=43 // pred_region
        %s3522 = smul.u32 32, %s23
        %p3523 = scmp.lt.s32.totalorder %s22, 1
        %s3524 = scalar_select %p3523, %s22, 1
        %p3525 = scmp.lt.s32.totalorder %s3522, 31
        %s3526 = scalar_select %p3525, %s3522, 31
        %s3527 = smul.addr %s3524, 32
        %s3528 = sadd.s32 %s3526, %s3527
        %s3529 = smul.addr %s3528, 4
        %s3530 = scalar_lea.vmem %s3, %s3529
      $region48: #{aspp_module_forward.2} parent=43 // pred_fallthru
        _
      // Predicated region
      $region49: #{aspp_module_forward.2} parent=43 // pred_check
        %p3531 = pneg %p159
      $region50: #{aspp_module_forward.2} parent=43 // pred_check_branch
        %3533 = sbr.rel (%p3531) target = $region52
      $region51: #{aspp_module_forward.2} parent=43 // pred_region
        %p3534 = scmp.lt.s32.totalorder %s22, 1
        %s3535 = scalar_select %p3534, %s22, 1
        %p3536 = scmp.lt.s32.totalorder %s23, 0
        %s3537 = scalar_select %p3536, %s23, 0
        %s3538 = sadd.s32 %s3537, %s3535
        %s3539 = smul.addr %s3538, 2
        %s3540 = scalar_lea.vmem %s4, %s3539
      $region52: #{aspp_module_forward.2} parent=43 // pred_fallthru
        _
    $region44: #{aspp_module_forward.2} parent=5 // pred_fallthru
      _
  $region6: #{aspp_module_forward.2} parent=0 // loop_footer
    %s15 = sadd.s32 1, %s11
  $region7: #{aspp_module_forward.2} parent=0 // loop_footer_branch
    %10 = sbr.rel target = $region3
  $region8: #{aspp_module_forward.2} parent=0 // loop_exit
    _

</llo_original>
